<compile_context>
chip_gen: v7x
topology: tpu7x:2x2x1
jax: 0.10.0
libtpu: 0.0.40
codegen_flags: <defaults>
</compile_context>

<pallas_src>
import functools

import jax
import jax.numpy as jnp
from jax import lax
from jax.experimental import pallas as pl
from jax.experimental.pallas import tpu as pltpu

_MiB = 1024 * 1024


def lru_kernel(f_cnn_ref, f_vit_ref, w_cnn_ref, b_cnn_ref, w_vit_ref,
               b_vit_ref, f_cnn_out_ref, f_vit_out_ref, dcnn_sc, sum_sc,
               *, inv_hw, inv_tok):
    """Blocks: f_cnn (Bt, C, HWt) channels-first, f_vit (Bt, N, V)."""
    h = pl.program_id(1)
    nh = pl.num_programs(1)
    nt = (((1,), (1,)), ((), ()))          # x @ w.T  (NT contraction on the MXU)

    # ---- once per batch block: ViT token mean + 1x1-conv matvec -----------
    @pl.when(h == 0)
    def _():
        fv = f_vit_ref[...].astype(jnp.float32)                        # (Bt, N, V)
        # mean over patch tokens == (sum over all tokens - CLS row) / (N - 1)
        tok_sum = jnp.sum(fv, axis=1) - jnp.sum(fv[:, :1, :], axis=1)  # (Bt, V)
        pooled_vit = (tok_sum * inv_tok).astype(w_cnn_ref.dtype)
        dcnn_sc[...] = (lax.dot_general(pooled_vit, w_cnn_ref[...], nt,
                                        preferred_element_type=jnp.float32)
                        + b_cnn_ref[...])                              # (Bt, C) f32
        sum_sc[...] = jnp.zeros_like(sum_sc)

    # ---- every HW tile: lane-broadcast add + partial spatial sum ----------
    fc = f_cnn_ref[...]                                                # (Bt, C, HWt)
    delta_cnn = dcnn_sc[...].astype(fc.dtype)                          # (Bt, C)
    f_cnn_out_ref[...] = (fc + delta_cnn[:, :, None]).astype(f_cnn_out_ref.dtype)
    # mean(fc + delta) == mean(fc) + delta -> reduce the ORIGINAL fc (f32 acc).
    sum_sc[...] += jnp.sum(fc.astype(jnp.float32), axis=2)             # (Bt, C)

    # ---- last HW tile: global avg pool -> Linear -> broadcast over tokens -
    @pl.when(h == nh - 1)
    def _():
        pooled_cnn = sum_sc[...] * inv_hw + dcnn_sc[...]               # (Bt, C) f32
        delta_vit = (lax.dot_general(pooled_cnn.astype(w_vit_ref.dtype),
                                     w_vit_ref[...], nt,
                                     preferred_element_type=jnp.float32)
                     + b_vit_ref[...])                                 # (Bt, V) f32
        fv = f_vit_ref[...]                                            # (Bt, N, V)
        f_vit_out_ref[...] = (fv + delta_vit.astype(fv.dtype)[:, None, :]
                              ).astype(f_vit_out_ref.dtype)


def _tpu_memory_model():
    """(vmem_bytes_per_tensorcore, tensorcores_per_chip) with safe fallbacks."""
    try:
        kind = jax.devices()[0].device_kind.lower()
    except Exception:
        kind = ""
    try:
        vmem = int(pltpu.get_tpu_info().vmem_capacity_bytes)
    except Exception:
        vmem = 64 * _MiB                        # conservative: smallest generation
    if "v7" in kind:                            # v7x: 64 MiB / TC, 2 TCs / chip
        return min(vmem, 64 * _MiB), 2
    return vmem, (2 if vmem <= 64 * _MiB else 1)


def _pick_batch_block(B, num_cores):
    """Largest divisor of B up to 8 rows per grid step.  On multi-TensorCore
    chips (v7x) prefer splits that keep the 'parallel' batch grid axis a
    multiple of the core count; on single-TC chips just minimize step count."""
    if B <= 1:
        return 1
    divisors = [d for d in range(1, min(8, B) + 1) if B % d == 0]
    if num_cores > 1:
        good = [d for d in divisors if (B // d) % num_cores == 0]
        if good:
            return max(good)
    return max(divisors)


def _pick_hw_tiling(HW, C, N, V, bt, act_item, w_item, budget):
    """Returns (hw_tile, padded_HW): the largest lane-dense HW tile whose
    double-buffered VMEM footprint fits `budget`.  Falls back to zero-padding
    HW up to a multiple of a big 128-multiple tile when no divisor fits."""
    fixed = 2 * 2 * bt * N * V * act_item        # f_vit in + out, double buffered
    fixed += 2 * 2 * C * V * w_item              # both weight mats, double buffered
    fixed += 2 * 2 * (C + V) * 4                 # biases (f32), double buffered
    fixed += 2 * bt * C * 4                      # f32 scratch accumulators
    cost = lambda t: fixed + 2 * 2 * bt * C * t * act_item   # f_cnn in + out, x2
    if cost(HW) <= budget:
        return HW, HW
    # largest 128-multiple exact divisor of HW that fits the budget
    for t in range(HW - (HW % 128), 127, -128):
        if HW % t == 0 and cost(t) <= budget:
            return t, HW
    # graceful fallback: big 128-multiple tile + zero-pad HW to a multiple of it
    t = 128
    while t + 128 < HW and cost(t + 128) <= budget:
        t += 128
    return t, pl.cdiv(HW, t) * t


def local_refinement_unit(f_cnn, f_vit, params, *, hw_tile=None):
    """f_cnn: (B, C, H, W), f_vit: (B, N, V). Returns (f_cnn, f_vit).

    bf16 f_cnn / f_vit is the recommended production path (HBM-bound kernel);
    all pooling sums and matmuls accumulate in f32 inside the kernel."""
    B, C, H, W = f_cnn.shape
    _, N, V = f_vit.shape
    HW = H * W

    # Untransposed weights (NT dot_general in the kernel); follow activation
    # dtype when it is bf16 (MXU-native, halves weight VMEM/HBM footprint).
    use_bf16_w = (f_cnn.dtype == jnp.bfloat16) and (f_vit.dtype == jnp.bfloat16)
    w_dtype = jnp.bfloat16 if use_bf16_w else jnp.float32
    w_cnn = params["w_cnn"].reshape(C, V).astype(w_dtype)              # (C, V)
    w_vit = params["w_vit"].astype(w_dtype)                            # (V, C)
    b_cnn = params["b_cnn"].reshape(1, C).astype(jnp.float32)
    b_vit = params["b_vit"].reshape(1, V).astype(jnp.float32)

    # Per-generation VMEM budget: v5e/v6e 128 MiB / 1 TC, v7x 64 MiB / 2 TC.
    vmem_cap, num_cores = _tpu_memory_model()
    vmem_limit = int(min(vmem_cap - 14 * _MiB, 100 * _MiB))   # Mosaic headroom
    budget = vmem_limit - 14 * _MiB                            # tile-picker headroom

    act_item = jnp.dtype(f_cnn.dtype).itemsize
    w_item = jnp.dtype(w_dtype).itemsize
    bt = _pick_batch_block(B, num_cores)
    nb = B // bt
    if hw_tile is None:
        hw_t, HW_pad = _pick_hw_tiling(HW, C, N, V, bt, act_item, w_item, budget)
    else:                                   # test hook: force the multi-tile path
        hw_t = hw_tile
        HW_pad = pl.cdiv(HW, hw_t) * hw_t
    nh = HW_pad // hw_t

    # channels-first flatten is a free reshape; zero-pad only if needed (pads
    # contribute 0 to the spatial sum and the divisor stays 1/HW -> exact).
    f_cnn_flat = f_cnn.reshape(B, C, HW)
    if HW_pad != HW:
        f_cnn_flat = jnp.pad(f_cnn_flat, ((0, 0), (0, 0), (0, HW_pad - HW)))

    kernel = functools.partial(
        lru_kernel, inv_hw=1.0 / HW, inv_tok=1.0 / max(N - 1, 1))

    out_cnn, out_vit = pl.pallas_call(
        kernel,
        out_shape=(jax.ShapeDtypeStruct((B, C, HW_pad), f_cnn.dtype),
                   jax.ShapeDtypeStruct((B, N, V), f_vit.dtype)),
        grid_spec=pltpu.PrefetchScalarGridSpec(
            num_scalar_prefetch=0,
            grid=(nb, nh),
            in_specs=[
                pl.BlockSpec((bt, C, hw_t), lambda b, h: (b, 0, h)),   # f_cnn
                pl.BlockSpec((bt, N, V), lambda b, h: (b, 0, 0)),      # f_vit
                # grid-invariant operands (further v7x VMEM lever: single-
                # buffer these four via pipeline_mode=pl.Buffered(1)).
                pl.BlockSpec((C, V), lambda b, h: (0, 0)),             # conv W
                pl.BlockSpec((1, C), lambda b, h: (0, 0)),             # conv bias
                pl.BlockSpec((V, C), lambda b, h: (0, 0)),             # linear W
                pl.BlockSpec((1, V), lambda b, h: (0, 0)),             # linear bias
            ],
            out_specs=[
                pl.BlockSpec((bt, C, hw_t), lambda b, h: (b, 0, h)),   # f_cnn out
                pl.BlockSpec((bt, N, V), lambda b, h: (b, 0, 0)),      # f_vit out
            ],
            scratch_shapes=[
                pltpu.VMEM((bt, C), jnp.float32),   # delta_cnn (computed at h==0)
                pltpu.VMEM((bt, C), jnp.float32),   # running spatial sum of f_cnn
            ]),
        compiler_params=pltpu.CompilerParams(
            dimension_semantics=("parallel", "arbitrary"),
            vmem_limit_bytes=vmem_limit),
        input_output_aliases={0: 0, 1: 1},          # update f_cnn / f_vit in place
    )(f_cnn_flat, f_vit, w_cnn, b_cnn, w_vit, b_vit)

    if HW_pad != HW:
        out_cnn = out_cnn[:, :, :HW]
    return out_cnn.reshape(B, C, H, W), out_vit


def reference(f_cnn, f_vit, params, cnn_dim, vit_dim):
    """Pure-JAX replica of the PyTorch forward (NCHW) for verification."""
    vit_pooled = f_vit[:, 1:, :].mean(axis=1)                          # (B, V)
    w_cnn = params["w_cnn"].reshape(cnn_dim, vit_dim)
    delta_cnn = vit_pooled @ w_cnn.T + params["b_cnn"]                 # (B, C)
    f_cnn = f_cnn + delta_cnn[:, :, None, None]
    cnn_pooled = f_cnn.mean(axis=(2, 3))                               # (B, C)
    delta_vit = cnn_pooled @ params["w_vit"].T + params["b_vit"]       # (B, V)
    f_vit = f_vit + delta_vit[:, None, :]
    return f_cnn, f_vit


if __name__ == "__main__":
    key = jax.random.PRNGKey(0)

    # ---- case 1: f32 I/O, single HW tile, even batch -----------------------
    B, C, V = 2, 256, 128
    H = W = 16                 # H*W = 256 -> lane-dense blocks
    N = 1 + 8                  # CLS token + 8 patch tokens
    k1, k2, k3, k4, k5, k6 = jax.random.split(key, 6)
    f_cnn = jax.random.normal(k1, (B, C, H, W), dtype=jnp.float32)
    f_vit = jax.random.normal(k2, (B, N, V), dtype=jnp.float32)
    params = {
        "w_cnn": jax.random.normal(k3, (C, V, 1, 1), jnp.float32) * 0.02,
        "b_cnn": jax.random.normal(k4, (C,), jnp.float32) * 0.02,
        "w_vit": jax.random.normal(k5, (V, C), jnp.float32) * 0.02,
        "b_vit": jax.random.normal(k6, (V,), jnp.float32) * 0.02,
    }

    fwd = jax.jit(local_refinement_unit, static_argnames=("hw_tile",))

    out_cnn, out_vit = fwd(f_cnn, f_vit, params)
    jax.block_until_ready((out_cnn, out_vit))
    ref_cnn, ref_vit = reference(f_cnn, f_vit, params, C, V)
    assert out_cnn.shape == (B, C, H, W) and out_vit.shape == (B, N, V)
    assert jnp.allclose(out_cnn, ref_cnn, atol=1e-4, rtol=1e-4)
    assert jnp.allclose(out_vit, ref_vit, atol=1e-4, rtol=1e-4)

    # ---- case 2: bf16 I/O production path (f32 accumulation inside) --------
    out_cnn_bf, out_vit_bf = fwd(f_cnn.astype(jnp.bfloat16),
                                 f_vit.astype(jnp.bfloat16), params)
    jax.block_until_ready((out_cnn_bf, out_vit_bf))
    assert out_cnn_bf.dtype == jnp.bfloat16 and out_vit_bf.dtype == jnp.bfloat16
    assert jnp.allclose(out_cnn_bf.astype(jnp.float32), ref_cnn, atol=6e-2, rtol=6e-2)
    assert jnp.allclose(out_vit_bf.astype(jnp.float32), ref_vit, atol=6e-2, rtol=6e-2)

    # ---- case 3: odd batch, HW=196 (not a multiple of 128), forced nh > 1 --
    # exercises the multi-HW-tile accumulator/writeback path + zero-pad path.
    B2, H2, W2, N2 = 3, 14, 14, 5
    j1, j2 = jax.random.split(jax.random.PRNGKey(1), 2)
    f_cnn2 = jax.random.normal(j1, (B2, C, H2, W2), dtype=jnp.float32)
    f_vit2 = jax.random.normal(j2, (B2, N2, V), dtype=jnp.float32)
    out_cnn2, out_vit2 = fwd(f_cnn2, f_vit2, params, hw_tile=128)
    jax.block_until_ready((out_cnn2, out_vit2))
    ref_cnn2, ref_vit2 = reference(f_cnn2, f_vit2, params, C, V)
    assert out_cnn2.shape == (B2, C, H2, W2) and out_vit2.shape == (B2, N2, V)
    assert jnp.allclose(out_cnn2, ref_cnn2, atol=1e-4, rtol=1e-4)
    assert jnp.allclose(out_vit2, ref_vit2, atol=1e-4, rtol=1e-4)

    print("KERNEL_OK")
</pallas_src>

<mosaic_0001>
module attributes {stable_mosaic.version = 11 : i64} {
  func.func @lru_kernel(%arg0: i32, %arg1: i32, %arg2: memref<1x256x256xf32, #tpu.memory_space<vmem>>, %arg3: memref<1x9x128xf32, #tpu.memory_space<vmem>>, %arg4: memref<256x128xf32, #tpu.memory_space<vmem>>, %arg5: memref<1x256xf32, #tpu.memory_space<vmem>>, %arg6: memref<128x256xf32, #tpu.memory_space<vmem>>, %arg7: memref<1x128xf32, #tpu.memory_space<vmem>>, %arg8: memref<1x256x256xf32, #tpu.memory_space<vmem>>, %arg9: memref<1x9x128xf32, #tpu.memory_space<vmem>>, %arg10: memref<1x256xf32, #tpu.memory_space<vmem>>, %arg11: memref<1x256xf32, #tpu.memory_space<vmem>>) attributes {dimension_semantics = [#tpu.dimension_semantics<parallel>, #tpu.dimension_semantics<arbitrary>], iteration_bounds = array<i64: 2, 1>, scalar_prefetch = 0 : i64, scratch_operands = 2 : i64, tpu.core_type = #tpu.core_type<tc>, window_params = [{transform_indices = @transform_0, window_bounds = array<i64: 1, 256, 256>}, {transform_indices = @transform_1, window_bounds = array<i64: 1, 9, 128>}, {pipeline_mode = #tpu.pipeline_mode<synchronous>, transform_indices = @transform_2, window_bounds = array<i64: 256, 128>}, {pipeline_mode = #tpu.pipeline_mode<synchronous>, transform_indices = @transform_3, window_bounds = array<i64: 1, 256>}, {pipeline_mode = #tpu.pipeline_mode<synchronous>, transform_indices = @transform_4, window_bounds = array<i64: 128, 256>}, {pipeline_mode = #tpu.pipeline_mode<synchronous>, transform_indices = @transform_5, window_bounds = array<i64: 1, 128>}, {transform_indices = @transform_6, window_bounds = array<i64: 1, 256, 256>}, {transform_indices = @transform_7, window_bounds = array<i64: 1, 9, 128>}]} {
    %c0_i32 = arith.constant 0 : i32
    %0 = arith.cmpi eq, %arg1, %c0_i32 : i32
    %1 = arith.extui %0 : i1 to i32
    %c0_i32_0 = arith.constant 0 : i32
    %2 = arith.cmpi ne, %1, %c0_i32_0 : i32
    scf.if %2 {
      %c0_14 = arith.constant 0 : index
      %c0_15 = arith.constant 0 : index
      %c0_16 = arith.constant 0 : index
      %16 = vector.load %arg3[%c0_14, %c0_15, %c0_16] : memref<1x9x128xf32, #tpu.memory_space<vmem>>, vector<1x9x128xf32>
      %cst_17 = arith.constant dense<0.000000e+00> : vector<1x128xf32>
      %17 = vector.multi_reduction <add>, %16, %cst_17 [1] : vector<1x9x128xf32> to vector<1x128xf32>
      %18 = vector.extract_strided_slice %16 {offsets = [0, 0, 0], sizes = [1, 1, 128], strides = [1, 1, 1]} : vector<1x9x128xf32> to vector<1x1x128xf32>
      %cst_18 = arith.constant dense<0.000000e+00> : vector<1x128xf32>
      %19 = vector.multi_reduction <add>, %18, %cst_18 [1] : vector<1x1x128xf32> to vector<1x128xf32>
      %20 = arith.subf %17, %19 : vector<1x128xf32>
      %cst_19 = arith.constant 1.250000e-01 : f32
      %21 = vector.broadcast %cst_19 : f32 to vector<1x128xf32>
      %22 = arith.mulf %20, %21 : vector<1x128xf32>
      %c0_20 = arith.constant 0 : index
      %c0_21 = arith.constant 0 : index
      %23 = vector.load %arg4[%c0_20, %c0_21] : memref<256x128xf32, #tpu.memory_space<vmem>>, vector<256x128xf32>
      %cst_22 = arith.constant dense<0.000000e+00> : vector<1x256xf32>
      %24 = tpu.matmul %22, %23, %cst_22 {dimension_numbers = #tpu.dot_dimension_numbers<[1], [1], [0], [0], [0, 0, 1, 0], [], []>} : vector<1x128xf32>, vector<256x128xf32>, vector<1x256xf32> -> vector<1x256xf32>
      %c0_23 = arith.constant 0 : index
      %c0_24 = arith.constant 0 : index
      %25 = vector.load %arg5[%c0_23, %c0_24] : memref<1x256xf32, #tpu.memory_space<vmem>>, vector<1x256xf32>
      %26 = arith.addf %24, %25 : vector<1x256xf32>
      %c0_25 = arith.constant 0 : index
      %c0_26 = arith.constant 0 : index
      %27 = vector.load %arg10[%c0_25, %c0_26] : memref<1x256xf32, #tpu.memory_space<vmem>>, vector<1x256xf32>
      tpu.vector_store %arg10[%c0_25, %c0_26], %26 {strides = array<i32>} : memref<1x256xf32, #tpu.memory_space<vmem>>, vector<1x256xf32>,
      %cst_27 = arith.constant 0.000000e+00 : f32
      %28 = vector.broadcast %cst_27 : f32 to vector<1x256xf32>
      %c0_28 = arith.constant 0 : index
      %c0_29 = arith.constant 0 : index
      %29 = vector.load %arg11[%c0_28, %c0_29] : memref<1x256xf32, #tpu.memory_space<vmem>>, vector<1x256xf32>
      tpu.vector_store %arg11[%c0_28, %c0_29], %28 {strides = array<i32>} : memref<1x256xf32, #tpu.memory_space<vmem>>, vector<1x256xf32>,
    } else {
    }
    %c0 = arith.constant 0 : index
    %c0_1 = arith.constant 0 : index
    %c0_2 = arith.constant 0 : index
    %3 = vector.load %arg2[%c0, %c0_1, %c0_2] : memref<1x256x256xf32, #tpu.memory_space<vmem>>, vector<1x256x256xf32>
    %c0_3 = arith.constant 0 : index
    %c0_4 = arith.constant 0 : index
    %4 = vector.load %arg10[%c0_3, %c0_4] : memref<1x256xf32, #tpu.memory_space<vmem>>, vector<1x256xf32>
    %5 = vector.shape_cast %4 : vector<1x256xf32> to vector<1x256x1xf32>
    %6 = vector.broadcast %5 : vector<1x256x1xf32> to vector<1x256x256xf32>
    %7 = arith.addf %3, %6 : vector<1x256x256xf32>
    %c0_5 = arith.constant 0 : index
    %c0_6 = arith.constant 0 : index
    %c0_7 = arith.constant 0 : index
    %8 = vector.load %arg8[%c0_5, %c0_6, %c0_7] : memref<1x256x256xf32, #tpu.memory_space<vmem>>, vector<1x256x256xf32>
    tpu.vector_store %arg8[%c0_5, %c0_6, %c0_7], %7 {strides = array<i32>} : memref<1x256x256xf32, #tpu.memory_space<vmem>>, vector<1x256x256xf32>,
    %c0_8 = arith.constant 0 : index
    %c0_9 = arith.constant 0 : index
    %9 = vector.load %arg11[%c0_8, %c0_9] : memref<1x256xf32, #tpu.memory_space<vmem>>, vector<1x256xf32>
    %cst = arith.constant dense<0.000000e+00> : vector<1x256xf32>
    %10 = vector.multi_reduction <add>, %3, %cst [2] : vector<1x256x256xf32> to vector<1x256xf32>
    %11 = arith.addf %9, %10 : vector<1x256xf32>
    %c0_10 = arith.constant 0 : index
    %c0_11 = arith.constant 0 : index
    %12 = vector.load %arg11[%c0_10, %c0_11] : memref<1x256xf32, #tpu.memory_space<vmem>>, vector<1x256xf32>
    tpu.vector_store %arg11[%c0_10, %c0_11], %11 {strides = array<i32>} : memref<1x256xf32, #tpu.memory_space<vmem>>, vector<1x256xf32>,
    %c0_i32_12 = arith.constant 0 : i32
    %13 = arith.cmpi eq, %arg1, %c0_i32_12 : i32
    %14 = arith.extui %13 : i1 to i32
    %c0_i32_13 = arith.constant 0 : i32
    %15 = arith.cmpi ne, %14, %c0_i32_13 : i32
    scf.if %15 {
      %c0_14 = arith.constant 0 : index
      %c0_15 = arith.constant 0 : index
      %16 = vector.load %arg11[%c0_14, %c0_15] : memref<1x256xf32, #tpu.memory_space<vmem>>, vector<1x256xf32>
      %cst_16 = arith.constant 3.906250e-03 : f32
      %17 = vector.broadcast %cst_16 : f32 to vector<1x256xf32>
      %18 = arith.mulf %16, %17 : vector<1x256xf32>
      %c0_17 = arith.constant 0 : index
      %c0_18 = arith.constant 0 : index
      %19 = vector.load %arg10[%c0_17, %c0_18] : memref<1x256xf32, #tpu.memory_space<vmem>>, vector<1x256xf32>
      %20 = arith.addf %18, %19 : vector<1x256xf32>
      %c0_19 = arith.constant 0 : index
      %c0_20 = arith.constant 0 : index
      %21 = vector.load %arg6[%c0_19, %c0_20] : memref<128x256xf32, #tpu.memory_space<vmem>>, vector<128x256xf32>
      %cst_21 = arith.constant dense<0.000000e+00> : vector<1x128xf32>
      %22 = tpu.matmul %20, %21, %cst_21 {dimension_numbers = #tpu.dot_dimension_numbers<[1], [1], [0], [0], [0, 0, 1, 0], [], []>} : vector<1x256xf32>, vector<128x256xf32>, vector<1x128xf32> -> vector<1x128xf32>
      %c0_22 = arith.constant 0 : index
      %c0_23 = arith.constant 0 : index
      %23 = vector.load %arg7[%c0_22, %c0_23] : memref<1x128xf32, #tpu.memory_space<vmem>>, vector<1x128xf32>
      %24 = arith.addf %22, %23 : vector<1x128xf32>
      %c0_24 = arith.constant 0 : index
      %c0_25 = arith.constant 0 : index
      %c0_26 = arith.constant 0 : index
      %25 = vector.load %arg3[%c0_24, %c0_25, %c0_26] : memref<1x9x128xf32, #tpu.memory_space<vmem>>, vector<1x9x128xf32>
      %26 = vector.shape_cast %24 : vector<1x128xf32> to vector<1x1x128xf32>
      %27 = vector.broadcast %26 : vector<1x1x128xf32> to vector<1x9x128xf32>
      %28 = arith.addf %25, %27 : vector<1x9x128xf32>
      %c0_27 = arith.constant 0 : index
      %c0_28 = arith.constant 0 : index
      %c0_29 = arith.constant 0 : index
      %29 = vector.load %arg9[%c0_27, %c0_28, %c0_29] : memref<1x9x128xf32, #tpu.memory_space<vmem>>, vector<1x9x128xf32>
      tpu.vector_store %arg9[%c0_27, %c0_28, %c0_29], %28 {strides = array<i32>} : memref<1x9x128xf32, #tpu.memory_space<vmem>>, vector<1x9x128xf32>,
    } else {
    }
    return
  }
  func.func @transform_0(%arg0: i32, %arg1: i32) -> (i32, i32, i32) {
    %c0_i32 = arith.constant 0 : i32
    %c0_i32_0 = arith.constant 0 : i32
    return %arg0, %c0_i32, %arg1 : i32, i32, i32
  }
  func.func @transform_1(%arg0: i32, %arg1: i32) -> (i32, i32, i32) {
    %c0_i32 = arith.constant 0 : i32
    %c0_i32_0 = arith.constant 0 : i32
    %c0_i32_1 = arith.constant 0 : i32
    return %arg0, %c0_i32, %c0_i32_0 : i32, i32, i32
  }
  func.func @transform_2(%arg0: i32, %arg1: i32) -> (i32, i32) {
    %c0_i32 = arith.constant 0 : i32
    %c0_i32_0 = arith.constant 0 : i32
    %c0_i32_1 = arith.constant 0 : i32
    return %c0_i32, %c0_i32_0 : i32, i32
  }
  func.func @transform_3(%arg0: i32, %arg1: i32) -> (i32, i32) {
    %c0_i32 = arith.constant 0 : i32
    %c0_i32_0 = arith.constant 0 : i32
    %c0_i32_1 = arith.constant 0 : i32
    return %c0_i32, %c0_i32_0 : i32, i32
  }
  func.func @transform_4(%arg0: i32, %arg1: i32) -> (i32, i32) {
    %c0_i32 = arith.constant 0 : i32
    %c0_i32_0 = arith.constant 0 : i32
    %c0_i32_1 = arith.constant 0 : i32
    return %c0_i32, %c0_i32_0 : i32, i32
  }
  func.func @transform_5(%arg0: i32, %arg1: i32) -> (i32, i32) {
    %c0_i32 = arith.constant 0 : i32
    %c0_i32_0 = arith.constant 0 : i32
    %c0_i32_1 = arith.constant 0 : i32
    return %c0_i32, %c0_i32_0 : i32, i32
  }
  func.func @transform_6(%arg0: i32, %arg1: i32) -> (i32, i32, i32) {
    %c0_i32 = arith.constant 0 : i32
    %c0_i32_0 = arith.constant 0 : i32
    return %arg0, %c0_i32, %arg1 : i32, i32, i32
  }
  func.func @transform_7(%arg0: i32, %arg1: i32) -> (i32, i32, i32) {
    %c0_i32 = arith.constant 0 : i32
    %c0_i32_0 = arith.constant 0 : i32
    %c0_i32_1 = arith.constant 0 : i32
    return %arg0, %c0_i32, %c0_i32_0 : i32, i32, i32
  }
}

</mosaic_0001>

<llo_original>
// kernel: local_refinement_unit.1
$region0: #{local_refinement_unit.1}
  #allocation0 [shape = 'u32[]', space=smem, size = 0x4, offset = 0x4, fixed_abs, tag = 'smem constant byte address 0x4 - core index']
  #allocation1 [shape = 'u32[144,128]{1,0:T(1,128)}', space=vmem, size = 0x12000, scoped, tag = 'internal scratch']
  #allocation2 [shape = 'f32[1,256]{1,0:T(1,128)}', space=vmem, size = 0x400, scoped, tag = 'scratch operand']
  #allocation3 [shape = 'f32[1,256]{1,0:T(1,128)}', space=vmem, size = 0x400, scoped, tag = 'scratch operand']
  %s0 = inlined_call_operand.vmem [shape: f32[2,256,256], index: 0, kind: input, shape index: {}, may-alias: {0,6}]
  %s1 = inlined_call_operand.vmem [shape: f32[2,9,128], index: 1, kind: input, shape index: {}, may-alias: {1,7}]
  %s2 = inlined_call_operand.vmem [shape: f32[256,128], index: 2, kind: input, shape index: {}]
  %s3 = inlined_call_operand.vmem [shape: f32[1,256], index: 3, kind: input, shape index: {}]
  %s4 = inlined_call_operand.vmem [shape: f32[128,256], index: 4, kind: input, shape index: {}]
  %s5 = inlined_call_operand.vmem [shape: f32[1,128], index: 5, kind: input, shape index: {}]
  %s6 = inlined_call_operand.vmem [shape: f32[2,256,256], index: 6, kind: output, shape index: {0}, may-alias: {0,6}]
  %s7 = inlined_call_operand.vmem [shape: f32[2,9,128], index: 7, kind: output, shape index: {1}, may-alias: {1,7}]
  %8 = xla_tuple %s6, %s7
  %s9 = sld [smem:[#allocation0]]
  $region73: #{local_refinement_unit.1} parent=0
    _
  %s11 = ssub.s32 1, %s9
  %s12 = scalar_select 0, %s11, %s9
  loop: start=0, step=1, limit=4
  $region2: #{local_refinement_unit.1} parent=0 // loop_pre_header
    _
  $region3: #{local_refinement_unit.1} parent=0 // loop_header
    %s14 = sphi 0, %s18
    %p15 = scmp.ge.s32.totalorder %s14, 4
    %s21 = sphi 0, %s33
    %s22 = sphi 0, %s29
    %s23 = sphi 0, %s21
    %s24 = sphi 0, %s22
    %s25 = sphi 0, %s23
    %s26 = sphi 0, %s24
    %s38 = sphi 0, %s40
    %s41 = sphi 0, %s38
    %s42 = sphi 0, %s41
    %s58 = sphi 0, %s42
    %s64 = sphi 0, %s66
    %s67 = sphi 0, %s64
    %s68 = sphi 0, %s67
    %s84 = sphi 0, %s68
    %s88 = sphi 0, %s88
    %s90 = sphi 0, %s88
    %s91 = sphi 0, %s90
    %s105 = sphi 0, %s91
    %s109 = sphi 0, %s109
    %s111 = sphi 0, %s109
    %s112 = sphi 0, %s111
    %s126 = sphi 0, %s112
    %s130 = sphi 0, %s130
    %s132 = sphi 0, %s130
    %s133 = sphi 0, %s132
    %s147 = sphi 0, %s133
    %s151 = sphi 0, %s151
    %s153 = sphi 0, %s151
    %s154 = sphi 0, %s153
    %s168 = sphi 0, %s154
    %s176 = sphi 0, %s178
    %s179 = sphi 0, %s176
    %s180 = sphi 0, %s179
    %s196 = sphi 0, %s180
    %s202 = sphi 0, %s204
    %s205 = sphi 0, %s202
    %s206 = sphi 0, %s205
    %s222 = sphi 0, %s206
  $region4: #{local_refinement_unit.1} parent=0 // loop_header_branch
    %17 = sbr.rel (%p15) target = $region8
  $region5: #{local_refinement_unit.1} parent=0 // loop_body
    %s19 = ssub.s32 %s14, 1
    %s20 = ssub.s32 %s14, 2
    %s27 = sadd.s32 1, %s22
    %p28 = scmp.ge.s32.totalorder %s27, 1
    %s29 = scalar_select %p28, 0, %s27
    %s30 = sadd.s32 1, %s21
    %s31 = scalar_select %p28, %s30, %s21
    %p32 = scmp.ge.s32.totalorder %s31, 2
    %s33 = scalar_select %p32, 0, %s31
    %s34 = ssub.s32 %s21, %s33
    %s35 = ssub.s32 %s22, %s29
    %s36 = sor.u32 %s34, %s35
    %p37 = scmp.eq.s32.totalorder %s36, 0
    %s39 = sadd.s32 %s38, 1
    %s40 = scalar_select %p37, %s38, %s39
    %p43 = pneg %p37
    %p44 = scmp.eq.s32.totalorder %s14, 1
    %p45 = por %p43, %p44
    %p46 = scmp.ne.s32.totalorder %s38, %s41
    %p47 = scmp.eq.s32.totalorder %s14, 0
    %p48 = por %p46, %p47
    %p49 = scmp.ne.s32.totalorder %s38, %s41
    %p50 = scmp.eq.s32.totalorder %s19, 1
    %p51 = por %p49, %p50
    %p52 = scmp.ne.s32.totalorder %s41, %s42
    %p53 = scmp.eq.s32.totalorder %s19, 0
    %p54 = por %p52, %p53
    %p55 = scmp.ne.s32.totalorder %s41, %s42
    %p56 = scmp.eq.s32.totalorder %s20, 1
    %p57 = por %p55, %p56
    %p59 = scmp.ne.s32.totalorder %s42, %s58
    %p60 = scmp.eq.s32.totalorder %s20, 0
    %p61 = por %p59, %p60
    %s62 = ssub.s32 %s21, %s33
    %p63 = scmp.eq.s32.totalorder %s62, 0
    %s65 = sadd.s32 %s64, 1
    %s66 = scalar_select %p63, %s64, %s65
    %p69 = pneg %p63
    %p70 = scmp.eq.s32.totalorder %s14, 1
    %p71 = por %p69, %p70
    %p72 = scmp.ne.s32.totalorder %s64, %s67
    %p73 = scmp.eq.s32.totalorder %s14, 0
    %p74 = por %p72, %p73
    %p75 = scmp.ne.s32.totalorder %s64, %s67
    %p76 = scmp.eq.s32.totalorder %s19, 1
    %p77 = por %p75, %p76
    %p78 = scmp.ne.s32.totalorder %s67, %s68
    %p79 = scmp.eq.s32.totalorder %s19, 0
    %p80 = por %p78, %p79
    %p81 = scmp.ne.s32.totalorder %s67, %s68
    %p82 = scmp.eq.s32.totalorder %s20, 1
    %p83 = por %p81, %p82
    %p85 = scmp.ne.s32.totalorder %s68, %s84
    %p86 = scmp.eq.s32.totalorder %s20, 0
    %p87 = por %p85, %p86
    %s89 = sadd.s32 %s88, 1
    %p92 = scmp.eq.s32.totalorder %s14, 1
    %p93 = scmp.ne.s32.totalorder %s88, %s90
    %p94 = scmp.eq.s32.totalorder %s14, 0
    %p95 = por %p93, %p94
    %p96 = scmp.ne.s32.totalorder %s88, %s90
    %p97 = scmp.eq.s32.totalorder %s19, 1
    %p98 = por %p96, %p97
    %p99 = scmp.ne.s32.totalorder %s90, %s91
    %p100 = scmp.eq.s32.totalorder %s19, 0
    %p101 = por %p99, %p100
    %p102 = scmp.ne.s32.totalorder %s90, %s91
    %p103 = scmp.eq.s32.totalorder %s20, 1
    %p104 = por %p102, %p103
    %p106 = scmp.ne.s32.totalorder %s91, %s105
    %p107 = scmp.eq.s32.totalorder %s20, 0
    %p108 = por %p106, %p107
    %s110 = sadd.s32 %s109, 1
    %p113 = scmp.eq.s32.totalorder %s14, 1
    %p114 = scmp.ne.s32.totalorder %s109, %s111
    %p115 = scmp.eq.s32.totalorder %s14, 0
    %p116 = por %p114, %p115
    %p117 = scmp.ne.s32.totalorder %s109, %s111
    %p118 = scmp.eq.s32.totalorder %s19, 1
    %p119 = por %p117, %p118
    %p120 = scmp.ne.s32.totalorder %s111, %s112
    %p121 = scmp.eq.s32.totalorder %s19, 0
    %p122 = por %p120, %p121
    %p123 = scmp.ne.s32.totalorder %s111, %s112
    %p124 = scmp.eq.s32.totalorder %s20, 1
    %p125 = por %p123, %p124
    %p127 = scmp.ne.s32.totalorder %s112, %s126
    %p128 = scmp.eq.s32.totalorder %s20, 0
    %p129 = por %p127, %p128
    %s131 = sadd.s32 %s130, 1
    %p134 = scmp.eq.s32.totalorder %s14, 1
    %p135 = scmp.ne.s32.totalorder %s130, %s132
    %p136 = scmp.eq.s32.totalorder %s14, 0
    %p137 = por %p135, %p136
    %p138 = scmp.ne.s32.totalorder %s130, %s132
    %p139 = scmp.eq.s32.totalorder %s19, 1
    %p140 = por %p138, %p139
    %p141 = scmp.ne.s32.totalorder %s132, %s133
    %p142 = scmp.eq.s32.totalorder %s19, 0
    %p143 = por %p141, %p142
    %p144 = scmp.ne.s32.totalorder %s132, %s133
    %p145 = scmp.eq.s32.totalorder %s20, 1
    %p146 = por %p144, %p145
    %p148 = scmp.ne.s32.totalorder %s133, %s147
    %p149 = scmp.eq.s32.totalorder %s20, 0
    %p150 = por %p148, %p149
    %s152 = sadd.s32 %s151, 1
    %p155 = scmp.eq.s32.totalorder %s14, 1
    %p156 = scmp.ne.s32.totalorder %s151, %s153
    %p157 = scmp.eq.s32.totalorder %s14, 0
    %p158 = por %p156, %p157
    %p159 = scmp.ne.s32.totalorder %s151, %s153
    %p160 = scmp.eq.s32.totalorder %s19, 1
    %p161 = por %p159, %p160
    %p162 = scmp.ne.s32.totalorder %s153, %s154
    %p163 = scmp.eq.s32.totalorder %s19, 0
    %p164 = por %p162, %p163
    %p165 = scmp.ne.s32.totalorder %s153, %s154
    %p166 = scmp.eq.s32.totalorder %s20, 1
    %p167 = por %p165, %p166
    %p169 = scmp.ne.s32.totalorder %s154, %s168
    %p170 = scmp.eq.s32.totalorder %s20, 0
    %p171 = por %p169, %p170
    %s172 = ssub.s32 %s21, %s33
    %s173 = ssub.s32 %s22, %s29
    %s174 = sor.u32 %s172, %s173
    %p175 = scmp.eq.s32.totalorder %s174, 0
    %s177 = sadd.s32 %s176, 1
    %s178 = scalar_select %p175, %s176, %s177
    %p181 = pneg %p175
    %p182 = scmp.eq.s32.totalorder %s14, 1
    %p183 = por %p181, %p182
    %p184 = scmp.ne.s32.totalorder %s176, %s179
    %p185 = scmp.eq.s32.totalorder %s14, 0
    %p186 = por %p184, %p185
    %p187 = scmp.ne.s32.totalorder %s176, %s179
    %p188 = scmp.eq.s32.totalorder %s19, 1
    %p189 = por %p187, %p188
    %p190 = scmp.ne.s32.totalorder %s179, %s180
    %p191 = scmp.eq.s32.totalorder %s19, 0
    %p192 = por %p190, %p191
    %p193 = scmp.ne.s32.totalorder %s179, %s180
    %p194 = scmp.eq.s32.totalorder %s20, 1
    %p195 = por %p193, %p194
    %p197 = scmp.ne.s32.totalorder %s180, %s196
    %p198 = scmp.eq.s32.totalorder %s20, 0
    %p199 = por %p197, %p198
    %s200 = ssub.s32 %s21, %s33
    %p201 = scmp.eq.s32.totalorder %s200, 0
    %s203 = sadd.s32 %s202, 1
    %s204 = scalar_select %p201, %s202, %s203
    %p207 = pneg %p201
    %p208 = scmp.eq.s32.totalorder %s14, 1
    %p209 = por %p207, %p208
    %p210 = scmp.ne.s32.totalorder %s202, %s205
    %p211 = scmp.eq.s32.totalorder %s14, 0
    %p212 = por %p210, %p211
    %p213 = scmp.ne.s32.totalorder %s202, %s205
    %p214 = scmp.eq.s32.totalorder %s19, 1
    %p215 = por %p213, %p214
    %p216 = scmp.ne.s32.totalorder %s205, %s206
    %p217 = scmp.eq.s32.totalorder %s19, 0
    %p218 = por %p216, %p217
    %p219 = scmp.ne.s32.totalorder %s205, %s206
    %p220 = scmp.eq.s32.totalorder %s20, 1
    %p221 = por %p219, %p220
    %p223 = scmp.ne.s32.totalorder %s206, %s222
    %p224 = scmp.eq.s32.totalorder %s20, 0
    %p225 = por %p223, %p224
    %p226 = scmp.le.s32.totalorder 1, %s14
    %p227 = scmp.lt.s32.totalorder %s14, 3
    %p228 = pnand %p226, %p227
    %p229 = pneg %p228
    // Predicated region
    $region9: #{local_refinement_unit.1} parent=5 // pred_check
      _
    $region10: #{local_refinement_unit.1} parent=5 // pred_check_branch
      %231 = sbr.rel (%p228) target = $region12
    $region11: #{local_refinement_unit.1} parent=5 // pred_region
      %s232 = ssub.s32 %s14, 1
      // Predicated region
      $region13: #{local_refinement_unit.1} parent=11 // pred_check
        %p233 = pneg %p101
      $region14: #{local_refinement_unit.1} parent=11 // pred_check_branch
        %235 = sbr.rel (%p233) target = $region16
      $region15: #{local_refinement_unit.1} parent=11 // pred_region
        _
      $region16: #{local_refinement_unit.1} parent=11 // pred_fallthru
        _
      // Predicated region
      $region17: #{local_refinement_unit.1} parent=11 // pred_check
        %p236 = pneg %p122
      $region18: #{local_refinement_unit.1} parent=11 // pred_check_branch
        %238 = sbr.rel (%p236) target = $region20
      $region19: #{local_refinement_unit.1} parent=11 // pred_region
        _
      $region20: #{local_refinement_unit.1} parent=11 // pred_fallthru
        _
      // Predicated region
      $region21: #{local_refinement_unit.1} parent=11 // pred_check
        %p239 = pneg %p143
      $region22: #{local_refinement_unit.1} parent=11 // pred_check_branch
        %241 = sbr.rel (%p239) target = $region24
      $region23: #{local_refinement_unit.1} parent=11 // pred_region
        _
      $region24: #{local_refinement_unit.1} parent=11 // pred_fallthru
        _
      // Predicated region
      $region25: #{local_refinement_unit.1} parent=11 // pred_check
        %p242 = pneg %p164
      $region26: #{local_refinement_unit.1} parent=11 // pred_check_branch
        %244 = sbr.rel (%p242) target = $region28
      $region27: #{local_refinement_unit.1} parent=11 // pred_region
        _
      $region28: #{local_refinement_unit.1} parent=11 // pred_fallthru
        _
    $region12: #{local_refinement_unit.1} parent=5 // pred_fallthru
      _
    %p245 = scmp.lt.s32.totalorder %s14, 2
    // Predicated region
    $region29: #{local_refinement_unit.1} parent=5 // pred_check
      %p246 = pneg %p245
    $region30: #{local_refinement_unit.1} parent=5 // pred_check_branch
      %248 = sbr.rel (%p246) target = $region32
    $region31: #{local_refinement_unit.1} parent=5 // pred_region
      // Predicated region
      $region33: #{local_refinement_unit.1} parent=31 // pred_check
        %p249 = pneg %p48
      $region34: #{local_refinement_unit.1} parent=31 // pred_check_branch
        %251 = sbr.rel (%p249) target = $region36
      $region35: #{local_refinement_unit.1} parent=31 // pred_region
        %s252 = smul.u32 2, %s22
        %p253 = scmp.lt.s32.totalorder %s21, 1
        %s254 = scalar_select %p253, %s21, 1
        %p255 = scmp.lt.s32.totalorder %s252, 1
        %s256 = scalar_select %p255, %s252, 1
        %s257 = smul.addr %s254, 64
        %s258 = sadd.s32 %s256, %s257
        %s259 = smul.addr %s258, 8
        %s260 = scalar_lea.vmem %s0, %s259
        %s261 = smul.u32 2, %s22
      $region36: #{local_refinement_unit.1} parent=31 // pred_fallthru
        _
      // Predicated region
      $region37: #{local_refinement_unit.1} parent=31 // pred_check
        %p262 = pneg %p74
      $region38: #{local_refinement_unit.1} parent=31 // pred_check_branch
        %264 = sbr.rel (%p262) target = $region40
      $region39: #{local_refinement_unit.1} parent=31 // pred_region
        %p265 = scmp.lt.s32.totalorder %s21, 1
        %s266 = scalar_select %p265, %s21, 1
        %s267 = smul.addr %s266, 2
        %s268 = smul.addr %s267, 8
        %s269 = scalar_lea.vmem %s1, %s268
      $region40: #{local_refinement_unit.1} parent=31 // pred_fallthru
        _
    $region32: #{local_refinement_unit.1} parent=5 // pred_fallthru
      _
    %p270 = scmp.le.s32.totalorder 1, %s14
    %p271 = scmp.lt.s32.totalorder %s14, 3
    %p272 = pnand %p270, %p271
    %p273 = pneg %p272
    // Predicated region
    $region41: #{local_refinement_unit.1} parent=5 // pred_check
      _
    $region42: #{local_refinement_unit.1} parent=5 // pred_check_branch
      %275 = sbr.rel (%p272) target = $region44
    $region43: #{local_refinement_unit.1} parent=5 // pred_region
      %s276 = ssub.s32 %s14, 1
      %s277 = smul.u32 2, %s24
      %p278 = scmp.lt.s32.totalorder %s23, 1
      %s279 = scalar_select %p278, %s23, 1
      %p280 = scmp.lt.s32.totalorder %s277, 1
      %s281 = scalar_select %p280, %s277, 1
      %s282 = smul.addr %s279, 64
      %s283 = sadd.s32 %s281, %s282
      %s284 = smul.addr %s283, 8
      %s285 = scalar_lea.vmem %s0, %s284
      %p286 = pneg %p54
      %p287 = pneg %p51
      %p288 = scmp.lt.s32.totalorder %s23, 1
      %s289 = scalar_select %p288, %s23, 1
      %s290 = smul.addr %s289, 2
      %s291 = smul.addr %s290, 8
      %s292 = scalar_lea.vmem %s1, %s291
      %p293 = pneg %p80
      %p294 = pneg %p77
      %p295 = pneg %p101
      %p296 = pneg %p98
      %p297 = pneg %p122
      %p298 = pneg %p119
      %p299 = pneg %p143
      %p300 = pneg %p140
      %p301 = pneg %p164
      %p302 = pneg %p161
      %p303 = pneg %p192
      %p304 = pneg %p189
      %s305 = smul.u32 2, %s24
      %p306 = scmp.lt.s32.totalorder %s23, 1
      %s307 = scalar_select %p306, %s23, 1
      %p308 = scmp.lt.s32.totalorder %s305, 1
      %s309 = scalar_select %p308, %s305, 1
      %s310 = smul.addr %s307, 64
      %s311 = sadd.s32 %s309, %s310
      %s312 = smul.addr %s311, 8
      %s313 = scalar_lea.vmem %s6, %s312
      %p314 = pneg %p218
      %p315 = pneg %p215
      %p316 = scmp.lt.s32.totalorder %s23, 1
      %s317 = scalar_select %p316, %s23, 1
      %s318 = smul.addr %s317, 2
      %s319 = smul.addr %s318, 8
      %s320 = scalar_lea.vmem %s7, %s319
      %s321 = smul.u32 2, %s24
      %p322 = scmp.lt.s32.totalorder %s23, 1
      %s323 = scalar_select %p322, %s23, 1
      %p324 = scmp.lt.s32.totalorder %s321, 1
      %s325 = scalar_select %p324, %s321, 1
      %s326 = smul.addr %s323, 64
      %s327 = sadd.s32 %s325, %s326
      %s328 = smul.addr %s327, 8
      %s329 = scalar_lea.vmem %s0, %s328
      %s330 = smul.u32 2, %s24
      %p331 = scmp.lt.s32.totalorder %s23, 1
      %s332 = scalar_select %p331, %s23, 1
      %s333 = smul.addr %s332, 2
      %s334 = smul.addr %s333, 8
      %s335 = scalar_lea.vmem %s1, %s334
      %s336 = smul.u32 2, %s24
      %p337 = scmp.lt.s32.totalorder %s23, 1
      %s338 = scalar_select %p337, %s23, 1
      %p339 = scmp.lt.s32.totalorder %s336, 1
      %s340 = scalar_select %p339, %s336, 1
      %s341 = smul.addr %s338, 64
      %s342 = sadd.s32 %s340, %s341
      %s343 = smul.addr %s342, 8
      %s344 = scalar_lea.vmem %s6, %s343
      %s345 = smul.u32 2, %s24
      %p346 = scmp.lt.s32.totalorder %s23, 1
      %s347 = scalar_select %p346, %s23, 1
      %s348 = smul.addr %s347, 2
      %s349 = smul.addr %s348, 8
      %s350 = scalar_lea.vmem %s7, %s349
      %p351 = scmp.eq.s32.totalorder %s24, 0
      // Predicated region
      $region45: #{local_refinement_unit.1} parent=43 // pred_check
        %p352 = pneg %p351
      $region46: #{local_refinement_unit.1} parent=43 // pred_check_branch
        %354 = sbr.rel (%p352) target = $region48
      $region47: #{local_refinement_unit.1} parent=43 // pred_region
        %v355 = vld [vmem:[%s335] sm:$0xff]
        %v356 = vld [vmem:[%s335 + $0x8] sm:$0x1]
        %vm357 = vcmask 1040384
        %v358 = vsel %vm357, %v356, 0.0
        %v359 = vadd.f32 %v355, %v358
        %v360 = vrot.slane %v359, 4
        %v361 = vadd.f32 %v359, %v360
        %v362 = vrot.slane %v361, 2
        %v363 = vadd.f32 %v361, %v362
        %v364 = vrot.slane %v363, 1
        %v365 = vadd.f32 %v363, %v364
        %v366 = vadd.f32 %v355, 0.0
        %v367 = vsub.f32 %v365, %v366
        %v368 = vmul.f32 %v367, 0.125
        %v369 = vld [vmem:[%s2] sm:$0xff]
        %v370 = vld [vmem:[%s2 + $0x8] sm:$0xff]
        %v371 = vld [vmem:[%s2 + $0x10] sm:$0xff]
        %v372 = vld [vmem:[%s2 + $0x18] sm:$0xff]
        %v373 = vld [vmem:[%s2 + $0x20] sm:$0xff]
        %v374 = vld [vmem:[%s2 + $0x28] sm:$0xff]
        %v375 = vld [vmem:[%s2 + $0x30] sm:$0xff]
        %v376 = vld [vmem:[%s2 + $0x38] sm:$0xff]
        %v377 = vld [vmem:[%s2 + $0x40] sm:$0xff]
        %v378 = vld [vmem:[%s2 + $0x48] sm:$0xff]
        %v379 = vld [vmem:[%s2 + $0x50] sm:$0xff]
        %v380 = vld [vmem:[%s2 + $0x58] sm:$0xff]
        %v381 = vld [vmem:[%s2 + $0x60] sm:$0xff]
        %v382 = vld [vmem:[%s2 + $0x68] sm:$0xff]
        %v383 = vld [vmem:[%s2 + $0x70] sm:$0xff]
        %v384 = vld [vmem:[%s2 + $0x78] sm:$0xff]
        %v385 = vld [vmem:[%s2 + $0x80] sm:$0xff]
        %v386 = vld [vmem:[%s2 + $0x88] sm:$0xff]
        %v387 = vld [vmem:[%s2 + $0x90] sm:$0xff]
        %v388 = vld [vmem:[%s2 + $0x98] sm:$0xff]
        %v389 = vld [vmem:[%s2 + $0xa0] sm:$0xff]
        %v390 = vld [vmem:[%s2 + $0xa8] sm:$0xff]
        %v391 = vld [vmem:[%s2 + $0xb0] sm:$0xff]
        %v392 = vld [vmem:[%s2 + $0xb8] sm:$0xff]
        %v393 = vld [vmem:[%s2 + $0xc0] sm:$0xff]
        %v394 = vld [vmem:[%s2 + $0xc8] sm:$0xff]
        %v395 = vld [vmem:[%s2 + $0xd0] sm:$0xff]
        %v396 = vld [vmem:[%s2 + $0xd8] sm:$0xff]
        %v397 = vld [vmem:[%s2 + $0xe0] sm:$0xff]
        %v398 = vld [vmem:[%s2 + $0xe8] sm:$0xff]
        %v399 = vld [vmem:[%s2 + $0xf0] sm:$0xff]
        %v400 = vld [vmem:[%s2 + $0xf8] sm:$0xff]
        %v401 = vld [vmem:[%s3] sm:$0x3]
        %v403 = vlaneseq
        %v404 = vshrl.u32 %v403, 7
        %v405 = vsub.s32 0, %v404
        %v406 = vrot.slane %v401, %v405
        %v407 = vlaneseq
        %v408 = vshrl.u32 %v407, 7
        %v409 = vsub.s32 1, %v408
        %v410 = vrot.slane %v401, %v409
        %413 = vmatprep.subr.mxu0 0.0
        %414 = vmatpush1.xpose.msra.mxu0 %v369
        %415 = vmatprep.subr.mxu0 0.0
        %416 = vmatpush1.xpose.msra.mxu0 %v370
        %417 = vmatprep.subr.mxu0 0.0
        %418 = vmatpush1.xpose.msra.mxu0 %v371
        %419 = vmatprep.subr.mxu0 0.0
        %420 = vmatpush1.xpose.msra.mxu0 %v372
        %421 = vmatprep.subr.mxu0 0.0
        %422 = vmatpush1.xpose.msra.mxu0 %v373
        %423 = vmatprep.subr.mxu0 0.0
        %424 = vmatpush1.xpose.msra.mxu0 %v374
        %425 = vmatprep.subr.mxu0 0.0
        %426 = vmatpush1.xpose.msra.mxu0 %v375
        %427 = vmatprep.subr.mxu0 0.0
        %428 = vmatpush1.xpose.msra.mxu0 %v376
        %429 = vmatprep.subr.mxu0 0.0
        %430 = vmatpush1.xpose.msra.mxu0 %v377
        %431 = vmatprep.subr.mxu0 0.0
        %432 = vmatpush1.xpose.msra.mxu0 %v378
        %433 = vmatprep.subr.mxu0 0.0
        %434 = vmatpush1.xpose.msra.mxu0 %v379
        %435 = vmatprep.subr.mxu0 0.0
        %436 = vmatpush1.xpose.msra.mxu0 %v380
        %437 = vmatprep.subr.mxu0 0.0
        %438 = vmatpush1.xpose.msra.mxu0 %v381
        %439 = vmatprep.subr.mxu0 0.0
        %440 = vmatpush1.xpose.msra.mxu0 %v382
        %441 = vmatprep.subr.mxu0 0.0
        %442 = vmatpush1.xpose.msra.mxu0 %v383
        %443 = vmatprep.subr.mxu0 0.0
        %444 = vmatpush1.xpose.msra.mxu0 %v384
        %445 = vmatprep.subr.mxu0 0.0
        %446 = vmatpush1.xpose.msra.mxu0 %v385
        %447 = vmatprep.subr.mxu0 0.0
        %448 = vmatpush1.xpose.msra.mxu0 %v386
        %449 = vmatprep.subr.mxu0 0.0
        %450 = vmatpush1.xpose.msra.mxu0 %v387
        %451 = vmatprep.subr.mxu0 0.0
        %452 = vmatpush1.xpose.msra.mxu0 %v388
        %453 = vmatprep.subr.mxu0 0.0
        %454 = vmatpush1.xpose.msra.mxu0 %v389
        %455 = vmatprep.subr.mxu0 0.0
        %456 = vmatpush1.xpose.msra.mxu0 %v390
        %457 = vmatprep.subr.mxu0 0.0
        %458 = vmatpush1.xpose.msra.mxu0 %v391
        %459 = vmatprep.subr.mxu0 0.0
        %460 = vmatpush1.xpose.msra.mxu0 %v392
        %461 = vmatprep.subr.mxu0 0.0
        %462 = vmatpush1.xpose.msra.mxu0 %v393
        %463 = vmatprep.subr.mxu0 0.0
        %464 = vmatpush1.xpose.msra.mxu0 %v394
        %465 = vmatprep.subr.mxu0 0.0
        %466 = vmatpush1.xpose.msra.mxu0 %v395
        %467 = vmatprep.subr.mxu0 0.0
        %468 = vmatpush1.xpose.msra.mxu0 %v396
        %469 = vmatprep.subr.mxu0 0.0
        %470 = vmatpush1.xpose.msra.mxu0 %v397
        %471 = vmatprep.subr.mxu0 0.0
        %472 = vmatpush1.xpose.msra.mxu0 %v398
        %473 = vmatprep.subr.mxu0 0.0
        %474 = vmatpush1.xpose.msra.mxu0 %v399
        %475 = vmatprep.subr.mxu0 0.0
        %476 = vmatpush1.xpose.msra.mxu0 %v400
        %477 = vmatprep.mubr.f32.mxu0 0.0
        %478 = vmatmul.mubr.f32.gmra.mrb[0].mxu0 %v368
        %v479 = vpop.f32.mrb[0].mxu0
        %v480 = vadd.f32 %v406, %v479
        %v481 = vpop.f32.mrb[0].mxu0
        %v482 = vadd.f32 %v410, %v481
        %483 = vdwg.mxu0
        %v486 = vcombine.low %v480, %v482
        %v488 = vunpack.c.l.s4 1966171168
        %v489 = vunpack.c.0.s8 %v488
        %v490 = vlaneseq
        %v491 = vshrl.u32 %v490, 7
        %v492 = vsub.s32 %v489, %v491
        %v493 = vrot.slane %v486, %v492
        %v495 = vunpack.c.l.s4 1966171168
        %v496 = vunpack.c.0.s8 %v495
        %v497 = vlaneseq
        %v498 = vshrl.u32 %v497, 7
        %v499 = vsub.s32 %v496, %v498
        %v500 = vrot.slane %v493, %v499
        %v502 = vlaneseq
        %vm503 = vcmp.ge.s32.totalorder %v502, 0
        %vm504 = vcmp.lt.s32.totalorder %v502, 256
        %vm505 = vmand %vm503, %vm504
        %506 = vst.msk [vmem:[#allocation2] sm:$0x3] %vm505, %v500
        %507 = vst.msk [vmem:[#allocation3] sm:$0x3] %vm505, 0.0
      $region48: #{local_refinement_unit.1} parent=43 // pred_fallthru
        _
      %v508 = vld [vmem:[%s329] sm:$0xff]
      %v509 = vld [vmem:[%s329 + $0x8] sm:$0xff]
      %v510 = vld [vmem:[%s329 + $0x10] sm:$0xff]
      %v511 = vld [vmem:[%s329 + $0x18] sm:$0xff]
      %v512 = vld [vmem:[%s329 + $0x20] sm:$0xff]
      %v513 = vld [vmem:[%s329 + $0x28] sm:$0xff]
      %v514 = vld [vmem:[%s329 + $0x30] sm:$0xff]
      %v515 = vld [vmem:[%s329 + $0x38] sm:$0xff]
      %v516 = vld [vmem:[%s329 + $0x40] sm:$0xff]
      %v517 = vld [vmem:[%s329 + $0x48] sm:$0xff]
      %v518 = vld [vmem:[%s329 + $0x50] sm:$0xff]
      %v519 = vld [vmem:[%s329 + $0x58] sm:$0xff]
      %v520 = vld [vmem:[%s329 + $0x60] sm:$0xff]
      %v521 = vld [vmem:[%s329 + $0x68] sm:$0xff]
      %v522 = vld [vmem:[%s329 + $0x70] sm:$0xff]
      %v523 = vld [vmem:[%s329 + $0x78] sm:$0xff]
      %v524 = vld [vmem:[%s329 + $0x80] sm:$0xff]
      %v525 = vld [vmem:[%s329 + $0x88] sm:$0xff]
      %v526 = vld [vmem:[%s329 + $0x90] sm:$0xff]
      %v527 = vld [vmem:[%s329 + $0x98] sm:$0xff]
      %v528 = vld [vmem:[%s329 + $0xa0] sm:$0xff]
      %v529 = vld [vmem:[%s329 + $0xa8] sm:$0xff]
      %v530 = vld [vmem:[%s329 + $0xb0] sm:$0xff]
      %v531 = vld [vmem:[%s329 + $0xb8] sm:$0xff]
      %v532 = vld [vmem:[%s329 + $0xc0] sm:$0xff]
      %v533 = vld [vmem:[%s329 + $0xc8] sm:$0xff]
      %v534 = vld [vmem:[%s329 + $0xd0] sm:$0xff]
      %v535 = vld [vmem:[%s329 + $0xd8] sm:$0xff]
      %v536 = vld [vmem:[%s329 + $0xe0] sm:$0xff]
      %v537 = vld [vmem:[%s329 + $0xe8] sm:$0xff]
      %v538 = vld [vmem:[%s329 + $0xf0] sm:$0xff]
      %v539 = vld [vmem:[%s329 + $0xf8] sm:$0xff]
      %v540 = vld [vmem:[%s329 + $0x100] sm:$0xff]
      %v541 = vld [vmem:[%s329 + $0x108] sm:$0xff]
      %v542 = vld [vmem:[%s329 + $0x110] sm:$0xff]
      %v543 = vld [vmem:[%s329 + $0x118] sm:$0xff]
      %v544 = vld [vmem:[%s329 + $0x120] sm:$0xff]
      %v545 = vld [vmem:[%s329 + $0x128] sm:$0xff]
      %v546 = vld [vmem:[%s329 + $0x130] sm:$0xff]
      %v547 = vld [vmem:[%s329 + $0x138] sm:$0xff]
      %v548 = vld [vmem:[%s329 + $0x140] sm:$0xff]
      %v549 = vld [vmem:[%s329 + $0x148] sm:$0xff]
      %v550 = vld [vmem:[%s329 + $0x150] sm:$0xff]
      %v551 = vld [vmem:[%s329 + $0x158] sm:$0xff]
      %v552 = vld [vmem:[%s329 + $0x160] sm:$0xff]
      %v553 = vld [vmem:[%s329 + $0x168] sm:$0xff]
      %v554 = vld [vmem:[%s329 + $0x170] sm:$0xff]
      %v555 = vld [vmem:[%s329 + $0x178] sm:$0xff]
      %v556 = vld [vmem:[%s329 + $0x180] sm:$0xff]
      %v557 = vld [vmem:[%s329 + $0x188] sm:$0xff]
      %v558 = vld [vmem:[%s329 + $0x190] sm:$0xff]
      %v559 = vld [vmem:[%s329 + $0x198] sm:$0xff]
      %v560 = vld [vmem:[%s329 + $0x1a0] sm:$0xff]
      %v561 = vld [vmem:[%s329 + $0x1a8] sm:$0xff]
      %v562 = vld [vmem:[%s329 + $0x1b0] sm:$0xff]
      %v563 = vld [vmem:[%s329 + $0x1b8] sm:$0xff]
      %v564 = vld [vmem:[%s329 + $0x1c0] sm:$0xff]
      %v565 = vld [vmem:[%s329 + $0x1c8] sm:$0xff]
      %v566 = vld [vmem:[%s329 + $0x1d0] sm:$0xff]
      %v567 = vld [vmem:[%s329 + $0x1d8] sm:$0xff]
      %v568 = vld [vmem:[%s329 + $0x1e0] sm:$0xff]
      %v569 = vld [vmem:[%s329 + $0x1e8] sm:$0xff]
      %v570 = vld [vmem:[%s329 + $0x1f0] sm:$0xff]
      %v571 = vld [vmem:[%s329 + $0x1f8] sm:$0xff]
      %v572 = vld [vmem:[#allocation2] sm:$0x3]
      %v574 = vlaneseq
      %v575 = vshrl.u32 %v574, 7
      %v576 = vsub.s32 0, %v575
      %v577 = vrot.slane %v572, %v576
      %v578 = vlaneseq
      %v579 = vshrl.u32 %v578, 7
      %v580 = vsub.s32 1, %v579
      %v581 = vrot.slane %v572, %v580
      %v584 = vlaneseq
      %v585 = vshrl.u32 %v584, 7
      %v586 = vsub.s32 0, %v585
      %v587 = vrot.slane %v577, %v586
      %589 = vbcast.lane.b32.xlu0 %v587, 256
      %v590 = vpop.permute.xlu0 %589
      %s592 = sor.u32 256, 8
      %593 = vbcast.lane.b32.xlu0 %v587, %s592
      %v594 = vpop.permute.xlu0 %593
      %s596 = sor.u32 256, 16
      %597 = vbcast.lane.b32.xlu0 %v587, %s596
      %v598 = vpop.permute.xlu0 %597
      %s600 = sor.u32 256, 24
      %601 = vbcast.lane.b32.xlu0 %v587, %s600
      %v602 = vpop.permute.xlu0 %601
      %s604 = sor.u32 256, 32
      %605 = vbcast.lane.b32.xlu0 %v587, %s604
      %v606 = vpop.permute.xlu0 %605
      %s608 = sor.u32 256, 40
      %609 = vbcast.lane.b32.xlu0 %v587, %s608
      %v610 = vpop.permute.xlu0 %609
      %s612 = sor.u32 256, 48
      %613 = vbcast.lane.b32.xlu0 %v587, %s612
      %v614 = vpop.permute.xlu0 %613
      %s616 = sor.u32 256, 56
      %617 = vbcast.lane.b32.xlu0 %v587, %s616
      %v618 = vpop.permute.xlu0 %617
      %s620 = sor.u32 256, 64
      %621 = vbcast.lane.b32.xlu0 %v587, %s620
      %v622 = vpop.permute.xlu0 %621
      %s624 = sor.u32 256, 72
      %625 = vbcast.lane.b32.xlu0 %v587, %s624
      %v626 = vpop.permute.xlu0 %625
      %s628 = sor.u32 256, 80
      %629 = vbcast.lane.b32.xlu0 %v587, %s628
      %v630 = vpop.permute.xlu0 %629
      %s632 = sor.u32 256, 88
      %633 = vbcast.lane.b32.xlu0 %v587, %s632
      %v634 = vpop.permute.xlu0 %633
      %s636 = sor.u32 256, 96
      %637 = vbcast.lane.b32.xlu0 %v587, %s636
      %v638 = vpop.permute.xlu0 %637
      %s640 = sor.u32 256, 104
      %641 = vbcast.lane.b32.xlu0 %v587, %s640
      %v642 = vpop.permute.xlu0 %641
      %s644 = sor.u32 256, 112
      %645 = vbcast.lane.b32.xlu0 %v587, %s644
      %v646 = vpop.permute.xlu0 %645
      %s648 = sor.u32 256, 120
      %649 = vbcast.lane.b32.xlu0 %v587, %s648
      %v650 = vpop.permute.xlu0 %649
      %v651 = vlaneseq
      %v652 = vshrl.u32 %v651, 7
      %v653 = vsub.s32 0, %v652
      %v654 = vrot.slane %v581, %v653
      %656 = vbcast.lane.b32.xlu0 %v654, 256
      %v657 = vpop.permute.xlu0 %656
      %s659 = sor.u32 256, 8
      %660 = vbcast.lane.b32.xlu0 %v654, %s659
      %v661 = vpop.permute.xlu0 %660
      %s663 = sor.u32 256, 16
      %664 = vbcast.lane.b32.xlu0 %v654, %s663
      %v665 = vpop.permute.xlu0 %664
      %s667 = sor.u32 256, 24
      %668 = vbcast.lane.b32.xlu0 %v654, %s667
      %v669 = vpop.permute.xlu0 %668
      %s671 = sor.u32 256, 32
      %672 = vbcast.lane.b32.xlu0 %v654, %s671
      %v673 = vpop.permute.xlu0 %672
      %s675 = sor.u32 256, 40
      %676 = vbcast.lane.b32.xlu0 %v654, %s675
      %v677 = vpop.permute.xlu0 %676
      %s679 = sor.u32 256, 48
      %680 = vbcast.lane.b32.xlu0 %v654, %s679
      %v681 = vpop.permute.xlu0 %680
      %s683 = sor.u32 256, 56
      %684 = vbcast.lane.b32.xlu0 %v654, %s683
      %v685 = vpop.permute.xlu0 %684
      %s687 = sor.u32 256, 64
      %688 = vbcast.lane.b32.xlu0 %v654, %s687
      %v689 = vpop.permute.xlu0 %688
      %s691 = sor.u32 256, 72
      %692 = vbcast.lane.b32.xlu0 %v654, %s691
      %v693 = vpop.permute.xlu0 %692
      %s695 = sor.u32 256, 80
      %696 = vbcast.lane.b32.xlu0 %v654, %s695
      %v697 = vpop.permute.xlu0 %696
      %s699 = sor.u32 256, 88
      %700 = vbcast.lane.b32.xlu0 %v654, %s699
      %v701 = vpop.permute.xlu0 %700
      %s703 = sor.u32 256, 96
      %704 = vbcast.lane.b32.xlu0 %v654, %s703
      %v705 = vpop.permute.xlu0 %704
      %s707 = sor.u32 256, 104
      %708 = vbcast.lane.b32.xlu0 %v654, %s707
      %v709 = vpop.permute.xlu0 %708
      %s711 = sor.u32 256, 112
      %712 = vbcast.lane.b32.xlu0 %v654, %s711
      %v713 = vpop.permute.xlu0 %712
      %s715 = sor.u32 256, 120
      %716 = vbcast.lane.b32.xlu0 %v654, %s715
      %v717 = vpop.permute.xlu0 %716
      %v718 = vadd.f32 %v508, %v590
      %v719 = vadd.f32 %v509, %v590
      %v720 = vadd.f32 %v510, %v594
      %v721 = vadd.f32 %v511, %v594
      %v722 = vadd.f32 %v512, %v598
      %v723 = vadd.f32 %v513, %v598
      %v724 = vadd.f32 %v514, %v602
      %v725 = vadd.f32 %v515, %v602
      %v726 = vadd.f32 %v516, %v606
      %v727 = vadd.f32 %v517, %v606
      %v728 = vadd.f32 %v518, %v610
      %v729 = vadd.f32 %v519, %v610
      %v730 = vadd.f32 %v520, %v614
      %v731 = vadd.f32 %v521, %v614
      %v732 = vadd.f32 %v522, %v618
      %v733 = vadd.f32 %v523, %v618
      %v734 = vadd.f32 %v524, %v622
      %v735 = vadd.f32 %v525, %v622
      %v736 = vadd.f32 %v526, %v626
      %v737 = vadd.f32 %v527, %v626
      %v738 = vadd.f32 %v528, %v630
      %v739 = vadd.f32 %v529, %v630
      %v740 = vadd.f32 %v530, %v634
      %v741 = vadd.f32 %v531, %v634
      %v742 = vadd.f32 %v532, %v638
      %v743 = vadd.f32 %v533, %v638
      %v744 = vadd.f32 %v534, %v642
      %v745 = vadd.f32 %v535, %v642
      %v746 = vadd.f32 %v536, %v646
      %v747 = vadd.f32 %v537, %v646
      %v748 = vadd.f32 %v538, %v650
      %v749 = vadd.f32 %v539, %v650
      %v750 = vadd.f32 %v540, %v657
      %v751 = vadd.f32 %v541, %v657
      %v752 = vadd.f32 %v542, %v661
      %v753 = vadd.f32 %v543, %v661
      %v754 = vadd.f32 %v544, %v665
      %v755 = vadd.f32 %v545, %v665
      %v756 = vadd.f32 %v546, %v669
      %v757 = vadd.f32 %v547, %v669
      %v758 = vadd.f32 %v548, %v673
      %v759 = vadd.f32 %v549, %v673
      %v760 = vadd.f32 %v550, %v677
      %v761 = vadd.f32 %v551, %v677
      %v762 = vadd.f32 %v552, %v681
      %v763 = vadd.f32 %v553, %v681
      %v764 = vadd.f32 %v554, %v685
      %v765 = vadd.f32 %v555, %v685
      %v766 = vadd.f32 %v556, %v689
      %v767 = vadd.f32 %v557, %v689
      %v768 = vadd.f32 %v558, %v693
      %v769 = vadd.f32 %v559, %v693
      %v770 = vadd.f32 %v560, %v697
      %v771 = vadd.f32 %v561, %v697
      %v772 = vadd.f32 %v562, %v701
      %v773 = vadd.f32 %v563, %v701
      %v774 = vadd.f32 %v564, %v705
      %v775 = vadd.f32 %v565, %v705
      %v776 = vadd.f32 %v566, %v709
      %v777 = vadd.f32 %v567, %v709
      %v778 = vadd.f32 %v568, %v713
      %v779 = vadd.f32 %v569, %v713
      %v780 = vadd.f32 %v570, %v717
      %v781 = vadd.f32 %v571, %v717
      %782 = vst [vmem:[%s344] sm:$0xff] %v718
      %783 = vst [vmem:[%s344 + $0x8] sm:$0xff] %v719
      %784 = vst [vmem:[%s344 + $0x10] sm:$0xff] %v720
      %785 = vst [vmem:[%s344 + $0x18] sm:$0xff] %v721
      %786 = vst [vmem:[%s344 + $0x20] sm:$0xff] %v722
      %787 = vst [vmem:[%s344 + $0x28] sm:$0xff] %v723
      %788 = vst [vmem:[%s344 + $0x30] sm:$0xff] %v724
      %789 = vst [vmem:[%s344 + $0x38] sm:$0xff] %v725
      %790 = vst [vmem:[%s344 + $0x40] sm:$0xff] %v726
      %791 = vst [vmem:[%s344 + $0x48] sm:$0xff] %v727
      %792 = vst [vmem:[%s344 + $0x50] sm:$0xff] %v728
      %793 = vst [vmem:[%s344 + $0x58] sm:$0xff] %v729
      %794 = vst [vmem:[%s344 + $0x60] sm:$0xff] %v730
      %795 = vst [vmem:[%s344 + $0x68] sm:$0xff] %v731
      %796 = vst [vmem:[%s344 + $0x70] sm:$0xff] %v732
      %797 = vst [vmem:[%s344 + $0x78] sm:$0xff] %v733
      %798 = vst [vmem:[%s344 + $0x80] sm:$0xff] %v734
      %799 = vst [vmem:[%s344 + $0x88] sm:$0xff] %v735
      %800 = vst [vmem:[%s344 + $0x90] sm:$0xff] %v736
      %801 = vst [vmem:[%s344 + $0x98] sm:$0xff] %v737
      %802 = vst [vmem:[%s344 + $0xa0] sm:$0xff] %v738
      %803 = vst [vmem:[%s344 + $0xa8] sm:$0xff] %v739
      %804 = vst [vmem:[%s344 + $0xb0] sm:$0xff] %v740
      %805 = vst [vmem:[%s344 + $0xb8] sm:$0xff] %v741
      %806 = vst [vmem:[%s344 + $0xc0] sm:$0xff] %v742
      %807 = vst [vmem:[%s344 + $0xc8] sm:$0xff] %v743
      %808 = vst [vmem:[%s344 + $0xd0] sm:$0xff] %v744
      %809 = vst [vmem:[%s344 + $0xd8] sm:$0xff] %v745
      %810 = vst [vmem:[%s344 + $0xe0] sm:$0xff] %v746
      %811 = vst [vmem:[%s344 + $0xe8] sm:$0xff] %v747
      %812 = vst [vmem:[%s344 + $0xf0] sm:$0xff] %v748
      %813 = vst [vmem:[%s344 + $0xf8] sm:$0xff] %v749
      %814 = vst [vmem:[%s344 + $0x100] sm:$0xff] %v750
      %815 = vst [vmem:[%s344 + $0x108] sm:$0xff] %v751
      %816 = vst [vmem:[%s344 + $0x110] sm:$0xff] %v752
      %817 = vst [vmem:[%s344 + $0x118] sm:$0xff] %v753
      %818 = vst [vmem:[%s344 + $0x120] sm:$0xff] %v754
      %819 = vst [vmem:[%s344 + $0x128] sm:$0xff] %v755
      %820 = vst [vmem:[%s344 + $0x130] sm:$0xff] %v756
      %821 = vst [vmem:[%s344 + $0x138] sm:$0xff] %v757
      %822 = vst [vmem:[%s344 + $0x140] sm:$0xff] %v758
      %823 = vst [vmem:[%s344 + $0x148] sm:$0xff] %v759
      %824 = vst [vmem:[%s344 + $0x150] sm:$0xff] %v760
      %825 = vst [vmem:[%s344 + $0x158] sm:$0xff] %v761
      %826 = vst [vmem:[%s344 + $0x160] sm:$0xff] %v762
      %827 = vst [vmem:[%s344 + $0x168] sm:$0xff] %v763
      %828 = vst [vmem:[%s344 + $0x170] sm:$0xff] %v764
      %829 = vst [vmem:[%s344 + $0x178] sm:$0xff] %v765
      %830 = vst [vmem:[%s344 + $0x180] sm:$0xff] %v766
      %831 = vst [vmem:[%s344 + $0x188] sm:$0xff] %v767
      %832 = vst [vmem:[%s344 + $0x190] sm:$0xff] %v768
      %833 = vst [vmem:[%s344 + $0x198] sm:$0xff] %v769
      %834 = vst [vmem:[%s344 + $0x1a0] sm:$0xff] %v770
      %835 = vst [vmem:[%s344 + $0x1a8] sm:$0xff] %v771
      %836 = vst [vmem:[%s344 + $0x1b0] sm:$0xff] %v772
      %837 = vst [vmem:[%s344 + $0x1b8] sm:$0xff] %v773
      %838 = vst [vmem:[%s344 + $0x1c0] sm:$0xff] %v774
      %839 = vst [vmem:[%s344 + $0x1c8] sm:$0xff] %v775
      %840 = vst [vmem:[%s344 + $0x1d0] sm:$0xff] %v776
      %841 = vst [vmem:[%s344 + $0x1d8] sm:$0xff] %v777
      %842 = vst [vmem:[%s344 + $0x1e0] sm:$0xff] %v778
      %843 = vst [vmem:[%s344 + $0x1e8] sm:$0xff] %v779
      %844 = vst [vmem:[%s344 + $0x1f0] sm:$0xff] %v780
      %845 = vst [vmem:[%s344 + $0x1f8] sm:$0xff] %v781
      %v846 = vld [vmem:[#allocation3] sm:$0x3]
      %v847 = vadd.f32 %v508, %v509
      %848 = vadd.xlane.f32.xlu0 %v847
      %v849 = vpop.xlane.xlu0 %848
      %v850 = vadd.f32 %v510, %v511
      %851 = vadd.xlane.f32.xlu0 %v850
      %v852 = vpop.xlane.xlu0 %851
      %v853 = vadd.f32 %v512, %v513
      %854 = vadd.xlane.f32.xlu0 %v853
      %v855 = vpop.xlane.xlu0 %854
      %v856 = vadd.f32 %v514, %v515
      %857 = vadd.xlane.f32.xlu0 %v856
      %v858 = vpop.xlane.xlu0 %857
      %v859 = vadd.f32 %v516, %v517
      %860 = vadd.xlane.f32.xlu0 %v859
      %v861 = vpop.xlane.xlu0 %860
      %v862 = vadd.f32 %v518, %v519
      %863 = vadd.xlane.f32.xlu0 %v862
      %v864 = vpop.xlane.xlu0 %863
      %v865 = vadd.f32 %v520, %v521
      %866 = vadd.xlane.f32.xlu0 %v865
      %v867 = vpop.xlane.xlu0 %866
      %v868 = vadd.f32 %v522, %v523
      %869 = vadd.xlane.f32.xlu0 %v868
      %v870 = vpop.xlane.xlu0 %869
      %v871 = vadd.f32 %v524, %v525
      %872 = vadd.xlane.f32.xlu0 %v871
      %v873 = vpop.xlane.xlu0 %872
      %v874 = vadd.f32 %v526, %v527
      %875 = vadd.xlane.f32.xlu0 %v874
      %v876 = vpop.xlane.xlu0 %875
      %v877 = vadd.f32 %v528, %v529
      %878 = vadd.xlane.f32.xlu0 %v877
      %v879 = vpop.xlane.xlu0 %878
      %v880 = vadd.f32 %v530, %v531
      %881 = vadd.xlane.f32.xlu0 %v880
      %v882 = vpop.xlane.xlu0 %881
      %v883 = vadd.f32 %v532, %v533
      %884 = vadd.xlane.f32.xlu0 %v883
      %v885 = vpop.xlane.xlu0 %884
      %v886 = vadd.f32 %v534, %v535
      %887 = vadd.xlane.f32.xlu0 %v886
      %v888 = vpop.xlane.xlu0 %887
      %v889 = vadd.f32 %v536, %v537
      %890 = vadd.xlane.f32.xlu0 %v889
      %v891 = vpop.xlane.xlu0 %890
      %v892 = vadd.f32 %v538, %v539
      %893 = vadd.xlane.f32.xlu0 %v892
      %v894 = vpop.xlane.xlu0 %893
      %v895 = vadd.f32 %v540, %v541
      %896 = vadd.xlane.f32.xlu0 %v895
      %v897 = vpop.xlane.xlu0 %896
      %v898 = vadd.f32 %v542, %v543
      %899 = vadd.xlane.f32.xlu0 %v898
      %v900 = vpop.xlane.xlu0 %899
      %v901 = vadd.f32 %v544, %v545
      %902 = vadd.xlane.f32.xlu0 %v901
      %v903 = vpop.xlane.xlu0 %902
      %v904 = vadd.f32 %v546, %v547
      %905 = vadd.xlane.f32.xlu0 %v904
      %v906 = vpop.xlane.xlu0 %905
      %v907 = vadd.f32 %v548, %v549
      %908 = vadd.xlane.f32.xlu0 %v907
      %v909 = vpop.xlane.xlu0 %908
      %v910 = vadd.f32 %v550, %v551
      %911 = vadd.xlane.f32.xlu0 %v910
      %v912 = vpop.xlane.xlu0 %911
      %v913 = vadd.f32 %v552, %v553
      %914 = vadd.xlane.f32.xlu0 %v913
      %v915 = vpop.xlane.xlu0 %914
      %v916 = vadd.f32 %v554, %v555
      %917 = vadd.xlane.f32.xlu0 %v916
      %v918 = vpop.xlane.xlu0 %917
      %v919 = vadd.f32 %v556, %v557
      %920 = vadd.xlane.f32.xlu0 %v919
      %v921 = vpop.xlane.xlu0 %920
      %v922 = vadd.f32 %v558, %v559
      %923 = vadd.xlane.f32.xlu0 %v922
      %v924 = vpop.xlane.xlu0 %923
      %v925 = vadd.f32 %v560, %v561
      %926 = vadd.xlane.f32.xlu0 %v925
      %v927 = vpop.xlane.xlu0 %926
      %v928 = vadd.f32 %v562, %v563
      %929 = vadd.xlane.f32.xlu0 %v928
      %v930 = vpop.xlane.xlu0 %929
      %v931 = vadd.f32 %v564, %v565
      %932 = vadd.xlane.f32.xlu0 %v931
      %v933 = vpop.xlane.xlu0 %932
      %v934 = vadd.f32 %v566, %v567
      %935 = vadd.xlane.f32.xlu0 %v934
      %v936 = vpop.xlane.xlu0 %935
      %v937 = vadd.f32 %v568, %v569
      %938 = vadd.xlane.f32.xlu0 %v937
      %v939 = vpop.xlane.xlu0 %938
      %v940 = vadd.f32 %v570, %v571
      %941 = vadd.xlane.f32.xlu0 %v940
      %v942 = vpop.xlane.xlu0 %941
      %v975 = vlaneseq
      %v976 = vshrl.u32 %v975, 7
      %v977 = vsub.s32 0, %v976
      %v978 = vrot.slane %v849, %v977
      %v979 = vlaneseq
      %v980 = vshrl.u32 %v979, 7
      %v981 = vsub.s32 1, %v980
      %v982 = vrot.slane %v849, %v981
      %v983 = vlaneseq
      %v984 = vshrl.u32 %v983, 7
      %v985 = vsub.s32 2, %v984
      %v986 = vrot.slane %v849, %v985
      %v987 = vlaneseq
      %v988 = vshrl.u32 %v987, 7
      %v989 = vsub.s32 3, %v988
      %v990 = vrot.slane %v849, %v989
      %v991 = vlaneseq
      %v992 = vshrl.u32 %v991, 7
      %v993 = vsub.s32 4, %v992
      %v994 = vrot.slane %v849, %v993
      %v995 = vlaneseq
      %v996 = vshrl.u32 %v995, 7
      %v997 = vsub.s32 5, %v996
      %v998 = vrot.slane %v849, %v997
      %v999 = vlaneseq
      %v1000 = vshrl.u32 %v999, 7
      %v1001 = vsub.s32 6, %v1000
      %v1002 = vrot.slane %v849, %v1001
      %v1003 = vlaneseq
      %v1004 = vshrl.u32 %v1003, 7
      %v1005 = vsub.s32 7, %v1004
      %v1006 = vrot.slane %v849, %v1005
      %v1007 = vlaneseq
      %v1008 = vshrl.u32 %v1007, 7
      %v1009 = vsub.s32 0, %v1008
      %v1010 = vrot.slane %v852, %v1009
      %v1011 = vlaneseq
      %v1012 = vshrl.u32 %v1011, 7
      %v1013 = vsub.s32 1, %v1012
      %v1014 = vrot.slane %v852, %v1013
      %v1015 = vlaneseq
      %v1016 = vshrl.u32 %v1015, 7
      %v1017 = vsub.s32 2, %v1016
      %v1018 = vrot.slane %v852, %v1017
      %v1019 = vlaneseq
      %v1020 = vshrl.u32 %v1019, 7
      %v1021 = vsub.s32 3, %v1020
      %v1022 = vrot.slane %v852, %v1021
      %v1023 = vlaneseq
      %v1024 = vshrl.u32 %v1023, 7
      %v1025 = vsub.s32 4, %v1024
      %v1026 = vrot.slane %v852, %v1025
      %v1027 = vlaneseq
      %v1028 = vshrl.u32 %v1027, 7
      %v1029 = vsub.s32 5, %v1028
      %v1030 = vrot.slane %v852, %v1029
      %v1031 = vlaneseq
      %v1032 = vshrl.u32 %v1031, 7
      %v1033 = vsub.s32 6, %v1032
      %v1034 = vrot.slane %v852, %v1033
      %v1035 = vlaneseq
      %v1036 = vshrl.u32 %v1035, 7
      %v1037 = vsub.s32 7, %v1036
      %v1038 = vrot.slane %v852, %v1037
      %v1039 = vlaneseq
      %v1040 = vshrl.u32 %v1039, 7
      %v1041 = vsub.s32 0, %v1040
      %v1042 = vrot.slane %v855, %v1041
      %v1043 = vlaneseq
      %v1044 = vshrl.u32 %v1043, 7
      %v1045 = vsub.s32 1, %v1044
      %v1046 = vrot.slane %v855, %v1045
      %v1047 = vlaneseq
      %v1048 = vshrl.u32 %v1047, 7
      %v1049 = vsub.s32 2, %v1048
      %v1050 = vrot.slane %v855, %v1049
      %v1051 = vlaneseq
      %v1052 = vshrl.u32 %v1051, 7
      %v1053 = vsub.s32 3, %v1052
      %v1054 = vrot.slane %v855, %v1053
      %v1055 = vlaneseq
      %v1056 = vshrl.u32 %v1055, 7
      %v1057 = vsub.s32 4, %v1056
      %v1058 = vrot.slane %v855, %v1057
      %v1059 = vlaneseq
      %v1060 = vshrl.u32 %v1059, 7
      %v1061 = vsub.s32 5, %v1060
      %v1062 = vrot.slane %v855, %v1061
      %v1063 = vlaneseq
      %v1064 = vshrl.u32 %v1063, 7
      %v1065 = vsub.s32 6, %v1064
      %v1066 = vrot.slane %v855, %v1065
      %v1067 = vlaneseq
      %v1068 = vshrl.u32 %v1067, 7
      %v1069 = vsub.s32 7, %v1068
      %v1070 = vrot.slane %v855, %v1069
      %v1071 = vlaneseq
      %v1072 = vshrl.u32 %v1071, 7
      %v1073 = vsub.s32 0, %v1072
      %v1074 = vrot.slane %v858, %v1073
      %v1075 = vlaneseq
      %v1076 = vshrl.u32 %v1075, 7
      %v1077 = vsub.s32 1, %v1076
      %v1078 = vrot.slane %v858, %v1077
      %v1079 = vlaneseq
      %v1080 = vshrl.u32 %v1079, 7
      %v1081 = vsub.s32 2, %v1080
      %v1082 = vrot.slane %v858, %v1081
      %v1083 = vlaneseq
      %v1084 = vshrl.u32 %v1083, 7
      %v1085 = vsub.s32 3, %v1084
      %v1086 = vrot.slane %v858, %v1085
      %v1087 = vlaneseq
      %v1088 = vshrl.u32 %v1087, 7
      %v1089 = vsub.s32 4, %v1088
      %v1090 = vrot.slane %v858, %v1089
      %v1091 = vlaneseq
      %v1092 = vshrl.u32 %v1091, 7
      %v1093 = vsub.s32 5, %v1092
      %v1094 = vrot.slane %v858, %v1093
      %v1095 = vlaneseq
      %v1096 = vshrl.u32 %v1095, 7
      %v1097 = vsub.s32 6, %v1096
      %v1098 = vrot.slane %v858, %v1097
      %v1099 = vlaneseq
      %v1100 = vshrl.u32 %v1099, 7
      %v1101 = vsub.s32 7, %v1100
      %v1102 = vrot.slane %v858, %v1101
      %v1103 = vlaneseq
      %v1104 = vshrl.u32 %v1103, 7
      %v1105 = vsub.s32 0, %v1104
      %v1106 = vrot.slane %v861, %v1105
      %v1107 = vlaneseq
      %v1108 = vshrl.u32 %v1107, 7
      %v1109 = vsub.s32 1, %v1108
      %v1110 = vrot.slane %v861, %v1109
      %v1111 = vlaneseq
      %v1112 = vshrl.u32 %v1111, 7
      %v1113 = vsub.s32 2, %v1112
      %v1114 = vrot.slane %v861, %v1113
      %v1115 = vlaneseq
      %v1116 = vshrl.u32 %v1115, 7
      %v1117 = vsub.s32 3, %v1116
      %v1118 = vrot.slane %v861, %v1117
      %v1119 = vlaneseq
      %v1120 = vshrl.u32 %v1119, 7
      %v1121 = vsub.s32 4, %v1120
      %v1122 = vrot.slane %v861, %v1121
      %v1123 = vlaneseq
      %v1124 = vshrl.u32 %v1123, 7
      %v1125 = vsub.s32 5, %v1124
      %v1126 = vrot.slane %v861, %v1125
      %v1127 = vlaneseq
      %v1128 = vshrl.u32 %v1127, 7
      %v1129 = vsub.s32 6, %v1128
      %v1130 = vrot.slane %v861, %v1129
      %v1131 = vlaneseq
      %v1132 = vshrl.u32 %v1131, 7
      %v1133 = vsub.s32 7, %v1132
      %v1134 = vrot.slane %v861, %v1133
      %v1135 = vlaneseq
      %v1136 = vshrl.u32 %v1135, 7
      %v1137 = vsub.s32 0, %v1136
      %v1138 = vrot.slane %v864, %v1137
      %v1139 = vlaneseq
      %v1140 = vshrl.u32 %v1139, 7
      %v1141 = vsub.s32 1, %v1140
      %v1142 = vrot.slane %v864, %v1141
      %v1143 = vlaneseq
      %v1144 = vshrl.u32 %v1143, 7
      %v1145 = vsub.s32 2, %v1144
      %v1146 = vrot.slane %v864, %v1145
      %v1147 = vlaneseq
      %v1148 = vshrl.u32 %v1147, 7
      %v1149 = vsub.s32 3, %v1148
      %v1150 = vrot.slane %v864, %v1149
      %v1151 = vlaneseq
      %v1152 = vshrl.u32 %v1151, 7
      %v1153 = vsub.s32 4, %v1152
      %v1154 = vrot.slane %v864, %v1153
      %v1155 = vlaneseq
      %v1156 = vshrl.u32 %v1155, 7
      %v1157 = vsub.s32 5, %v1156
      %v1158 = vrot.slane %v864, %v1157
      %v1159 = vlaneseq
      %v1160 = vshrl.u32 %v1159, 7
      %v1161 = vsub.s32 6, %v1160
      %v1162 = vrot.slane %v864, %v1161
      %v1163 = vlaneseq
      %v1164 = vshrl.u32 %v1163, 7
      %v1165 = vsub.s32 7, %v1164
      %v1166 = vrot.slane %v864, %v1165
      %v1167 = vlaneseq
      %v1168 = vshrl.u32 %v1167, 7
      %v1169 = vsub.s32 0, %v1168
      %v1170 = vrot.slane %v867, %v1169
      %v1171 = vlaneseq
      %v1172 = vshrl.u32 %v1171, 7
      %v1173 = vsub.s32 1, %v1172
      %v1174 = vrot.slane %v867, %v1173
      %v1175 = vlaneseq
      %v1176 = vshrl.u32 %v1175, 7
      %v1177 = vsub.s32 2, %v1176
      %v1178 = vrot.slane %v867, %v1177
      %v1179 = vlaneseq
      %v1180 = vshrl.u32 %v1179, 7
      %v1181 = vsub.s32 3, %v1180
      %v1182 = vrot.slane %v867, %v1181
      %v1183 = vlaneseq
      %v1184 = vshrl.u32 %v1183, 7
      %v1185 = vsub.s32 4, %v1184
      %v1186 = vrot.slane %v867, %v1185
      %v1187 = vlaneseq
      %v1188 = vshrl.u32 %v1187, 7
      %v1189 = vsub.s32 5, %v1188
      %v1190 = vrot.slane %v867, %v1189
      %v1191 = vlaneseq
      %v1192 = vshrl.u32 %v1191, 7
      %v1193 = vsub.s32 6, %v1192
      %v1194 = vrot.slane %v867, %v1193
      %v1195 = vlaneseq
      %v1196 = vshrl.u32 %v1195, 7
      %v1197 = vsub.s32 7, %v1196
      %v1198 = vrot.slane %v867, %v1197
      %v1199 = vlaneseq
      %v1200 = vshrl.u32 %v1199, 7
      %v1201 = vsub.s32 0, %v1200
      %v1202 = vrot.slane %v870, %v1201
      %v1203 = vlaneseq
      %v1204 = vshrl.u32 %v1203, 7
      %v1205 = vsub.s32 1, %v1204
      %v1206 = vrot.slane %v870, %v1205
      %v1207 = vlaneseq
      %v1208 = vshrl.u32 %v1207, 7
      %v1209 = vsub.s32 2, %v1208
      %v1210 = vrot.slane %v870, %v1209
      %v1211 = vlaneseq
      %v1212 = vshrl.u32 %v1211, 7
      %v1213 = vsub.s32 3, %v1212
      %v1214 = vrot.slane %v870, %v1213
      %v1215 = vlaneseq
      %v1216 = vshrl.u32 %v1215, 7
      %v1217 = vsub.s32 4, %v1216
      %v1218 = vrot.slane %v870, %v1217
      %v1219 = vlaneseq
      %v1220 = vshrl.u32 %v1219, 7
      %v1221 = vsub.s32 5, %v1220
      %v1222 = vrot.slane %v870, %v1221
      %v1223 = vlaneseq
      %v1224 = vshrl.u32 %v1223, 7
      %v1225 = vsub.s32 6, %v1224
      %v1226 = vrot.slane %v870, %v1225
      %v1227 = vlaneseq
      %v1228 = vshrl.u32 %v1227, 7
      %v1229 = vsub.s32 7, %v1228
      %v1230 = vrot.slane %v870, %v1229
      %v1231 = vlaneseq
      %v1232 = vshrl.u32 %v1231, 7
      %v1233 = vsub.s32 0, %v1232
      %v1234 = vrot.slane %v873, %v1233
      %v1235 = vlaneseq
      %v1236 = vshrl.u32 %v1235, 7
      %v1237 = vsub.s32 1, %v1236
      %v1238 = vrot.slane %v873, %v1237
      %v1239 = vlaneseq
      %v1240 = vshrl.u32 %v1239, 7
      %v1241 = vsub.s32 2, %v1240
      %v1242 = vrot.slane %v873, %v1241
      %v1243 = vlaneseq
      %v1244 = vshrl.u32 %v1243, 7
      %v1245 = vsub.s32 3, %v1244
      %v1246 = vrot.slane %v873, %v1245
      %v1247 = vlaneseq
      %v1248 = vshrl.u32 %v1247, 7
      %v1249 = vsub.s32 4, %v1248
      %v1250 = vrot.slane %v873, %v1249
      %v1251 = vlaneseq
      %v1252 = vshrl.u32 %v1251, 7
      %v1253 = vsub.s32 5, %v1252
      %v1254 = vrot.slane %v873, %v1253
      %v1255 = vlaneseq
      %v1256 = vshrl.u32 %v1255, 7
      %v1257 = vsub.s32 6, %v1256
      %v1258 = vrot.slane %v873, %v1257
      %v1259 = vlaneseq
      %v1260 = vshrl.u32 %v1259, 7
      %v1261 = vsub.s32 7, %v1260
      %v1262 = vrot.slane %v873, %v1261
      %v1263 = vlaneseq
      %v1264 = vshrl.u32 %v1263, 7
      %v1265 = vsub.s32 0, %v1264
      %v1266 = vrot.slane %v876, %v1265
      %v1267 = vlaneseq
      %v1268 = vshrl.u32 %v1267, 7
      %v1269 = vsub.s32 1, %v1268
      %v1270 = vrot.slane %v876, %v1269
      %v1271 = vlaneseq
      %v1272 = vshrl.u32 %v1271, 7
      %v1273 = vsub.s32 2, %v1272
      %v1274 = vrot.slane %v876, %v1273
      %v1275 = vlaneseq
      %v1276 = vshrl.u32 %v1275, 7
      %v1277 = vsub.s32 3, %v1276
      %v1278 = vrot.slane %v876, %v1277
      %v1279 = vlaneseq
      %v1280 = vshrl.u32 %v1279, 7
      %v1281 = vsub.s32 4, %v1280
      %v1282 = vrot.slane %v876, %v1281
      %v1283 = vlaneseq
      %v1284 = vshrl.u32 %v1283, 7
      %v1285 = vsub.s32 5, %v1284
      %v1286 = vrot.slane %v876, %v1285
      %v1287 = vlaneseq
      %v1288 = vshrl.u32 %v1287, 7
      %v1289 = vsub.s32 6, %v1288
      %v1290 = vrot.slane %v876, %v1289
      %v1291 = vlaneseq
      %v1292 = vshrl.u32 %v1291, 7
      %v1293 = vsub.s32 7, %v1292
      %v1294 = vrot.slane %v876, %v1293
      %v1295 = vlaneseq
      %v1296 = vshrl.u32 %v1295, 7
      %v1297 = vsub.s32 0, %v1296
      %v1298 = vrot.slane %v879, %v1297
      %v1299 = vlaneseq
      %v1300 = vshrl.u32 %v1299, 7
      %v1301 = vsub.s32 1, %v1300
      %v1302 = vrot.slane %v879, %v1301
      %v1303 = vlaneseq
      %v1304 = vshrl.u32 %v1303, 7
      %v1305 = vsub.s32 2, %v1304
      %v1306 = vrot.slane %v879, %v1305
      %v1307 = vlaneseq
      %v1308 = vshrl.u32 %v1307, 7
      %v1309 = vsub.s32 3, %v1308
      %v1310 = vrot.slane %v879, %v1309
      %v1311 = vlaneseq
      %v1312 = vshrl.u32 %v1311, 7
      %v1313 = vsub.s32 4, %v1312
      %v1314 = vrot.slane %v879, %v1313
      %v1315 = vlaneseq
      %v1316 = vshrl.u32 %v1315, 7
      %v1317 = vsub.s32 5, %v1316
      %v1318 = vrot.slane %v879, %v1317
      %v1319 = vlaneseq
      %v1320 = vshrl.u32 %v1319, 7
      %v1321 = vsub.s32 6, %v1320
      %v1322 = vrot.slane %v879, %v1321
      %v1323 = vlaneseq
      %v1324 = vshrl.u32 %v1323, 7
      %v1325 = vsub.s32 7, %v1324
      %v1326 = vrot.slane %v879, %v1325
      %v1327 = vlaneseq
      %v1328 = vshrl.u32 %v1327, 7
      %v1329 = vsub.s32 0, %v1328
      %v1330 = vrot.slane %v882, %v1329
      %v1331 = vlaneseq
      %v1332 = vshrl.u32 %v1331, 7
      %v1333 = vsub.s32 1, %v1332
      %v1334 = vrot.slane %v882, %v1333
      %v1335 = vlaneseq
      %v1336 = vshrl.u32 %v1335, 7
      %v1337 = vsub.s32 2, %v1336
      %v1338 = vrot.slane %v882, %v1337
      %v1339 = vlaneseq
      %v1340 = vshrl.u32 %v1339, 7
      %v1341 = vsub.s32 3, %v1340
      %v1342 = vrot.slane %v882, %v1341
      %v1343 = vlaneseq
      %v1344 = vshrl.u32 %v1343, 7
      %v1345 = vsub.s32 4, %v1344
      %v1346 = vrot.slane %v882, %v1345
      %v1347 = vlaneseq
      %v1348 = vshrl.u32 %v1347, 7
      %v1349 = vsub.s32 5, %v1348
      %v1350 = vrot.slane %v882, %v1349
      %v1351 = vlaneseq
      %v1352 = vshrl.u32 %v1351, 7
      %v1353 = vsub.s32 6, %v1352
      %v1354 = vrot.slane %v882, %v1353
      %v1355 = vlaneseq
      %v1356 = vshrl.u32 %v1355, 7
      %v1357 = vsub.s32 7, %v1356
      %v1358 = vrot.slane %v882, %v1357
      %v1359 = vlaneseq
      %v1360 = vshrl.u32 %v1359, 7
      %v1361 = vsub.s32 0, %v1360
      %v1362 = vrot.slane %v885, %v1361
      %v1363 = vlaneseq
      %v1364 = vshrl.u32 %v1363, 7
      %v1365 = vsub.s32 1, %v1364
      %v1366 = vrot.slane %v885, %v1365
      %v1367 = vlaneseq
      %v1368 = vshrl.u32 %v1367, 7
      %v1369 = vsub.s32 2, %v1368
      %v1370 = vrot.slane %v885, %v1369
      %v1371 = vlaneseq
      %v1372 = vshrl.u32 %v1371, 7
      %v1373 = vsub.s32 3, %v1372
      %v1374 = vrot.slane %v885, %v1373
      %v1375 = vlaneseq
      %v1376 = vshrl.u32 %v1375, 7
      %v1377 = vsub.s32 4, %v1376
      %v1378 = vrot.slane %v885, %v1377
      %v1379 = vlaneseq
      %v1380 = vshrl.u32 %v1379, 7
      %v1381 = vsub.s32 5, %v1380
      %v1382 = vrot.slane %v885, %v1381
      %v1383 = vlaneseq
      %v1384 = vshrl.u32 %v1383, 7
      %v1385 = vsub.s32 6, %v1384
      %v1386 = vrot.slane %v885, %v1385
      %v1387 = vlaneseq
      %v1388 = vshrl.u32 %v1387, 7
      %v1389 = vsub.s32 7, %v1388
      %v1390 = vrot.slane %v885, %v1389
      %v1391 = vlaneseq
      %v1392 = vshrl.u32 %v1391, 7
      %v1393 = vsub.s32 0, %v1392
      %v1394 = vrot.slane %v888, %v1393
      %v1395 = vlaneseq
      %v1396 = vshrl.u32 %v1395, 7
      %v1397 = vsub.s32 1, %v1396
      %v1398 = vrot.slane %v888, %v1397
      %v1399 = vlaneseq
      %v1400 = vshrl.u32 %v1399, 7
      %v1401 = vsub.s32 2, %v1400
      %v1402 = vrot.slane %v888, %v1401
      %v1403 = vlaneseq
      %v1404 = vshrl.u32 %v1403, 7
      %v1405 = vsub.s32 3, %v1404
      %v1406 = vrot.slane %v888, %v1405
      %v1407 = vlaneseq
      %v1408 = vshrl.u32 %v1407, 7
      %v1409 = vsub.s32 4, %v1408
      %v1410 = vrot.slane %v888, %v1409
      %v1411 = vlaneseq
      %v1412 = vshrl.u32 %v1411, 7
      %v1413 = vsub.s32 5, %v1412
      %v1414 = vrot.slane %v888, %v1413
      %v1415 = vlaneseq
      %v1416 = vshrl.u32 %v1415, 7
      %v1417 = vsub.s32 6, %v1416
      %v1418 = vrot.slane %v888, %v1417
      %v1419 = vlaneseq
      %v1420 = vshrl.u32 %v1419, 7
      %v1421 = vsub.s32 7, %v1420
      %v1422 = vrot.slane %v888, %v1421
      %v1423 = vlaneseq
      %v1424 = vshrl.u32 %v1423, 7
      %v1425 = vsub.s32 0, %v1424
      %v1426 = vrot.slane %v891, %v1425
      %v1427 = vlaneseq
      %v1428 = vshrl.u32 %v1427, 7
      %v1429 = vsub.s32 1, %v1428
      %v1430 = vrot.slane %v891, %v1429
      %v1431 = vlaneseq
      %v1432 = vshrl.u32 %v1431, 7
      %v1433 = vsub.s32 2, %v1432
      %v1434 = vrot.slane %v891, %v1433
      %v1435 = vlaneseq
      %v1436 = vshrl.u32 %v1435, 7
      %v1437 = vsub.s32 3, %v1436
      %v1438 = vrot.slane %v891, %v1437
      %v1439 = vlaneseq
      %v1440 = vshrl.u32 %v1439, 7
      %v1441 = vsub.s32 4, %v1440
      %v1442 = vrot.slane %v891, %v1441
      %v1443 = vlaneseq
      %v1444 = vshrl.u32 %v1443, 7
      %v1445 = vsub.s32 5, %v1444
      %v1446 = vrot.slane %v891, %v1445
      %v1447 = vlaneseq
      %v1448 = vshrl.u32 %v1447, 7
      %v1449 = vsub.s32 6, %v1448
      %v1450 = vrot.slane %v891, %v1449
      %v1451 = vlaneseq
      %v1452 = vshrl.u32 %v1451, 7
      %v1453 = vsub.s32 7, %v1452
      %v1454 = vrot.slane %v891, %v1453
      %v1455 = vlaneseq
      %v1456 = vshrl.u32 %v1455, 7
      %v1457 = vsub.s32 0, %v1456
      %v1458 = vrot.slane %v894, %v1457
      %v1459 = vlaneseq
      %v1460 = vshrl.u32 %v1459, 7
      %v1461 = vsub.s32 1, %v1460
      %v1462 = vrot.slane %v894, %v1461
      %v1463 = vlaneseq
      %v1464 = vshrl.u32 %v1463, 7
      %v1465 = vsub.s32 2, %v1464
      %v1466 = vrot.slane %v894, %v1465
      %v1467 = vlaneseq
      %v1468 = vshrl.u32 %v1467, 7
      %v1469 = vsub.s32 3, %v1468
      %v1470 = vrot.slane %v894, %v1469
      %v1471 = vlaneseq
      %v1472 = vshrl.u32 %v1471, 7
      %v1473 = vsub.s32 4, %v1472
      %v1474 = vrot.slane %v894, %v1473
      %v1475 = vlaneseq
      %v1476 = vshrl.u32 %v1475, 7
      %v1477 = vsub.s32 5, %v1476
      %v1478 = vrot.slane %v894, %v1477
      %v1479 = vlaneseq
      %v1480 = vshrl.u32 %v1479, 7
      %v1481 = vsub.s32 6, %v1480
      %v1482 = vrot.slane %v894, %v1481
      %v1483 = vlaneseq
      %v1484 = vshrl.u32 %v1483, 7
      %v1485 = vsub.s32 7, %v1484
      %v1486 = vrot.slane %v894, %v1485
      %v1487 = vlaneseq
      %v1488 = vshrl.u32 %v1487, 7
      %v1489 = vsub.s32 0, %v1488
      %v1490 = vrot.slane %v897, %v1489
      %v1491 = vlaneseq
      %v1492 = vshrl.u32 %v1491, 7
      %v1493 = vsub.s32 1, %v1492
      %v1494 = vrot.slane %v897, %v1493
      %v1495 = vlaneseq
      %v1496 = vshrl.u32 %v1495, 7
      %v1497 = vsub.s32 2, %v1496
      %v1498 = vrot.slane %v897, %v1497
      %v1499 = vlaneseq
      %v1500 = vshrl.u32 %v1499, 7
      %v1501 = vsub.s32 3, %v1500
      %v1502 = vrot.slane %v897, %v1501
      %v1503 = vlaneseq
      %v1504 = vshrl.u32 %v1503, 7
      %v1505 = vsub.s32 4, %v1504
      %v1506 = vrot.slane %v897, %v1505
      %v1507 = vlaneseq
      %v1508 = vshrl.u32 %v1507, 7
      %v1509 = vsub.s32 5, %v1508
      %v1510 = vrot.slane %v897, %v1509
      %v1511 = vlaneseq
      %v1512 = vshrl.u32 %v1511, 7
      %v1513 = vsub.s32 6, %v1512
      %v1514 = vrot.slane %v897, %v1513
      %v1515 = vlaneseq
      %v1516 = vshrl.u32 %v1515, 7
      %v1517 = vsub.s32 7, %v1516
      %v1518 = vrot.slane %v897, %v1517
      %v1519 = vlaneseq
      %v1520 = vshrl.u32 %v1519, 7
      %v1521 = vsub.s32 0, %v1520
      %v1522 = vrot.slane %v900, %v1521
      %v1523 = vlaneseq
      %v1524 = vshrl.u32 %v1523, 7
      %v1525 = vsub.s32 1, %v1524
      %v1526 = vrot.slane %v900, %v1525
      %v1527 = vlaneseq
      %v1528 = vshrl.u32 %v1527, 7
      %v1529 = vsub.s32 2, %v1528
      %v1530 = vrot.slane %v900, %v1529
      %v1531 = vlaneseq
      %v1532 = vshrl.u32 %v1531, 7
      %v1533 = vsub.s32 3, %v1532
      %v1534 = vrot.slane %v900, %v1533
      %v1535 = vlaneseq
      %v1536 = vshrl.u32 %v1535, 7
      %v1537 = vsub.s32 4, %v1536
      %v1538 = vrot.slane %v900, %v1537
      %v1539 = vlaneseq
      %v1540 = vshrl.u32 %v1539, 7
      %v1541 = vsub.s32 5, %v1540
      %v1542 = vrot.slane %v900, %v1541
      %v1543 = vlaneseq
      %v1544 = vshrl.u32 %v1543, 7
      %v1545 = vsub.s32 6, %v1544
      %v1546 = vrot.slane %v900, %v1545
      %v1547 = vlaneseq
      %v1548 = vshrl.u32 %v1547, 7
      %v1549 = vsub.s32 7, %v1548
      %v1550 = vrot.slane %v900, %v1549
      %v1551 = vlaneseq
      %v1552 = vshrl.u32 %v1551, 7
      %v1553 = vsub.s32 0, %v1552
      %v1554 = vrot.slane %v903, %v1553
      %v1555 = vlaneseq
      %v1556 = vshrl.u32 %v1555, 7
      %v1557 = vsub.s32 1, %v1556
      %v1558 = vrot.slane %v903, %v1557
      %v1559 = vlaneseq
      %v1560 = vshrl.u32 %v1559, 7
      %v1561 = vsub.s32 2, %v1560
      %v1562 = vrot.slane %v903, %v1561
      %v1563 = vlaneseq
      %v1564 = vshrl.u32 %v1563, 7
      %v1565 = vsub.s32 3, %v1564
      %v1566 = vrot.slane %v903, %v1565
      %v1567 = vlaneseq
      %v1568 = vshrl.u32 %v1567, 7
      %v1569 = vsub.s32 4, %v1568
      %v1570 = vrot.slane %v903, %v1569
      %v1571 = vlaneseq
      %v1572 = vshrl.u32 %v1571, 7
      %v1573 = vsub.s32 5, %v1572
      %v1574 = vrot.slane %v903, %v1573
      %v1575 = vlaneseq
      %v1576 = vshrl.u32 %v1575, 7
      %v1577 = vsub.s32 6, %v1576
      %v1578 = vrot.slane %v903, %v1577
      %v1579 = vlaneseq
      %v1580 = vshrl.u32 %v1579, 7
      %v1581 = vsub.s32 7, %v1580
      %v1582 = vrot.slane %v903, %v1581
      %v1583 = vlaneseq
      %v1584 = vshrl.u32 %v1583, 7
      %v1585 = vsub.s32 0, %v1584
      %v1586 = vrot.slane %v906, %v1585
      %v1587 = vlaneseq
      %v1588 = vshrl.u32 %v1587, 7
      %v1589 = vsub.s32 1, %v1588
      %v1590 = vrot.slane %v906, %v1589
      %v1591 = vlaneseq
      %v1592 = vshrl.u32 %v1591, 7
      %v1593 = vsub.s32 2, %v1592
      %v1594 = vrot.slane %v906, %v1593
      %v1595 = vlaneseq
      %v1596 = vshrl.u32 %v1595, 7
      %v1597 = vsub.s32 3, %v1596
      %v1598 = vrot.slane %v906, %v1597
      %v1599 = vlaneseq
      %v1600 = vshrl.u32 %v1599, 7
      %v1601 = vsub.s32 4, %v1600
      %v1602 = vrot.slane %v906, %v1601
      %v1603 = vlaneseq
      %v1604 = vshrl.u32 %v1603, 7
      %v1605 = vsub.s32 5, %v1604
      %v1606 = vrot.slane %v906, %v1605
      %v1607 = vlaneseq
      %v1608 = vshrl.u32 %v1607, 7
      %v1609 = vsub.s32 6, %v1608
      %v1610 = vrot.slane %v906, %v1609
      %v1611 = vlaneseq
      %v1612 = vshrl.u32 %v1611, 7
      %v1613 = vsub.s32 7, %v1612
      %v1614 = vrot.slane %v906, %v1613
      %v1615 = vlaneseq
      %v1616 = vshrl.u32 %v1615, 7
      %v1617 = vsub.s32 0, %v1616
      %v1618 = vrot.slane %v909, %v1617
      %v1619 = vlaneseq
      %v1620 = vshrl.u32 %v1619, 7
      %v1621 = vsub.s32 1, %v1620
      %v1622 = vrot.slane %v909, %v1621
      %v1623 = vlaneseq
      %v1624 = vshrl.u32 %v1623, 7
      %v1625 = vsub.s32 2, %v1624
      %v1626 = vrot.slane %v909, %v1625
      %v1627 = vlaneseq
      %v1628 = vshrl.u32 %v1627, 7
      %v1629 = vsub.s32 3, %v1628
      %v1630 = vrot.slane %v909, %v1629
      %v1631 = vlaneseq
      %v1632 = vshrl.u32 %v1631, 7
      %v1633 = vsub.s32 4, %v1632
      %v1634 = vrot.slane %v909, %v1633
      %v1635 = vlaneseq
      %v1636 = vshrl.u32 %v1635, 7
      %v1637 = vsub.s32 5, %v1636
      %v1638 = vrot.slane %v909, %v1637
      %v1639 = vlaneseq
      %v1640 = vshrl.u32 %v1639, 7
      %v1641 = vsub.s32 6, %v1640
      %v1642 = vrot.slane %v909, %v1641
      %v1643 = vlaneseq
      %v1644 = vshrl.u32 %v1643, 7
      %v1645 = vsub.s32 7, %v1644
      %v1646 = vrot.slane %v909, %v1645
      %v1647 = vlaneseq
      %v1648 = vshrl.u32 %v1647, 7
      %v1649 = vsub.s32 0, %v1648
      %v1650 = vrot.slane %v912, %v1649
      %v1651 = vlaneseq
      %v1652 = vshrl.u32 %v1651, 7
      %v1653 = vsub.s32 1, %v1652
      %v1654 = vrot.slane %v912, %v1653
      %v1655 = vlaneseq
      %v1656 = vshrl.u32 %v1655, 7
      %v1657 = vsub.s32 2, %v1656
      %v1658 = vrot.slane %v912, %v1657
      %v1659 = vlaneseq
      %v1660 = vshrl.u32 %v1659, 7
      %v1661 = vsub.s32 3, %v1660
      %v1662 = vrot.slane %v912, %v1661
      %v1663 = vlaneseq
      %v1664 = vshrl.u32 %v1663, 7
      %v1665 = vsub.s32 4, %v1664
      %v1666 = vrot.slane %v912, %v1665
      %v1667 = vlaneseq
      %v1668 = vshrl.u32 %v1667, 7
      %v1669 = vsub.s32 5, %v1668
      %v1670 = vrot.slane %v912, %v1669
      %v1671 = vlaneseq
      %v1672 = vshrl.u32 %v1671, 7
      %v1673 = vsub.s32 6, %v1672
      %v1674 = vrot.slane %v912, %v1673
      %v1675 = vlaneseq
      %v1676 = vshrl.u32 %v1675, 7
      %v1677 = vsub.s32 7, %v1676
      %v1678 = vrot.slane %v912, %v1677
      %v1679 = vlaneseq
      %v1680 = vshrl.u32 %v1679, 7
      %v1681 = vsub.s32 0, %v1680
      %v1682 = vrot.slane %v915, %v1681
      %v1683 = vlaneseq
      %v1684 = vshrl.u32 %v1683, 7
      %v1685 = vsub.s32 1, %v1684
      %v1686 = vrot.slane %v915, %v1685
      %v1687 = vlaneseq
      %v1688 = vshrl.u32 %v1687, 7
      %v1689 = vsub.s32 2, %v1688
      %v1690 = vrot.slane %v915, %v1689
      %v1691 = vlaneseq
      %v1692 = vshrl.u32 %v1691, 7
      %v1693 = vsub.s32 3, %v1692
      %v1694 = vrot.slane %v915, %v1693
      %v1695 = vlaneseq
      %v1696 = vshrl.u32 %v1695, 7
      %v1697 = vsub.s32 4, %v1696
      %v1698 = vrot.slane %v915, %v1697
      %v1699 = vlaneseq
      %v1700 = vshrl.u32 %v1699, 7
      %v1701 = vsub.s32 5, %v1700
      %v1702 = vrot.slane %v915, %v1701
      %v1703 = vlaneseq
      %v1704 = vshrl.u32 %v1703, 7
      %v1705 = vsub.s32 6, %v1704
      %v1706 = vrot.slane %v915, %v1705
      %v1707 = vlaneseq
      %v1708 = vshrl.u32 %v1707, 7
      %v1709 = vsub.s32 7, %v1708
      %v1710 = vrot.slane %v915, %v1709
      %v1711 = vlaneseq
      %v1712 = vshrl.u32 %v1711, 7
      %v1713 = vsub.s32 0, %v1712
      %v1714 = vrot.slane %v918, %v1713
      %v1715 = vlaneseq
      %v1716 = vshrl.u32 %v1715, 7
      %v1717 = vsub.s32 1, %v1716
      %v1718 = vrot.slane %v918, %v1717
      %v1719 = vlaneseq
      %v1720 = vshrl.u32 %v1719, 7
      %v1721 = vsub.s32 2, %v1720
      %v1722 = vrot.slane %v918, %v1721
      %v1723 = vlaneseq
      %v1724 = vshrl.u32 %v1723, 7
      %v1725 = vsub.s32 3, %v1724
      %v1726 = vrot.slane %v918, %v1725
      %v1727 = vlaneseq
      %v1728 = vshrl.u32 %v1727, 7
      %v1729 = vsub.s32 4, %v1728
      %v1730 = vrot.slane %v918, %v1729
      %v1731 = vlaneseq
      %v1732 = vshrl.u32 %v1731, 7
      %v1733 = vsub.s32 5, %v1732
      %v1734 = vrot.slane %v918, %v1733
      %v1735 = vlaneseq
      %v1736 = vshrl.u32 %v1735, 7
      %v1737 = vsub.s32 6, %v1736
      %v1738 = vrot.slane %v918, %v1737
      %v1739 = vlaneseq
      %v1740 = vshrl.u32 %v1739, 7
      %v1741 = vsub.s32 7, %v1740
      %v1742 = vrot.slane %v918, %v1741
      %v1743 = vlaneseq
      %v1744 = vshrl.u32 %v1743, 7
      %v1745 = vsub.s32 0, %v1744
      %v1746 = vrot.slane %v921, %v1745
      %v1747 = vlaneseq
      %v1748 = vshrl.u32 %v1747, 7
      %v1749 = vsub.s32 1, %v1748
      %v1750 = vrot.slane %v921, %v1749
      %v1751 = vlaneseq
      %v1752 = vshrl.u32 %v1751, 7
      %v1753 = vsub.s32 2, %v1752
      %v1754 = vrot.slane %v921, %v1753
      %v1755 = vlaneseq
      %v1756 = vshrl.u32 %v1755, 7
      %v1757 = vsub.s32 3, %v1756
      %v1758 = vrot.slane %v921, %v1757
      %v1759 = vlaneseq
      %v1760 = vshrl.u32 %v1759, 7
      %v1761 = vsub.s32 4, %v1760
      %v1762 = vrot.slane %v921, %v1761
      %v1763 = vlaneseq
      %v1764 = vshrl.u32 %v1763, 7
      %v1765 = vsub.s32 5, %v1764
      %v1766 = vrot.slane %v921, %v1765
      %v1767 = vlaneseq
      %v1768 = vshrl.u32 %v1767, 7
      %v1769 = vsub.s32 6, %v1768
      %v1770 = vrot.slane %v921, %v1769
      %v1771 = vlaneseq
      %v1772 = vshrl.u32 %v1771, 7
      %v1773 = vsub.s32 7, %v1772
      %v1774 = vrot.slane %v921, %v1773
      %v1775 = vlaneseq
      %v1776 = vshrl.u32 %v1775, 7
      %v1777 = vsub.s32 0, %v1776
      %v1778 = vrot.slane %v924, %v1777
      %v1779 = vlaneseq
      %v1780 = vshrl.u32 %v1779, 7
      %v1781 = vsub.s32 1, %v1780
      %v1782 = vrot.slane %v924, %v1781
      %v1783 = vlaneseq
      %v1784 = vshrl.u32 %v1783, 7
      %v1785 = vsub.s32 2, %v1784
      %v1786 = vrot.slane %v924, %v1785
      %v1787 = vlaneseq
      %v1788 = vshrl.u32 %v1787, 7
      %v1789 = vsub.s32 3, %v1788
      %v1790 = vrot.slane %v924, %v1789
      %v1791 = vlaneseq
      %v1792 = vshrl.u32 %v1791, 7
      %v1793 = vsub.s32 4, %v1792
      %v1794 = vrot.slane %v924, %v1793
      %v1795 = vlaneseq
      %v1796 = vshrl.u32 %v1795, 7
      %v1797 = vsub.s32 5, %v1796
      %v1798 = vrot.slane %v924, %v1797
      %v1799 = vlaneseq
      %v1800 = vshrl.u32 %v1799, 7
      %v1801 = vsub.s32 6, %v1800
      %v1802 = vrot.slane %v924, %v1801
      %v1803 = vlaneseq
      %v1804 = vshrl.u32 %v1803, 7
      %v1805 = vsub.s32 7, %v1804
      %v1806 = vrot.slane %v924, %v1805
      %v1807 = vlaneseq
      %v1808 = vshrl.u32 %v1807, 7
      %v1809 = vsub.s32 0, %v1808
      %v1810 = vrot.slane %v927, %v1809
      %v1811 = vlaneseq
      %v1812 = vshrl.u32 %v1811, 7
      %v1813 = vsub.s32 1, %v1812
      %v1814 = vrot.slane %v927, %v1813
      %v1815 = vlaneseq
      %v1816 = vshrl.u32 %v1815, 7
      %v1817 = vsub.s32 2, %v1816
      %v1818 = vrot.slane %v927, %v1817
      %v1819 = vlaneseq
      %v1820 = vshrl.u32 %v1819, 7
      %v1821 = vsub.s32 3, %v1820
      %v1822 = vrot.slane %v927, %v1821
      %v1823 = vlaneseq
      %v1824 = vshrl.u32 %v1823, 7
      %v1825 = vsub.s32 4, %v1824
      %v1826 = vrot.slane %v927, %v1825
      %v1827 = vlaneseq
      %v1828 = vshrl.u32 %v1827, 7
      %v1829 = vsub.s32 5, %v1828
      %v1830 = vrot.slane %v927, %v1829
      %v1831 = vlaneseq
      %v1832 = vshrl.u32 %v1831, 7
      %v1833 = vsub.s32 6, %v1832
      %v1834 = vrot.slane %v927, %v1833
      %v1835 = vlaneseq
      %v1836 = vshrl.u32 %v1835, 7
      %v1837 = vsub.s32 7, %v1836
      %v1838 = vrot.slane %v927, %v1837
      %v1839 = vlaneseq
      %v1840 = vshrl.u32 %v1839, 7
      %v1841 = vsub.s32 0, %v1840
      %v1842 = vrot.slane %v930, %v1841
      %v1843 = vlaneseq
      %v1844 = vshrl.u32 %v1843, 7
      %v1845 = vsub.s32 1, %v1844
      %v1846 = vrot.slane %v930, %v1845
      %v1847 = vlaneseq
      %v1848 = vshrl.u32 %v1847, 7
      %v1849 = vsub.s32 2, %v1848
      %v1850 = vrot.slane %v930, %v1849
      %v1851 = vlaneseq
      %v1852 = vshrl.u32 %v1851, 7
      %v1853 = vsub.s32 3, %v1852
      %v1854 = vrot.slane %v930, %v1853
      %v1855 = vlaneseq
      %v1856 = vshrl.u32 %v1855, 7
      %v1857 = vsub.s32 4, %v1856
      %v1858 = vrot.slane %v930, %v1857
      %v1859 = vlaneseq
      %v1860 = vshrl.u32 %v1859, 7
      %v1861 = vsub.s32 5, %v1860
      %v1862 = vrot.slane %v930, %v1861
      %v1863 = vlaneseq
      %v1864 = vshrl.u32 %v1863, 7
      %v1865 = vsub.s32 6, %v1864
      %v1866 = vrot.slane %v930, %v1865
      %v1867 = vlaneseq
      %v1868 = vshrl.u32 %v1867, 7
      %v1869 = vsub.s32 7, %v1868
      %v1870 = vrot.slane %v930, %v1869
      %v1871 = vlaneseq
      %v1872 = vshrl.u32 %v1871, 7
      %v1873 = vsub.s32 0, %v1872
      %v1874 = vrot.slane %v933, %v1873
      %v1875 = vlaneseq
      %v1876 = vshrl.u32 %v1875, 7
      %v1877 = vsub.s32 1, %v1876
      %v1878 = vrot.slane %v933, %v1877
      %v1879 = vlaneseq
      %v1880 = vshrl.u32 %v1879, 7
      %v1881 = vsub.s32 2, %v1880
      %v1882 = vrot.slane %v933, %v1881
      %v1883 = vlaneseq
      %v1884 = vshrl.u32 %v1883, 7
      %v1885 = vsub.s32 3, %v1884
      %v1886 = vrot.slane %v933, %v1885
      %v1887 = vlaneseq
      %v1888 = vshrl.u32 %v1887, 7
      %v1889 = vsub.s32 4, %v1888
      %v1890 = vrot.slane %v933, %v1889
      %v1891 = vlaneseq
      %v1892 = vshrl.u32 %v1891, 7
      %v1893 = vsub.s32 5, %v1892
      %v1894 = vrot.slane %v933, %v1893
      %v1895 = vlaneseq
      %v1896 = vshrl.u32 %v1895, 7
      %v1897 = vsub.s32 6, %v1896
      %v1898 = vrot.slane %v933, %v1897
      %v1899 = vlaneseq
      %v1900 = vshrl.u32 %v1899, 7
      %v1901 = vsub.s32 7, %v1900
      %v1902 = vrot.slane %v933, %v1901
      %v1903 = vlaneseq
      %v1904 = vshrl.u32 %v1903, 7
      %v1905 = vsub.s32 0, %v1904
      %v1906 = vrot.slane %v936, %v1905
      %v1907 = vlaneseq
      %v1908 = vshrl.u32 %v1907, 7
      %v1909 = vsub.s32 1, %v1908
      %v1910 = vrot.slane %v936, %v1909
      %v1911 = vlaneseq
      %v1912 = vshrl.u32 %v1911, 7
      %v1913 = vsub.s32 2, %v1912
      %v1914 = vrot.slane %v936, %v1913
      %v1915 = vlaneseq
      %v1916 = vshrl.u32 %v1915, 7
      %v1917 = vsub.s32 3, %v1916
      %v1918 = vrot.slane %v936, %v1917
      %v1919 = vlaneseq
      %v1920 = vshrl.u32 %v1919, 7
      %v1921 = vsub.s32 4, %v1920
      %v1922 = vrot.slane %v936, %v1921
      %v1923 = vlaneseq
      %v1924 = vshrl.u32 %v1923, 7
      %v1925 = vsub.s32 5, %v1924
      %v1926 = vrot.slane %v936, %v1925
      %v1927 = vlaneseq
      %v1928 = vshrl.u32 %v1927, 7
      %v1929 = vsub.s32 6, %v1928
      %v1930 = vrot.slane %v936, %v1929
      %v1931 = vlaneseq
      %v1932 = vshrl.u32 %v1931, 7
      %v1933 = vsub.s32 7, %v1932
      %v1934 = vrot.slane %v936, %v1933
      %v1935 = vlaneseq
      %v1936 = vshrl.u32 %v1935, 7
      %v1937 = vsub.s32 0, %v1936
      %v1938 = vrot.slane %v939, %v1937
      %v1939 = vlaneseq
      %v1940 = vshrl.u32 %v1939, 7
      %v1941 = vsub.s32 1, %v1940
      %v1942 = vrot.slane %v939, %v1941
      %v1943 = vlaneseq
      %v1944 = vshrl.u32 %v1943, 7
      %v1945 = vsub.s32 2, %v1944
      %v1946 = vrot.slane %v939, %v1945
      %v1947 = vlaneseq
      %v1948 = vshrl.u32 %v1947, 7
      %v1949 = vsub.s32 3, %v1948
      %v1950 = vrot.slane %v939, %v1949
      %v1951 = vlaneseq
      %v1952 = vshrl.u32 %v1951, 7
      %v1953 = vsub.s32 4, %v1952
      %v1954 = vrot.slane %v939, %v1953
      %v1955 = vlaneseq
      %v1956 = vshrl.u32 %v1955, 7
      %v1957 = vsub.s32 5, %v1956
      %v1958 = vrot.slane %v939, %v1957
      %v1959 = vlaneseq
      %v1960 = vshrl.u32 %v1959, 7
      %v1961 = vsub.s32 6, %v1960
      %v1962 = vrot.slane %v939, %v1961
      %v1963 = vlaneseq
      %v1964 = vshrl.u32 %v1963, 7
      %v1965 = vsub.s32 7, %v1964
      %v1966 = vrot.slane %v939, %v1965
      %v1967 = vlaneseq
      %v1968 = vshrl.u32 %v1967, 7
      %v1969 = vsub.s32 0, %v1968
      %v1970 = vrot.slane %v942, %v1969
      %v1971 = vlaneseq
      %v1972 = vshrl.u32 %v1971, 7
      %v1973 = vsub.s32 1, %v1972
      %v1974 = vrot.slane %v942, %v1973
      %v1975 = vlaneseq
      %v1976 = vshrl.u32 %v1975, 7
      %v1977 = vsub.s32 2, %v1976
      %v1978 = vrot.slane %v942, %v1977
      %v1979 = vlaneseq
      %v1980 = vshrl.u32 %v1979, 7
      %v1981 = vsub.s32 3, %v1980
      %v1982 = vrot.slane %v942, %v1981
      %v1983 = vlaneseq
      %v1984 = vshrl.u32 %v1983, 7
      %v1985 = vsub.s32 4, %v1984
      %v1986 = vrot.slane %v942, %v1985
      %v1987 = vlaneseq
      %v1988 = vshrl.u32 %v1987, 7
      %v1989 = vsub.s32 5, %v1988
      %v1990 = vrot.slane %v942, %v1989
      %v1991 = vlaneseq
      %v1992 = vshrl.u32 %v1991, 7
      %v1993 = vsub.s32 6, %v1992
      %v1994 = vrot.slane %v942, %v1993
      %v1995 = vlaneseq
      %v1996 = vshrl.u32 %v1995, 7
      %v1997 = vsub.s32 7, %v1996
      %v1998 = vrot.slane %v942, %v1997
      %v1999 = vcombine.low %v978, %v982
      %v2000 = vcombine.low %v986, %v990
      %v2001 = vcombine.low %v994, %v998
      %v2002 = vcombine.low %v1002, %v1006
      %v2004 = vunpack.c.l.s4 1966171168
      %v2005 = vunpack.c.0.s8 %v2004
      %v2006 = vlaneseq
      %v2007 = vshrl.u32 %v2006, 7
      %v2008 = vsub.s32 %v2005, %v2007
      %v2009 = vrot.slane %v1999, %v2008
      %v2011 = vunpack.c.l.s4 1966171168
      %v2012 = vunpack.c.0.s8 %v2011
      %v2013 = vlaneseq
      %v2014 = vshrl.u32 %v2013, 7
      %v2015 = vsub.s32 %v2012, %v2014
      %v2016 = vrot.slane %v2000, %v2015
      %v2018 = vunpack.c.l.s4 1966171168
      %v2019 = vunpack.c.0.s8 %v2018
      %v2020 = vlaneseq
      %v2021 = vshrl.u32 %v2020, 7
      %v2022 = vsub.s32 %v2019, %v2021
      %v2023 = vrot.slane %v2001, %v2022
      %v2025 = vunpack.c.l.s4 1966171168
      %v2026 = vunpack.c.0.s8 %v2025
      %v2027 = vlaneseq
      %v2028 = vshrl.u32 %v2027, 7
      %v2029 = vsub.s32 %v2026, %v2028
      %v2030 = vrot.slane %v2002, %v2029
      %v2031 = vcombine.low %v2009, %v2016
      %v2032 = vcombine.low %v2023, %v2030
      %v2034 = vunpack.c.l.s4 1966171168
      %v2035 = vunpack.c.0.s8 %v2034
      %v2036 = vlaneseq
      %v2037 = vshrl.u32 %v2036, 7
      %v2038 = vsub.s32 %v2035, %v2037
      %v2039 = vrot.slane %v2031, %v2038
      %v2041 = vunpack.c.l.s4 1966171168
      %v2042 = vunpack.c.0.s8 %v2041
      %v2043 = vlaneseq
      %v2044 = vshrl.u32 %v2043, 7
      %v2045 = vsub.s32 %v2042, %v2044
      %v2046 = vrot.slane %v2032, %v2045
      %v2047 = vcombine.low %v2039, %v2046
      %v2048 = vcombine.low %v1010, %v1014
      %v2049 = vcombine.low %v1018, %v1022
      %v2050 = vcombine.low %v1026, %v1030
      %v2051 = vcombine.low %v1034, %v1038
      %v2053 = vunpack.c.l.s4 1966171168
      %v2054 = vunpack.c.0.s8 %v2053
      %v2055 = vlaneseq
      %v2056 = vshrl.u32 %v2055, 7
      %v2057 = vsub.s32 %v2054, %v2056
      %v2058 = vrot.slane %v2048, %v2057
      %v2060 = vunpack.c.l.s4 1966171168
      %v2061 = vunpack.c.0.s8 %v2060
      %v2062 = vlaneseq
      %v2063 = vshrl.u32 %v2062, 7
      %v2064 = vsub.s32 %v2061, %v2063
      %v2065 = vrot.slane %v2049, %v2064
      %v2067 = vunpack.c.l.s4 1966171168
      %v2068 = vunpack.c.0.s8 %v2067
      %v2069 = vlaneseq
      %v2070 = vshrl.u32 %v2069, 7
      %v2071 = vsub.s32 %v2068, %v2070
      %v2072 = vrot.slane %v2050, %v2071
      %v2074 = vunpack.c.l.s4 1966171168
      %v2075 = vunpack.c.0.s8 %v2074
      %v2076 = vlaneseq
      %v2077 = vshrl.u32 %v2076, 7
      %v2078 = vsub.s32 %v2075, %v2077
      %v2079 = vrot.slane %v2051, %v2078
      %v2080 = vcombine.low %v2058, %v2065
      %v2081 = vcombine.low %v2072, %v2079
      %v2083 = vunpack.c.l.s4 1966171168
      %v2084 = vunpack.c.0.s8 %v2083
      %v2085 = vlaneseq
      %v2086 = vshrl.u32 %v2085, 7
      %v2087 = vsub.s32 %v2084, %v2086
      %v2088 = vrot.slane %v2080, %v2087
      %v2090 = vunpack.c.l.s4 1966171168
      %v2091 = vunpack.c.0.s8 %v2090
      %v2092 = vlaneseq
      %v2093 = vshrl.u32 %v2092, 7
      %v2094 = vsub.s32 %v2091, %v2093
      %v2095 = vrot.slane %v2081, %v2094
      %v2096 = vcombine.low %v2088, %v2095
      %v2097 = vcombine.low %v1042, %v1046
      %v2098 = vcombine.low %v1050, %v1054
      %v2099 = vcombine.low %v1058, %v1062
      %v2100 = vcombine.low %v1066, %v1070
      %v2102 = vunpack.c.l.s4 1966171168
      %v2103 = vunpack.c.0.s8 %v2102
      %v2104 = vlaneseq
      %v2105 = vshrl.u32 %v2104, 7
      %v2106 = vsub.s32 %v2103, %v2105
      %v2107 = vrot.slane %v2097, %v2106
      %v2109 = vunpack.c.l.s4 1966171168
      %v2110 = vunpack.c.0.s8 %v2109
      %v2111 = vlaneseq
      %v2112 = vshrl.u32 %v2111, 7
      %v2113 = vsub.s32 %v2110, %v2112
      %v2114 = vrot.slane %v2098, %v2113
      %v2116 = vunpack.c.l.s4 1966171168
      %v2117 = vunpack.c.0.s8 %v2116
      %v2118 = vlaneseq
      %v2119 = vshrl.u32 %v2118, 7
      %v2120 = vsub.s32 %v2117, %v2119
      %v2121 = vrot.slane %v2099, %v2120
      %v2123 = vunpack.c.l.s4 1966171168
      %v2124 = vunpack.c.0.s8 %v2123
      %v2125 = vlaneseq
      %v2126 = vshrl.u32 %v2125, 7
      %v2127 = vsub.s32 %v2124, %v2126
      %v2128 = vrot.slane %v2100, %v2127
      %v2129 = vcombine.low %v2107, %v2114
      %v2130 = vcombine.low %v2121, %v2128
      %v2132 = vunpack.c.l.s4 1966171168
      %v2133 = vunpack.c.0.s8 %v2132
      %v2134 = vlaneseq
      %v2135 = vshrl.u32 %v2134, 7
      %v2136 = vsub.s32 %v2133, %v2135
      %v2137 = vrot.slane %v2129, %v2136
      %v2139 = vunpack.c.l.s4 1966171168
      %v2140 = vunpack.c.0.s8 %v2139
      %v2141 = vlaneseq
      %v2142 = vshrl.u32 %v2141, 7
      %v2143 = vsub.s32 %v2140, %v2142
      %v2144 = vrot.slane %v2130, %v2143
      %v2145 = vcombine.low %v2137, %v2144
      %v2146 = vcombine.low %v1074, %v1078
      %v2147 = vcombine.low %v1082, %v1086
      %v2148 = vcombine.low %v1090, %v1094
      %v2149 = vcombine.low %v1098, %v1102
      %v2151 = vunpack.c.l.s4 1966171168
      %v2152 = vunpack.c.0.s8 %v2151
      %v2153 = vlaneseq
      %v2154 = vshrl.u32 %v2153, 7
      %v2155 = vsub.s32 %v2152, %v2154
      %v2156 = vrot.slane %v2146, %v2155
      %v2158 = vunpack.c.l.s4 1966171168
      %v2159 = vunpack.c.0.s8 %v2158
      %v2160 = vlaneseq
      %v2161 = vshrl.u32 %v2160, 7
      %v2162 = vsub.s32 %v2159, %v2161
      %v2163 = vrot.slane %v2147, %v2162
      %v2165 = vunpack.c.l.s4 1966171168
      %v2166 = vunpack.c.0.s8 %v2165
      %v2167 = vlaneseq
      %v2168 = vshrl.u32 %v2167, 7
      %v2169 = vsub.s32 %v2166, %v2168
      %v2170 = vrot.slane %v2148, %v2169
      %v2172 = vunpack.c.l.s4 1966171168
      %v2173 = vunpack.c.0.s8 %v2172
      %v2174 = vlaneseq
      %v2175 = vshrl.u32 %v2174, 7
      %v2176 = vsub.s32 %v2173, %v2175
      %v2177 = vrot.slane %v2149, %v2176
      %v2178 = vcombine.low %v2156, %v2163
      %v2179 = vcombine.low %v2170, %v2177
      %v2181 = vunpack.c.l.s4 1966171168
      %v2182 = vunpack.c.0.s8 %v2181
      %v2183 = vlaneseq
      %v2184 = vshrl.u32 %v2183, 7
      %v2185 = vsub.s32 %v2182, %v2184
      %v2186 = vrot.slane %v2178, %v2185
      %v2188 = vunpack.c.l.s4 1966171168
      %v2189 = vunpack.c.0.s8 %v2188
      %v2190 = vlaneseq
      %v2191 = vshrl.u32 %v2190, 7
      %v2192 = vsub.s32 %v2189, %v2191
      %v2193 = vrot.slane %v2179, %v2192
      %v2194 = vcombine.low %v2186, %v2193
      %v2195 = vcombine.low %v1106, %v1110
      %v2196 = vcombine.low %v1114, %v1118
      %v2197 = vcombine.low %v1122, %v1126
      %v2198 = vcombine.low %v1130, %v1134
      %v2200 = vunpack.c.l.s4 1966171168
      %v2201 = vunpack.c.0.s8 %v2200
      %v2202 = vlaneseq
      %v2203 = vshrl.u32 %v2202, 7
      %v2204 = vsub.s32 %v2201, %v2203
      %v2205 = vrot.slane %v2195, %v2204
      %v2207 = vunpack.c.l.s4 1966171168
      %v2208 = vunpack.c.0.s8 %v2207
      %v2209 = vlaneseq
      %v2210 = vshrl.u32 %v2209, 7
      %v2211 = vsub.s32 %v2208, %v2210
      %v2212 = vrot.slane %v2196, %v2211
      %v2214 = vunpack.c.l.s4 1966171168
      %v2215 = vunpack.c.0.s8 %v2214
      %v2216 = vlaneseq
      %v2217 = vshrl.u32 %v2216, 7
      %v2218 = vsub.s32 %v2215, %v2217
      %v2219 = vrot.slane %v2197, %v2218
      %v2221 = vunpack.c.l.s4 1966171168
      %v2222 = vunpack.c.0.s8 %v2221
      %v2223 = vlaneseq
      %v2224 = vshrl.u32 %v2223, 7
      %v2225 = vsub.s32 %v2222, %v2224
      %v2226 = vrot.slane %v2198, %v2225
      %v2227 = vcombine.low %v2205, %v2212
      %v2228 = vcombine.low %v2219, %v2226
      %v2230 = vunpack.c.l.s4 1966171168
      %v2231 = vunpack.c.0.s8 %v2230
      %v2232 = vlaneseq
      %v2233 = vshrl.u32 %v2232, 7
      %v2234 = vsub.s32 %v2231, %v2233
      %v2235 = vrot.slane %v2227, %v2234
      %v2237 = vunpack.c.l.s4 1966171168
      %v2238 = vunpack.c.0.s8 %v2237
      %v2239 = vlaneseq
      %v2240 = vshrl.u32 %v2239, 7
      %v2241 = vsub.s32 %v2238, %v2240
      %v2242 = vrot.slane %v2228, %v2241
      %v2243 = vcombine.low %v2235, %v2242
      %v2244 = vcombine.low %v1138, %v1142
      %v2245 = vcombine.low %v1146, %v1150
      %v2246 = vcombine.low %v1154, %v1158
      %v2247 = vcombine.low %v1162, %v1166
      %v2249 = vunpack.c.l.s4 1966171168
      %v2250 = vunpack.c.0.s8 %v2249
      %v2251 = vlaneseq
      %v2252 = vshrl.u32 %v2251, 7
      %v2253 = vsub.s32 %v2250, %v2252
      %v2254 = vrot.slane %v2244, %v2253
      %v2256 = vunpack.c.l.s4 1966171168
      %v2257 = vunpack.c.0.s8 %v2256
      %v2258 = vlaneseq
      %v2259 = vshrl.u32 %v2258, 7
      %v2260 = vsub.s32 %v2257, %v2259
      %v2261 = vrot.slane %v2245, %v2260
      %v2263 = vunpack.c.l.s4 1966171168
      %v2264 = vunpack.c.0.s8 %v2263
      %v2265 = vlaneseq
      %v2266 = vshrl.u32 %v2265, 7
      %v2267 = vsub.s32 %v2264, %v2266
      %v2268 = vrot.slane %v2246, %v2267
      %v2270 = vunpack.c.l.s4 1966171168
      %v2271 = vunpack.c.0.s8 %v2270
      %v2272 = vlaneseq
      %v2273 = vshrl.u32 %v2272, 7
      %v2274 = vsub.s32 %v2271, %v2273
      %v2275 = vrot.slane %v2247, %v2274
      %v2276 = vcombine.low %v2254, %v2261
      %v2277 = vcombine.low %v2268, %v2275
      %v2279 = vunpack.c.l.s4 1966171168
      %v2280 = vunpack.c.0.s8 %v2279
      %v2281 = vlaneseq
      %v2282 = vshrl.u32 %v2281, 7
      %v2283 = vsub.s32 %v2280, %v2282
      %v2284 = vrot.slane %v2276, %v2283
      %v2286 = vunpack.c.l.s4 1966171168
      %v2287 = vunpack.c.0.s8 %v2286
      %v2288 = vlaneseq
      %v2289 = vshrl.u32 %v2288, 7
      %v2290 = vsub.s32 %v2287, %v2289
      %v2291 = vrot.slane %v2277, %v2290
      %v2292 = vcombine.low %v2284, %v2291
      %v2293 = vcombine.low %v1170, %v1174
      %v2294 = vcombine.low %v1178, %v1182
      %v2295 = vcombine.low %v1186, %v1190
      %v2296 = vcombine.low %v1194, %v1198
      %v2298 = vunpack.c.l.s4 1966171168
      %v2299 = vunpack.c.0.s8 %v2298
      %v2300 = vlaneseq
      %v2301 = vshrl.u32 %v2300, 7
      %v2302 = vsub.s32 %v2299, %v2301
      %v2303 = vrot.slane %v2293, %v2302
      %v2305 = vunpack.c.l.s4 1966171168
      %v2306 = vunpack.c.0.s8 %v2305
      %v2307 = vlaneseq
      %v2308 = vshrl.u32 %v2307, 7
      %v2309 = vsub.s32 %v2306, %v2308
      %v2310 = vrot.slane %v2294, %v2309
      %v2312 = vunpack.c.l.s4 1966171168
      %v2313 = vunpack.c.0.s8 %v2312
      %v2314 = vlaneseq
      %v2315 = vshrl.u32 %v2314, 7
      %v2316 = vsub.s32 %v2313, %v2315
      %v2317 = vrot.slane %v2295, %v2316
      %v2319 = vunpack.c.l.s4 1966171168
      %v2320 = vunpack.c.0.s8 %v2319
      %v2321 = vlaneseq
      %v2322 = vshrl.u32 %v2321, 7
      %v2323 = vsub.s32 %v2320, %v2322
      %v2324 = vrot.slane %v2296, %v2323
      %v2325 = vcombine.low %v2303, %v2310
      %v2326 = vcombine.low %v2317, %v2324
      %v2328 = vunpack.c.l.s4 1966171168
      %v2329 = vunpack.c.0.s8 %v2328
      %v2330 = vlaneseq
      %v2331 = vshrl.u32 %v2330, 7
      %v2332 = vsub.s32 %v2329, %v2331
      %v2333 = vrot.slane %v2325, %v2332
      %v2335 = vunpack.c.l.s4 1966171168
      %v2336 = vunpack.c.0.s8 %v2335
      %v2337 = vlaneseq
      %v2338 = vshrl.u32 %v2337, 7
      %v2339 = vsub.s32 %v2336, %v2338
      %v2340 = vrot.slane %v2326, %v2339
      %v2341 = vcombine.low %v2333, %v2340
      %v2342 = vcombine.low %v1202, %v1206
      %v2343 = vcombine.low %v1210, %v1214
      %v2344 = vcombine.low %v1218, %v1222
      %v2345 = vcombine.low %v1226, %v1230
      %v2347 = vunpack.c.l.s4 1966171168
      %v2348 = vunpack.c.0.s8 %v2347
      %v2349 = vlaneseq
      %v2350 = vshrl.u32 %v2349, 7
      %v2351 = vsub.s32 %v2348, %v2350
      %v2352 = vrot.slane %v2342, %v2351
      %v2354 = vunpack.c.l.s4 1966171168
      %v2355 = vunpack.c.0.s8 %v2354
      %v2356 = vlaneseq
      %v2357 = vshrl.u32 %v2356, 7
      %v2358 = vsub.s32 %v2355, %v2357
      %v2359 = vrot.slane %v2343, %v2358
      %v2361 = vunpack.c.l.s4 1966171168
      %v2362 = vunpack.c.0.s8 %v2361
      %v2363 = vlaneseq
      %v2364 = vshrl.u32 %v2363, 7
      %v2365 = vsub.s32 %v2362, %v2364
      %v2366 = vrot.slane %v2344, %v2365
      %v2368 = vunpack.c.l.s4 1966171168
      %v2369 = vunpack.c.0.s8 %v2368
      %v2370 = vlaneseq
      %v2371 = vshrl.u32 %v2370, 7
      %v2372 = vsub.s32 %v2369, %v2371
      %v2373 = vrot.slane %v2345, %v2372
      %v2374 = vcombine.low %v2352, %v2359
      %v2375 = vcombine.low %v2366, %v2373
      %v2377 = vunpack.c.l.s4 1966171168
      %v2378 = vunpack.c.0.s8 %v2377
      %v2379 = vlaneseq
      %v2380 = vshrl.u32 %v2379, 7
      %v2381 = vsub.s32 %v2378, %v2380
      %v2382 = vrot.slane %v2374, %v2381
      %v2384 = vunpack.c.l.s4 1966171168
      %v2385 = vunpack.c.0.s8 %v2384
      %v2386 = vlaneseq
      %v2387 = vshrl.u32 %v2386, 7
      %v2388 = vsub.s32 %v2385, %v2387
      %v2389 = vrot.slane %v2375, %v2388
      %v2390 = vcombine.low %v2382, %v2389
      %v2391 = vcombine.low %v1234, %v1238
      %v2392 = vcombine.low %v1242, %v1246
      %v2393 = vcombine.low %v1250, %v1254
      %v2394 = vcombine.low %v1258, %v1262
      %v2396 = vunpack.c.l.s4 1966171168
      %v2397 = vunpack.c.0.s8 %v2396
      %v2398 = vlaneseq
      %v2399 = vshrl.u32 %v2398, 7
      %v2400 = vsub.s32 %v2397, %v2399
      %v2401 = vrot.slane %v2391, %v2400
      %v2403 = vunpack.c.l.s4 1966171168
      %v2404 = vunpack.c.0.s8 %v2403
      %v2405 = vlaneseq
      %v2406 = vshrl.u32 %v2405, 7
      %v2407 = vsub.s32 %v2404, %v2406
      %v2408 = vrot.slane %v2392, %v2407
      %v2410 = vunpack.c.l.s4 1966171168
      %v2411 = vunpack.c.0.s8 %v2410
      %v2412 = vlaneseq
      %v2413 = vshrl.u32 %v2412, 7
      %v2414 = vsub.s32 %v2411, %v2413
      %v2415 = vrot.slane %v2393, %v2414
      %v2417 = vunpack.c.l.s4 1966171168
      %v2418 = vunpack.c.0.s8 %v2417
      %v2419 = vlaneseq
      %v2420 = vshrl.u32 %v2419, 7
      %v2421 = vsub.s32 %v2418, %v2420
      %v2422 = vrot.slane %v2394, %v2421
      %v2423 = vcombine.low %v2401, %v2408
      %v2424 = vcombine.low %v2415, %v2422
      %v2426 = vunpack.c.l.s4 1966171168
      %v2427 = vunpack.c.0.s8 %v2426
      %v2428 = vlaneseq
      %v2429 = vshrl.u32 %v2428, 7
      %v2430 = vsub.s32 %v2427, %v2429
      %v2431 = vrot.slane %v2423, %v2430
      %v2433 = vunpack.c.l.s4 1966171168
      %v2434 = vunpack.c.0.s8 %v2433
      %v2435 = vlaneseq
      %v2436 = vshrl.u32 %v2435, 7
      %v2437 = vsub.s32 %v2434, %v2436
      %v2438 = vrot.slane %v2424, %v2437
      %v2439 = vcombine.low %v2431, %v2438
      %v2440 = vcombine.low %v1266, %v1270
      %v2441 = vcombine.low %v1274, %v1278
      %v2442 = vcombine.low %v1282, %v1286
      %v2443 = vcombine.low %v1290, %v1294
      %v2445 = vunpack.c.l.s4 1966171168
      %v2446 = vunpack.c.0.s8 %v2445
      %v2447 = vlaneseq
      %v2448 = vshrl.u32 %v2447, 7
      %v2449 = vsub.s32 %v2446, %v2448
      %v2450 = vrot.slane %v2440, %v2449
      %v2452 = vunpack.c.l.s4 1966171168
      %v2453 = vunpack.c.0.s8 %v2452
      %v2454 = vlaneseq
      %v2455 = vshrl.u32 %v2454, 7
      %v2456 = vsub.s32 %v2453, %v2455
      %v2457 = vrot.slane %v2441, %v2456
      %v2459 = vunpack.c.l.s4 1966171168
      %v2460 = vunpack.c.0.s8 %v2459
      %v2461 = vlaneseq
      %v2462 = vshrl.u32 %v2461, 7
      %v2463 = vsub.s32 %v2460, %v2462
      %v2464 = vrot.slane %v2442, %v2463
      %v2466 = vunpack.c.l.s4 1966171168
      %v2467 = vunpack.c.0.s8 %v2466
      %v2468 = vlaneseq
      %v2469 = vshrl.u32 %v2468, 7
      %v2470 = vsub.s32 %v2467, %v2469
      %v2471 = vrot.slane %v2443, %v2470
      %v2472 = vcombine.low %v2450, %v2457
      %v2473 = vcombine.low %v2464, %v2471
      %v2475 = vunpack.c.l.s4 1966171168
      %v2476 = vunpack.c.0.s8 %v2475
      %v2477 = vlaneseq
      %v2478 = vshrl.u32 %v2477, 7
      %v2479 = vsub.s32 %v2476, %v2478
      %v2480 = vrot.slane %v2472, %v2479
      %v2482 = vunpack.c.l.s4 1966171168
      %v2483 = vunpack.c.0.s8 %v2482
      %v2484 = vlaneseq
      %v2485 = vshrl.u32 %v2484, 7
      %v2486 = vsub.s32 %v2483, %v2485
      %v2487 = vrot.slane %v2473, %v2486
      %v2488 = vcombine.low %v2480, %v2487
      %v2489 = vcombine.low %v1298, %v1302
      %v2490 = vcombine.low %v1306, %v1310
      %v2491 = vcombine.low %v1314, %v1318
      %v2492 = vcombine.low %v1322, %v1326
      %v2494 = vunpack.c.l.s4 1966171168
      %v2495 = vunpack.c.0.s8 %v2494
      %v2496 = vlaneseq
      %v2497 = vshrl.u32 %v2496, 7
      %v2498 = vsub.s32 %v2495, %v2497
      %v2499 = vrot.slane %v2489, %v2498
      %v2501 = vunpack.c.l.s4 1966171168
      %v2502 = vunpack.c.0.s8 %v2501
      %v2503 = vlaneseq
      %v2504 = vshrl.u32 %v2503, 7
      %v2505 = vsub.s32 %v2502, %v2504
      %v2506 = vrot.slane %v2490, %v2505
      %v2508 = vunpack.c.l.s4 1966171168
      %v2509 = vunpack.c.0.s8 %v2508
      %v2510 = vlaneseq
      %v2511 = vshrl.u32 %v2510, 7
      %v2512 = vsub.s32 %v2509, %v2511
      %v2513 = vrot.slane %v2491, %v2512
      %v2515 = vunpack.c.l.s4 1966171168
      %v2516 = vunpack.c.0.s8 %v2515
      %v2517 = vlaneseq
      %v2518 = vshrl.u32 %v2517, 7
      %v2519 = vsub.s32 %v2516, %v2518
      %v2520 = vrot.slane %v2492, %v2519
      %v2521 = vcombine.low %v2499, %v2506
      %v2522 = vcombine.low %v2513, %v2520
      %v2524 = vunpack.c.l.s4 1966171168
      %v2525 = vunpack.c.0.s8 %v2524
      %v2526 = vlaneseq
      %v2527 = vshrl.u32 %v2526, 7
      %v2528 = vsub.s32 %v2525, %v2527
      %v2529 = vrot.slane %v2521, %v2528
      %v2531 = vunpack.c.l.s4 1966171168
      %v2532 = vunpack.c.0.s8 %v2531
      %v2533 = vlaneseq
      %v2534 = vshrl.u32 %v2533, 7
      %v2535 = vsub.s32 %v2532, %v2534
      %v2536 = vrot.slane %v2522, %v2535
      %v2537 = vcombine.low %v2529, %v2536
      %v2538 = vcombine.low %v1330, %v1334
      %v2539 = vcombine.low %v1338, %v1342
      %v2540 = vcombine.low %v1346, %v1350
      %v2541 = vcombine.low %v1354, %v1358
      %v2543 = vunpack.c.l.s4 1966171168
      %v2544 = vunpack.c.0.s8 %v2543
      %v2545 = vlaneseq
      %v2546 = vshrl.u32 %v2545, 7
      %v2547 = vsub.s32 %v2544, %v2546
      %v2548 = vrot.slane %v2538, %v2547
      %v2550 = vunpack.c.l.s4 1966171168
      %v2551 = vunpack.c.0.s8 %v2550
      %v2552 = vlaneseq
      %v2553 = vshrl.u32 %v2552, 7
      %v2554 = vsub.s32 %v2551, %v2553
      %v2555 = vrot.slane %v2539, %v2554
      %v2557 = vunpack.c.l.s4 1966171168
      %v2558 = vunpack.c.0.s8 %v2557
      %v2559 = vlaneseq
      %v2560 = vshrl.u32 %v2559, 7
      %v2561 = vsub.s32 %v2558, %v2560
      %v2562 = vrot.slane %v2540, %v2561
      %v2564 = vunpack.c.l.s4 1966171168
      %v2565 = vunpack.c.0.s8 %v2564
      %v2566 = vlaneseq
      %v2567 = vshrl.u32 %v2566, 7
      %v2568 = vsub.s32 %v2565, %v2567
      %v2569 = vrot.slane %v2541, %v2568
      %v2570 = vcombine.low %v2548, %v2555
      %v2571 = vcombine.low %v2562, %v2569
      %v2573 = vunpack.c.l.s4 1966171168
      %v2574 = vunpack.c.0.s8 %v2573
      %v2575 = vlaneseq
      %v2576 = vshrl.u32 %v2575, 7
      %v2577 = vsub.s32 %v2574, %v2576
      %v2578 = vrot.slane %v2570, %v2577
      %v2580 = vunpack.c.l.s4 1966171168
      %v2581 = vunpack.c.0.s8 %v2580
      %v2582 = vlaneseq
      %v2583 = vshrl.u32 %v2582, 7
      %v2584 = vsub.s32 %v2581, %v2583
      %v2585 = vrot.slane %v2571, %v2584
      %v2586 = vcombine.low %v2578, %v2585
      %v2587 = vcombine.low %v1362, %v1366
      %v2588 = vcombine.low %v1370, %v1374
      %v2589 = vcombine.low %v1378, %v1382
      %v2590 = vcombine.low %v1386, %v1390
      %v2592 = vunpack.c.l.s4 1966171168
      %v2593 = vunpack.c.0.s8 %v2592
      %v2594 = vlaneseq
      %v2595 = vshrl.u32 %v2594, 7
      %v2596 = vsub.s32 %v2593, %v2595
      %v2597 = vrot.slane %v2587, %v2596
      %v2599 = vunpack.c.l.s4 1966171168
      %v2600 = vunpack.c.0.s8 %v2599
      %v2601 = vlaneseq
      %v2602 = vshrl.u32 %v2601, 7
      %v2603 = vsub.s32 %v2600, %v2602
      %v2604 = vrot.slane %v2588, %v2603
      %v2606 = vunpack.c.l.s4 1966171168
      %v2607 = vunpack.c.0.s8 %v2606
      %v2608 = vlaneseq
      %v2609 = vshrl.u32 %v2608, 7
      %v2610 = vsub.s32 %v2607, %v2609
      %v2611 = vrot.slane %v2589, %v2610
      %v2613 = vunpack.c.l.s4 1966171168
      %v2614 = vunpack.c.0.s8 %v2613
      %v2615 = vlaneseq
      %v2616 = vshrl.u32 %v2615, 7
      %v2617 = vsub.s32 %v2614, %v2616
      %v2618 = vrot.slane %v2590, %v2617
      %v2619 = vcombine.low %v2597, %v2604
      %v2620 = vcombine.low %v2611, %v2618
      %v2622 = vunpack.c.l.s4 1966171168
      %v2623 = vunpack.c.0.s8 %v2622
      %v2624 = vlaneseq
      %v2625 = vshrl.u32 %v2624, 7
      %v2626 = vsub.s32 %v2623, %v2625
      %v2627 = vrot.slane %v2619, %v2626
      %v2629 = vunpack.c.l.s4 1966171168
      %v2630 = vunpack.c.0.s8 %v2629
      %v2631 = vlaneseq
      %v2632 = vshrl.u32 %v2631, 7
      %v2633 = vsub.s32 %v2630, %v2632
      %v2634 = vrot.slane %v2620, %v2633
      %v2635 = vcombine.low %v2627, %v2634
      %v2636 = vcombine.low %v1394, %v1398
      %v2637 = vcombine.low %v1402, %v1406
      %v2638 = vcombine.low %v1410, %v1414
      %v2639 = vcombine.low %v1418, %v1422
      %v2641 = vunpack.c.l.s4 1966171168
      %v2642 = vunpack.c.0.s8 %v2641
      %v2643 = vlaneseq
      %v2644 = vshrl.u32 %v2643, 7
      %v2645 = vsub.s32 %v2642, %v2644
      %v2646 = vrot.slane %v2636, %v2645
      %v2648 = vunpack.c.l.s4 1966171168
      %v2649 = vunpack.c.0.s8 %v2648
      %v2650 = vlaneseq
      %v2651 = vshrl.u32 %v2650, 7
      %v2652 = vsub.s32 %v2649, %v2651
      %v2653 = vrot.slane %v2637, %v2652
      %v2655 = vunpack.c.l.s4 1966171168
      %v2656 = vunpack.c.0.s8 %v2655
      %v2657 = vlaneseq
      %v2658 = vshrl.u32 %v2657, 7
      %v2659 = vsub.s32 %v2656, %v2658
      %v2660 = vrot.slane %v2638, %v2659
      %v2662 = vunpack.c.l.s4 1966171168
      %v2663 = vunpack.c.0.s8 %v2662
      %v2664 = vlaneseq
      %v2665 = vshrl.u32 %v2664, 7
      %v2666 = vsub.s32 %v2663, %v2665
      %v2667 = vrot.slane %v2639, %v2666
      %v2668 = vcombine.low %v2646, %v2653
      %v2669 = vcombine.low %v2660, %v2667
      %v2671 = vunpack.c.l.s4 1966171168
      %v2672 = vunpack.c.0.s8 %v2671
      %v2673 = vlaneseq
      %v2674 = vshrl.u32 %v2673, 7
      %v2675 = vsub.s32 %v2672, %v2674
      %v2676 = vrot.slane %v2668, %v2675
      %v2678 = vunpack.c.l.s4 1966171168
      %v2679 = vunpack.c.0.s8 %v2678
      %v2680 = vlaneseq
      %v2681 = vshrl.u32 %v2680, 7
      %v2682 = vsub.s32 %v2679, %v2681
      %v2683 = vrot.slane %v2669, %v2682
      %v2684 = vcombine.low %v2676, %v2683
      %v2685 = vcombine.low %v1426, %v1430
      %v2686 = vcombine.low %v1434, %v1438
      %v2687 = vcombine.low %v1442, %v1446
      %v2688 = vcombine.low %v1450, %v1454
      %v2690 = vunpack.c.l.s4 1966171168
      %v2691 = vunpack.c.0.s8 %v2690
      %v2692 = vlaneseq
      %v2693 = vshrl.u32 %v2692, 7
      %v2694 = vsub.s32 %v2691, %v2693
      %v2695 = vrot.slane %v2685, %v2694
      %v2697 = vunpack.c.l.s4 1966171168
      %v2698 = vunpack.c.0.s8 %v2697
      %v2699 = vlaneseq
      %v2700 = vshrl.u32 %v2699, 7
      %v2701 = vsub.s32 %v2698, %v2700
      %v2702 = vrot.slane %v2686, %v2701
      %v2704 = vunpack.c.l.s4 1966171168
      %v2705 = vunpack.c.0.s8 %v2704
      %v2706 = vlaneseq
      %v2707 = vshrl.u32 %v2706, 7
      %v2708 = vsub.s32 %v2705, %v2707
      %v2709 = vrot.slane %v2687, %v2708
      %v2711 = vunpack.c.l.s4 1966171168
      %v2712 = vunpack.c.0.s8 %v2711
      %v2713 = vlaneseq
      %v2714 = vshrl.u32 %v2713, 7
      %v2715 = vsub.s32 %v2712, %v2714
      %v2716 = vrot.slane %v2688, %v2715
      %v2717 = vcombine.low %v2695, %v2702
      %v2718 = vcombine.low %v2709, %v2716
      %v2720 = vunpack.c.l.s4 1966171168
      %v2721 = vunpack.c.0.s8 %v2720
      %v2722 = vlaneseq
      %v2723 = vshrl.u32 %v2722, 7
      %v2724 = vsub.s32 %v2721, %v2723
      %v2725 = vrot.slane %v2717, %v2724
      %v2727 = vunpack.c.l.s4 1966171168
      %v2728 = vunpack.c.0.s8 %v2727
      %v2729 = vlaneseq
      %v2730 = vshrl.u32 %v2729, 7
      %v2731 = vsub.s32 %v2728, %v2730
      %v2732 = vrot.slane %v2718, %v2731
      %v2733 = vcombine.low %v2725, %v2732
      %v2734 = vcombine.low %v1458, %v1462
      %v2735 = vcombine.low %v1466, %v1470
      %v2736 = vcombine.low %v1474, %v1478
      %v2737 = vcombine.low %v1482, %v1486
      %v2739 = vunpack.c.l.s4 1966171168
      %v2740 = vunpack.c.0.s8 %v2739
      %v2741 = vlaneseq
      %v2742 = vshrl.u32 %v2741, 7
      %v2743 = vsub.s32 %v2740, %v2742
      %v2744 = vrot.slane %v2734, %v2743
      %v2746 = vunpack.c.l.s4 1966171168
      %v2747 = vunpack.c.0.s8 %v2746
      %v2748 = vlaneseq
      %v2749 = vshrl.u32 %v2748, 7
      %v2750 = vsub.s32 %v2747, %v2749
      %v2751 = vrot.slane %v2735, %v2750
      %v2753 = vunpack.c.l.s4 1966171168
      %v2754 = vunpack.c.0.s8 %v2753
      %v2755 = vlaneseq
      %v2756 = vshrl.u32 %v2755, 7
      %v2757 = vsub.s32 %v2754, %v2756
      %v2758 = vrot.slane %v2736, %v2757
      %v2760 = vunpack.c.l.s4 1966171168
      %v2761 = vunpack.c.0.s8 %v2760
      %v2762 = vlaneseq
      %v2763 = vshrl.u32 %v2762, 7
      %v2764 = vsub.s32 %v2761, %v2763
      %v2765 = vrot.slane %v2737, %v2764
      %v2766 = vcombine.low %v2744, %v2751
      %v2767 = vcombine.low %v2758, %v2765
      %v2769 = vunpack.c.l.s4 1966171168
      %v2770 = vunpack.c.0.s8 %v2769
      %v2771 = vlaneseq
      %v2772 = vshrl.u32 %v2771, 7
      %v2773 = vsub.s32 %v2770, %v2772
      %v2774 = vrot.slane %v2766, %v2773
      %v2776 = vunpack.c.l.s4 1966171168
      %v2777 = vunpack.c.0.s8 %v2776
      %v2778 = vlaneseq
      %v2779 = vshrl.u32 %v2778, 7
      %v2780 = vsub.s32 %v2777, %v2779
      %v2781 = vrot.slane %v2767, %v2780
      %v2782 = vcombine.low %v2774, %v2781
      %v2783 = vcombine.low %v1490, %v1494
      %v2784 = vcombine.low %v1498, %v1502
      %v2785 = vcombine.low %v1506, %v1510
      %v2786 = vcombine.low %v1514, %v1518
      %v2788 = vunpack.c.l.s4 1966171168
      %v2789 = vunpack.c.0.s8 %v2788
      %v2790 = vlaneseq
      %v2791 = vshrl.u32 %v2790, 7
      %v2792 = vsub.s32 %v2789, %v2791
      %v2793 = vrot.slane %v2783, %v2792
      %v2795 = vunpack.c.l.s4 1966171168
      %v2796 = vunpack.c.0.s8 %v2795
      %v2797 = vlaneseq
      %v2798 = vshrl.u32 %v2797, 7
      %v2799 = vsub.s32 %v2796, %v2798
      %v2800 = vrot.slane %v2784, %v2799
      %v2802 = vunpack.c.l.s4 1966171168
      %v2803 = vunpack.c.0.s8 %v2802
      %v2804 = vlaneseq
      %v2805 = vshrl.u32 %v2804, 7
      %v2806 = vsub.s32 %v2803, %v2805
      %v2807 = vrot.slane %v2785, %v2806
      %v2809 = vunpack.c.l.s4 1966171168
      %v2810 = vunpack.c.0.s8 %v2809
      %v2811 = vlaneseq
      %v2812 = vshrl.u32 %v2811, 7
      %v2813 = vsub.s32 %v2810, %v2812
      %v2814 = vrot.slane %v2786, %v2813
      %v2815 = vcombine.low %v2793, %v2800
      %v2816 = vcombine.low %v2807, %v2814
      %v2818 = vunpack.c.l.s4 1966171168
      %v2819 = vunpack.c.0.s8 %v2818
      %v2820 = vlaneseq
      %v2821 = vshrl.u32 %v2820, 7
      %v2822 = vsub.s32 %v2819, %v2821
      %v2823 = vrot.slane %v2815, %v2822
      %v2825 = vunpack.c.l.s4 1966171168
      %v2826 = vunpack.c.0.s8 %v2825
      %v2827 = vlaneseq
      %v2828 = vshrl.u32 %v2827, 7
      %v2829 = vsub.s32 %v2826, %v2828
      %v2830 = vrot.slane %v2816, %v2829
      %v2831 = vcombine.low %v2823, %v2830
      %v2832 = vcombine.low %v1522, %v1526
      %v2833 = vcombine.low %v1530, %v1534
      %v2834 = vcombine.low %v1538, %v1542
      %v2835 = vcombine.low %v1546, %v1550
      %v2837 = vunpack.c.l.s4 1966171168
      %v2838 = vunpack.c.0.s8 %v2837
      %v2839 = vlaneseq
      %v2840 = vshrl.u32 %v2839, 7
      %v2841 = vsub.s32 %v2838, %v2840
      %v2842 = vrot.slane %v2832, %v2841
      %v2844 = vunpack.c.l.s4 1966171168
      %v2845 = vunpack.c.0.s8 %v2844
      %v2846 = vlaneseq
      %v2847 = vshrl.u32 %v2846, 7
      %v2848 = vsub.s32 %v2845, %v2847
      %v2849 = vrot.slane %v2833, %v2848
      %v2851 = vunpack.c.l.s4 1966171168
      %v2852 = vunpack.c.0.s8 %v2851
      %v2853 = vlaneseq
      %v2854 = vshrl.u32 %v2853, 7
      %v2855 = vsub.s32 %v2852, %v2854
      %v2856 = vrot.slane %v2834, %v2855
      %v2858 = vunpack.c.l.s4 1966171168
      %v2859 = vunpack.c.0.s8 %v2858
      %v2860 = vlaneseq
      %v2861 = vshrl.u32 %v2860, 7
      %v2862 = vsub.s32 %v2859, %v2861
      %v2863 = vrot.slane %v2835, %v2862
      %v2864 = vcombine.low %v2842, %v2849
      %v2865 = vcombine.low %v2856, %v2863
      %v2867 = vunpack.c.l.s4 1966171168
      %v2868 = vunpack.c.0.s8 %v2867
      %v2869 = vlaneseq
      %v2870 = vshrl.u32 %v2869, 7
      %v2871 = vsub.s32 %v2868, %v2870
      %v2872 = vrot.slane %v2864, %v2871
      %v2874 = vunpack.c.l.s4 1966171168
      %v2875 = vunpack.c.0.s8 %v2874
      %v2876 = vlaneseq
      %v2877 = vshrl.u32 %v2876, 7
      %v2878 = vsub.s32 %v2875, %v2877
      %v2879 = vrot.slane %v2865, %v2878
      %v2880 = vcombine.low %v2872, %v2879
      %v2881 = vcombine.low %v1554, %v1558
      %v2882 = vcombine.low %v1562, %v1566
      %v2883 = vcombine.low %v1570, %v1574
      %v2884 = vcombine.low %v1578, %v1582
      %v2886 = vunpack.c.l.s4 1966171168
      %v2887 = vunpack.c.0.s8 %v2886
      %v2888 = vlaneseq
      %v2889 = vshrl.u32 %v2888, 7
      %v2890 = vsub.s32 %v2887, %v2889
      %v2891 = vrot.slane %v2881, %v2890
      %v2893 = vunpack.c.l.s4 1966171168
      %v2894 = vunpack.c.0.s8 %v2893
      %v2895 = vlaneseq
      %v2896 = vshrl.u32 %v2895, 7
      %v2897 = vsub.s32 %v2894, %v2896
      %v2898 = vrot.slane %v2882, %v2897
      %v2900 = vunpack.c.l.s4 1966171168
      %v2901 = vunpack.c.0.s8 %v2900
      %v2902 = vlaneseq
      %v2903 = vshrl.u32 %v2902, 7
      %v2904 = vsub.s32 %v2901, %v2903
      %v2905 = vrot.slane %v2883, %v2904
      %v2907 = vunpack.c.l.s4 1966171168
      %v2908 = vunpack.c.0.s8 %v2907
      %v2909 = vlaneseq
      %v2910 = vshrl.u32 %v2909, 7
      %v2911 = vsub.s32 %v2908, %v2910
      %v2912 = vrot.slane %v2884, %v2911
      %v2913 = vcombine.low %v2891, %v2898
      %v2914 = vcombine.low %v2905, %v2912
      %v2916 = vunpack.c.l.s4 1966171168
      %v2917 = vunpack.c.0.s8 %v2916
      %v2918 = vlaneseq
      %v2919 = vshrl.u32 %v2918, 7
      %v2920 = vsub.s32 %v2917, %v2919
      %v2921 = vrot.slane %v2913, %v2920
      %v2923 = vunpack.c.l.s4 1966171168
      %v2924 = vunpack.c.0.s8 %v2923
      %v2925 = vlaneseq
      %v2926 = vshrl.u32 %v2925, 7
      %v2927 = vsub.s32 %v2924, %v2926
      %v2928 = vrot.slane %v2914, %v2927
      %v2929 = vcombine.low %v2921, %v2928
      %v2930 = vcombine.low %v1586, %v1590
      %v2931 = vcombine.low %v1594, %v1598
      %v2932 = vcombine.low %v1602, %v1606
      %v2933 = vcombine.low %v1610, %v1614
      %v2935 = vunpack.c.l.s4 1966171168
      %v2936 = vunpack.c.0.s8 %v2935
      %v2937 = vlaneseq
      %v2938 = vshrl.u32 %v2937, 7
      %v2939 = vsub.s32 %v2936, %v2938
      %v2940 = vrot.slane %v2930, %v2939
      %v2942 = vunpack.c.l.s4 1966171168
      %v2943 = vunpack.c.0.s8 %v2942
      %v2944 = vlaneseq
      %v2945 = vshrl.u32 %v2944, 7
      %v2946 = vsub.s32 %v2943, %v2945
      %v2947 = vrot.slane %v2931, %v2946
      %v2949 = vunpack.c.l.s4 1966171168
      %v2950 = vunpack.c.0.s8 %v2949
      %v2951 = vlaneseq
      %v2952 = vshrl.u32 %v2951, 7
      %v2953 = vsub.s32 %v2950, %v2952
      %v2954 = vrot.slane %v2932, %v2953
      %v2956 = vunpack.c.l.s4 1966171168
      %v2957 = vunpack.c.0.s8 %v2956
      %v2958 = vlaneseq
      %v2959 = vshrl.u32 %v2958, 7
      %v2960 = vsub.s32 %v2957, %v2959
      %v2961 = vrot.slane %v2933, %v2960
      %v2962 = vcombine.low %v2940, %v2947
      %v2963 = vcombine.low %v2954, %v2961
      %v2965 = vunpack.c.l.s4 1966171168
      %v2966 = vunpack.c.0.s8 %v2965
      %v2967 = vlaneseq
      %v2968 = vshrl.u32 %v2967, 7
      %v2969 = vsub.s32 %v2966, %v2968
      %v2970 = vrot.slane %v2962, %v2969
      %v2972 = vunpack.c.l.s4 1966171168
      %v2973 = vunpack.c.0.s8 %v2972
      %v2974 = vlaneseq
      %v2975 = vshrl.u32 %v2974, 7
      %v2976 = vsub.s32 %v2973, %v2975
      %v2977 = vrot.slane %v2963, %v2976
      %v2978 = vcombine.low %v2970, %v2977
      %v2979 = vcombine.low %v1618, %v1622
      %v2980 = vcombine.low %v1626, %v1630
      %v2981 = vcombine.low %v1634, %v1638
      %v2982 = vcombine.low %v1642, %v1646
      %v2984 = vunpack.c.l.s4 1966171168
      %v2985 = vunpack.c.0.s8 %v2984
      %v2986 = vlaneseq
      %v2987 = vshrl.u32 %v2986, 7
      %v2988 = vsub.s32 %v2985, %v2987
      %v2989 = vrot.slane %v2979, %v2988
      %v2991 = vunpack.c.l.s4 1966171168
      %v2992 = vunpack.c.0.s8 %v2991
      %v2993 = vlaneseq
      %v2994 = vshrl.u32 %v2993, 7
      %v2995 = vsub.s32 %v2992, %v2994
      %v2996 = vrot.slane %v2980, %v2995
      %v2998 = vunpack.c.l.s4 1966171168
      %v2999 = vunpack.c.0.s8 %v2998
      %v3000 = vlaneseq
      %v3001 = vshrl.u32 %v3000, 7
      %v3002 = vsub.s32 %v2999, %v3001
      %v3003 = vrot.slane %v2981, %v3002
      %v3005 = vunpack.c.l.s4 1966171168
      %v3006 = vunpack.c.0.s8 %v3005
      %v3007 = vlaneseq
      %v3008 = vshrl.u32 %v3007, 7
      %v3009 = vsub.s32 %v3006, %v3008
      %v3010 = vrot.slane %v2982, %v3009
      %v3011 = vcombine.low %v2989, %v2996
      %v3012 = vcombine.low %v3003, %v3010
      %v3014 = vunpack.c.l.s4 1966171168
      %v3015 = vunpack.c.0.s8 %v3014
      %v3016 = vlaneseq
      %v3017 = vshrl.u32 %v3016, 7
      %v3018 = vsub.s32 %v3015, %v3017
      %v3019 = vrot.slane %v3011, %v3018
      %v3021 = vunpack.c.l.s4 1966171168
      %v3022 = vunpack.c.0.s8 %v3021
      %v3023 = vlaneseq
      %v3024 = vshrl.u32 %v3023, 7
      %v3025 = vsub.s32 %v3022, %v3024
      %v3026 = vrot.slane %v3012, %v3025
      %v3027 = vcombine.low %v3019, %v3026
      %v3028 = vcombine.low %v1650, %v1654
      %v3029 = vcombine.low %v1658, %v1662
      %v3030 = vcombine.low %v1666, %v1670
      %v3031 = vcombine.low %v1674, %v1678
      %v3033 = vunpack.c.l.s4 1966171168
      %v3034 = vunpack.c.0.s8 %v3033
      %v3035 = vlaneseq
      %v3036 = vshrl.u32 %v3035, 7
      %v3037 = vsub.s32 %v3034, %v3036
      %v3038 = vrot.slane %v3028, %v3037
      %v3040 = vunpack.c.l.s4 1966171168
      %v3041 = vunpack.c.0.s8 %v3040
      %v3042 = vlaneseq
      %v3043 = vshrl.u32 %v3042, 7
      %v3044 = vsub.s32 %v3041, %v3043
      %v3045 = vrot.slane %v3029, %v3044
      %v3047 = vunpack.c.l.s4 1966171168
      %v3048 = vunpack.c.0.s8 %v3047
      %v3049 = vlaneseq
      %v3050 = vshrl.u32 %v3049, 7
      %v3051 = vsub.s32 %v3048, %v3050
      %v3052 = vrot.slane %v3030, %v3051
      %v3054 = vunpack.c.l.s4 1966171168
      %v3055 = vunpack.c.0.s8 %v3054
      %v3056 = vlaneseq
      %v3057 = vshrl.u32 %v3056, 7
      %v3058 = vsub.s32 %v3055, %v3057
      %v3059 = vrot.slane %v3031, %v3058
      %v3060 = vcombine.low %v3038, %v3045
      %v3061 = vcombine.low %v3052, %v3059
      %v3063 = vunpack.c.l.s4 1966171168
      %v3064 = vunpack.c.0.s8 %v3063
      %v3065 = vlaneseq
      %v3066 = vshrl.u32 %v3065, 7
      %v3067 = vsub.s32 %v3064, %v3066
      %v3068 = vrot.slane %v3060, %v3067
      %v3070 = vunpack.c.l.s4 1966171168
      %v3071 = vunpack.c.0.s8 %v3070
      %v3072 = vlaneseq
      %v3073 = vshrl.u32 %v3072, 7
      %v3074 = vsub.s32 %v3071, %v3073
      %v3075 = vrot.slane %v3061, %v3074
      %v3076 = vcombine.low %v3068, %v3075
      %v3077 = vcombine.low %v1682, %v1686
      %v3078 = vcombine.low %v1690, %v1694
      %v3079 = vcombine.low %v1698, %v1702
      %v3080 = vcombine.low %v1706, %v1710
      %v3082 = vunpack.c.l.s4 1966171168
      %v3083 = vunpack.c.0.s8 %v3082
      %v3084 = vlaneseq
      %v3085 = vshrl.u32 %v3084, 7
      %v3086 = vsub.s32 %v3083, %v3085
      %v3087 = vrot.slane %v3077, %v3086
      %v3089 = vunpack.c.l.s4 1966171168
      %v3090 = vunpack.c.0.s8 %v3089
      %v3091 = vlaneseq
      %v3092 = vshrl.u32 %v3091, 7
      %v3093 = vsub.s32 %v3090, %v3092
      %v3094 = vrot.slane %v3078, %v3093
      %v3096 = vunpack.c.l.s4 1966171168
      %v3097 = vunpack.c.0.s8 %v3096
      %v3098 = vlaneseq
      %v3099 = vshrl.u32 %v3098, 7
      %v3100 = vsub.s32 %v3097, %v3099
      %v3101 = vrot.slane %v3079, %v3100
      %v3103 = vunpack.c.l.s4 1966171168
      %v3104 = vunpack.c.0.s8 %v3103
      %v3105 = vlaneseq
      %v3106 = vshrl.u32 %v3105, 7
      %v3107 = vsub.s32 %v3104, %v3106
      %v3108 = vrot.slane %v3080, %v3107
      %v3109 = vcombine.low %v3087, %v3094
      %v3110 = vcombine.low %v3101, %v3108
      %v3112 = vunpack.c.l.s4 1966171168
      %v3113 = vunpack.c.0.s8 %v3112
      %v3114 = vlaneseq
      %v3115 = vshrl.u32 %v3114, 7
      %v3116 = vsub.s32 %v3113, %v3115
      %v3117 = vrot.slane %v3109, %v3116
      %v3119 = vunpack.c.l.s4 1966171168
      %v3120 = vunpack.c.0.s8 %v3119
      %v3121 = vlaneseq
      %v3122 = vshrl.u32 %v3121, 7
      %v3123 = vsub.s32 %v3120, %v3122
      %v3124 = vrot.slane %v3110, %v3123
      %v3125 = vcombine.low %v3117, %v3124
      %v3126 = vcombine.low %v1714, %v1718
      %v3127 = vcombine.low %v1722, %v1726
      %v3128 = vcombine.low %v1730, %v1734
      %v3129 = vcombine.low %v1738, %v1742
      %v3131 = vunpack.c.l.s4 1966171168
      %v3132 = vunpack.c.0.s8 %v3131
      %v3133 = vlaneseq
      %v3134 = vshrl.u32 %v3133, 7
      %v3135 = vsub.s32 %v3132, %v3134
      %v3136 = vrot.slane %v3126, %v3135
      %v3138 = vunpack.c.l.s4 1966171168
      %v3139 = vunpack.c.0.s8 %v3138
      %v3140 = vlaneseq
      %v3141 = vshrl.u32 %v3140, 7
      %v3142 = vsub.s32 %v3139, %v3141
      %v3143 = vrot.slane %v3127, %v3142
      %v3145 = vunpack.c.l.s4 1966171168
      %v3146 = vunpack.c.0.s8 %v3145
      %v3147 = vlaneseq
      %v3148 = vshrl.u32 %v3147, 7
      %v3149 = vsub.s32 %v3146, %v3148
      %v3150 = vrot.slane %v3128, %v3149
      %v3152 = vunpack.c.l.s4 1966171168
      %v3153 = vunpack.c.0.s8 %v3152
      %v3154 = vlaneseq
      %v3155 = vshrl.u32 %v3154, 7
      %v3156 = vsub.s32 %v3153, %v3155
      %v3157 = vrot.slane %v3129, %v3156
      %v3158 = vcombine.low %v3136, %v3143
      %v3159 = vcombine.low %v3150, %v3157
      %v3161 = vunpack.c.l.s4 1966171168
      %v3162 = vunpack.c.0.s8 %v3161
      %v3163 = vlaneseq
      %v3164 = vshrl.u32 %v3163, 7
      %v3165 = vsub.s32 %v3162, %v3164
      %v3166 = vrot.slane %v3158, %v3165
      %v3168 = vunpack.c.l.s4 1966171168
      %v3169 = vunpack.c.0.s8 %v3168
      %v3170 = vlaneseq
      %v3171 = vshrl.u32 %v3170, 7
      %v3172 = vsub.s32 %v3169, %v3171
      %v3173 = vrot.slane %v3159, %v3172
      %v3174 = vcombine.low %v3166, %v3173
      %v3175 = vcombine.low %v1746, %v1750
      %v3176 = vcombine.low %v1754, %v1758
      %v3177 = vcombine.low %v1762, %v1766
      %v3178 = vcombine.low %v1770, %v1774
      %v3180 = vunpack.c.l.s4 1966171168
      %v3181 = vunpack.c.0.s8 %v3180
      %v3182 = vlaneseq
      %v3183 = vshrl.u32 %v3182, 7
      %v3184 = vsub.s32 %v3181, %v3183
      %v3185 = vrot.slane %v3175, %v3184
      %v3187 = vunpack.c.l.s4 1966171168
      %v3188 = vunpack.c.0.s8 %v3187
      %v3189 = vlaneseq
      %v3190 = vshrl.u32 %v3189, 7
      %v3191 = vsub.s32 %v3188, %v3190
      %v3192 = vrot.slane %v3176, %v3191
      %v3194 = vunpack.c.l.s4 1966171168
      %v3195 = vunpack.c.0.s8 %v3194
      %v3196 = vlaneseq
      %v3197 = vshrl.u32 %v3196, 7
      %v3198 = vsub.s32 %v3195, %v3197
      %v3199 = vrot.slane %v3177, %v3198
      %v3201 = vunpack.c.l.s4 1966171168
      %v3202 = vunpack.c.0.s8 %v3201
      %v3203 = vlaneseq
      %v3204 = vshrl.u32 %v3203, 7
      %v3205 = vsub.s32 %v3202, %v3204
      %v3206 = vrot.slane %v3178, %v3205
      %v3207 = vcombine.low %v3185, %v3192
      %v3208 = vcombine.low %v3199, %v3206
      %v3210 = vunpack.c.l.s4 1966171168
      %v3211 = vunpack.c.0.s8 %v3210
      %v3212 = vlaneseq
      %v3213 = vshrl.u32 %v3212, 7
      %v3214 = vsub.s32 %v3211, %v3213
      %v3215 = vrot.slane %v3207, %v3214
      %v3217 = vunpack.c.l.s4 1966171168
      %v3218 = vunpack.c.0.s8 %v3217
      %v3219 = vlaneseq
      %v3220 = vshrl.u32 %v3219, 7
      %v3221 = vsub.s32 %v3218, %v3220
      %v3222 = vrot.slane %v3208, %v3221
      %v3223 = vcombine.low %v3215, %v3222
      %v3224 = vcombine.low %v1778, %v1782
      %v3225 = vcombine.low %v1786, %v1790
      %v3226 = vcombine.low %v1794, %v1798
      %v3227 = vcombine.low %v1802, %v1806
      %v3229 = vunpack.c.l.s4 1966171168
      %v3230 = vunpack.c.0.s8 %v3229
      %v3231 = vlaneseq
      %v3232 = vshrl.u32 %v3231, 7
      %v3233 = vsub.s32 %v3230, %v3232
      %v3234 = vrot.slane %v3224, %v3233
      %v3236 = vunpack.c.l.s4 1966171168
      %v3237 = vunpack.c.0.s8 %v3236
      %v3238 = vlaneseq
      %v3239 = vshrl.u32 %v3238, 7
      %v3240 = vsub.s32 %v3237, %v3239
      %v3241 = vrot.slane %v3225, %v3240
      %v3243 = vunpack.c.l.s4 1966171168
      %v3244 = vunpack.c.0.s8 %v3243
      %v3245 = vlaneseq
      %v3246 = vshrl.u32 %v3245, 7
      %v3247 = vsub.s32 %v3244, %v3246
      %v3248 = vrot.slane %v3226, %v3247
      %v3250 = vunpack.c.l.s4 1966171168
      %v3251 = vunpack.c.0.s8 %v3250
      %v3252 = vlaneseq
      %v3253 = vshrl.u32 %v3252, 7
      %v3254 = vsub.s32 %v3251, %v3253
      %v3255 = vrot.slane %v3227, %v3254
      %v3256 = vcombine.low %v3234, %v3241
      %v3257 = vcombine.low %v3248, %v3255
      %v3259 = vunpack.c.l.s4 1966171168
      %v3260 = vunpack.c.0.s8 %v3259
      %v3261 = vlaneseq
      %v3262 = vshrl.u32 %v3261, 7
      %v3263 = vsub.s32 %v3260, %v3262
      %v3264 = vrot.slane %v3256, %v3263
      %v3266 = vunpack.c.l.s4 1966171168
      %v3267 = vunpack.c.0.s8 %v3266
      %v3268 = vlaneseq
      %v3269 = vshrl.u32 %v3268, 7
      %v3270 = vsub.s32 %v3267, %v3269
      %v3271 = vrot.slane %v3257, %v3270
      %v3272 = vcombine.low %v3264, %v3271
      %v3273 = vcombine.low %v1810, %v1814
      %v3274 = vcombine.low %v1818, %v1822
      %v3275 = vcombine.low %v1826, %v1830
      %v3276 = vcombine.low %v1834, %v1838
      %v3278 = vunpack.c.l.s4 1966171168
      %v3279 = vunpack.c.0.s8 %v3278
      %v3280 = vlaneseq
      %v3281 = vshrl.u32 %v3280, 7
      %v3282 = vsub.s32 %v3279, %v3281
      %v3283 = vrot.slane %v3273, %v3282
      %v3285 = vunpack.c.l.s4 1966171168
      %v3286 = vunpack.c.0.s8 %v3285
      %v3287 = vlaneseq
      %v3288 = vshrl.u32 %v3287, 7
      %v3289 = vsub.s32 %v3286, %v3288
      %v3290 = vrot.slane %v3274, %v3289
      %v3292 = vunpack.c.l.s4 1966171168
      %v3293 = vunpack.c.0.s8 %v3292
      %v3294 = vlaneseq
      %v3295 = vshrl.u32 %v3294, 7
      %v3296 = vsub.s32 %v3293, %v3295
      %v3297 = vrot.slane %v3275, %v3296
      %v3299 = vunpack.c.l.s4 1966171168
      %v3300 = vunpack.c.0.s8 %v3299
      %v3301 = vlaneseq
      %v3302 = vshrl.u32 %v3301, 7
      %v3303 = vsub.s32 %v3300, %v3302
      %v3304 = vrot.slane %v3276, %v3303
      %v3305 = vcombine.low %v3283, %v3290
      %v3306 = vcombine.low %v3297, %v3304
      %v3308 = vunpack.c.l.s4 1966171168
      %v3309 = vunpack.c.0.s8 %v3308
      %v3310 = vlaneseq
      %v3311 = vshrl.u32 %v3310, 7
      %v3312 = vsub.s32 %v3309, %v3311
      %v3313 = vrot.slane %v3305, %v3312
      %v3315 = vunpack.c.l.s4 1966171168
      %v3316 = vunpack.c.0.s8 %v3315
      %v3317 = vlaneseq
      %v3318 = vshrl.u32 %v3317, 7
      %v3319 = vsub.s32 %v3316, %v3318
      %v3320 = vrot.slane %v3306, %v3319
      %v3321 = vcombine.low %v3313, %v3320
      %v3322 = vcombine.low %v1842, %v1846
      %v3323 = vcombine.low %v1850, %v1854
      %v3324 = vcombine.low %v1858, %v1862
      %v3325 = vcombine.low %v1866, %v1870
      %v3327 = vunpack.c.l.s4 1966171168
      %v3328 = vunpack.c.0.s8 %v3327
      %v3329 = vlaneseq
      %v3330 = vshrl.u32 %v3329, 7
      %v3331 = vsub.s32 %v3328, %v3330
      %v3332 = vrot.slane %v3322, %v3331
      %v3334 = vunpack.c.l.s4 1966171168
      %v3335 = vunpack.c.0.s8 %v3334
      %v3336 = vlaneseq
      %v3337 = vshrl.u32 %v3336, 7
      %v3338 = vsub.s32 %v3335, %v3337
      %v3339 = vrot.slane %v3323, %v3338
      %v3341 = vunpack.c.l.s4 1966171168
      %v3342 = vunpack.c.0.s8 %v3341
      %v3343 = vlaneseq
      %v3344 = vshrl.u32 %v3343, 7
      %v3345 = vsub.s32 %v3342, %v3344
      %v3346 = vrot.slane %v3324, %v3345
      %v3348 = vunpack.c.l.s4 1966171168
      %v3349 = vunpack.c.0.s8 %v3348
      %v3350 = vlaneseq
      %v3351 = vshrl.u32 %v3350, 7
      %v3352 = vsub.s32 %v3349, %v3351
      %v3353 = vrot.slane %v3325, %v3352
      %v3354 = vcombine.low %v3332, %v3339
      %v3355 = vcombine.low %v3346, %v3353
      %v3357 = vunpack.c.l.s4 1966171168
      %v3358 = vunpack.c.0.s8 %v3357
      %v3359 = vlaneseq
      %v3360 = vshrl.u32 %v3359, 7
      %v3361 = vsub.s32 %v3358, %v3360
      %v3362 = vrot.slane %v3354, %v3361
      %v3364 = vunpack.c.l.s4 1966171168
      %v3365 = vunpack.c.0.s8 %v3364
      %v3366 = vlaneseq
      %v3367 = vshrl.u32 %v3366, 7
      %v3368 = vsub.s32 %v3365, %v3367
      %v3369 = vrot.slane %v3355, %v3368
      %v3370 = vcombine.low %v3362, %v3369
      %v3371 = vcombine.low %v1874, %v1878
      %v3372 = vcombine.low %v1882, %v1886
      %v3373 = vcombine.low %v1890, %v1894
      %v3374 = vcombine.low %v1898, %v1902
      %v3376 = vunpack.c.l.s4 1966171168
      %v3377 = vunpack.c.0.s8 %v3376
      %v3378 = vlaneseq
      %v3379 = vshrl.u32 %v3378, 7
      %v3380 = vsub.s32 %v3377, %v3379
      %v3381 = vrot.slane %v3371, %v3380
      %v3383 = vunpack.c.l.s4 1966171168
      %v3384 = vunpack.c.0.s8 %v3383
      %v3385 = vlaneseq
      %v3386 = vshrl.u32 %v3385, 7
      %v3387 = vsub.s32 %v3384, %v3386
      %v3388 = vrot.slane %v3372, %v3387
      %v3390 = vunpack.c.l.s4 1966171168
      %v3391 = vunpack.c.0.s8 %v3390
      %v3392 = vlaneseq
      %v3393 = vshrl.u32 %v3392, 7
      %v3394 = vsub.s32 %v3391, %v3393
      %v3395 = vrot.slane %v3373, %v3394
      %v3397 = vunpack.c.l.s4 1966171168
      %v3398 = vunpack.c.0.s8 %v3397
      %v3399 = vlaneseq
      %v3400 = vshrl.u32 %v3399, 7
      %v3401 = vsub.s32 %v3398, %v3400
      %v3402 = vrot.slane %v3374, %v3401
      %v3403 = vcombine.low %v3381, %v3388
      %v3404 = vcombine.low %v3395, %v3402
      %v3406 = vunpack.c.l.s4 1966171168
      %v3407 = vunpack.c.0.s8 %v3406
      %v3408 = vlaneseq
      %v3409 = vshrl.u32 %v3408, 7
      %v3410 = vsub.s32 %v3407, %v3409
      %v3411 = vrot.slane %v3403, %v3410
      %v3413 = vunpack.c.l.s4 1966171168
      %v3414 = vunpack.c.0.s8 %v3413
      %v3415 = vlaneseq
      %v3416 = vshrl.u32 %v3415, 7
      %v3417 = vsub.s32 %v3414, %v3416
      %v3418 = vrot.slane %v3404, %v3417
      %v3419 = vcombine.low %v3411, %v3418
      %v3420 = vcombine.low %v1906, %v1910
      %v3421 = vcombine.low %v1914, %v1918
      %v3422 = vcombine.low %v1922, %v1926
      %v3423 = vcombine.low %v1930, %v1934
      %v3425 = vunpack.c.l.s4 1966171168
      %v3426 = vunpack.c.0.s8 %v3425
      %v3427 = vlaneseq
      %v3428 = vshrl.u32 %v3427, 7
      %v3429 = vsub.s32 %v3426, %v3428
      %v3430 = vrot.slane %v3420, %v3429
      %v3432 = vunpack.c.l.s4 1966171168
      %v3433 = vunpack.c.0.s8 %v3432
      %v3434 = vlaneseq
      %v3435 = vshrl.u32 %v3434, 7
      %v3436 = vsub.s32 %v3433, %v3435
      %v3437 = vrot.slane %v3421, %v3436
      %v3439 = vunpack.c.l.s4 1966171168
      %v3440 = vunpack.c.0.s8 %v3439
      %v3441 = vlaneseq
      %v3442 = vshrl.u32 %v3441, 7
      %v3443 = vsub.s32 %v3440, %v3442
      %v3444 = vrot.slane %v3422, %v3443
      %v3446 = vunpack.c.l.s4 1966171168
      %v3447 = vunpack.c.0.s8 %v3446
      %v3448 = vlaneseq
      %v3449 = vshrl.u32 %v3448, 7
      %v3450 = vsub.s32 %v3447, %v3449
      %v3451 = vrot.slane %v3423, %v3450
      %v3452 = vcombine.low %v3430, %v3437
      %v3453 = vcombine.low %v3444, %v3451
      %v3455 = vunpack.c.l.s4 1966171168
      %v3456 = vunpack.c.0.s8 %v3455
      %v3457 = vlaneseq
      %v3458 = vshrl.u32 %v3457, 7
      %v3459 = vsub.s32 %v3456, %v3458
      %v3460 = vrot.slane %v3452, %v3459
      %v3462 = vunpack.c.l.s4 1966171168
      %v3463 = vunpack.c.0.s8 %v3462
      %v3464 = vlaneseq
      %v3465 = vshrl.u32 %v3464, 7
      %v3466 = vsub.s32 %v3463, %v3465
      %v3467 = vrot.slane %v3453, %v3466
      %v3468 = vcombine.low %v3460, %v3467
      %v3469 = vcombine.low %v1938, %v1942
      %v3470 = vcombine.low %v1946, %v1950
      %v3471 = vcombine.low %v1954, %v1958
      %v3472 = vcombine.low %v1962, %v1966
      %v3474 = vunpack.c.l.s4 1966171168
      %v3475 = vunpack.c.0.s8 %v3474
      %v3476 = vlaneseq
      %v3477 = vshrl.u32 %v3476, 7
      %v3478 = vsub.s32 %v3475, %v3477
      %v3479 = vrot.slane %v3469, %v3478
      %v3481 = vunpack.c.l.s4 1966171168
      %v3482 = vunpack.c.0.s8 %v3481
      %v3483 = vlaneseq
      %v3484 = vshrl.u32 %v3483, 7
      %v3485 = vsub.s32 %v3482, %v3484
      %v3486 = vrot.slane %v3470, %v3485
      %v3488 = vunpack.c.l.s4 1966171168
      %v3489 = vunpack.c.0.s8 %v3488
      %v3490 = vlaneseq
      %v3491 = vshrl.u32 %v3490, 7
      %v3492 = vsub.s32 %v3489, %v3491
      %v3493 = vrot.slane %v3471, %v3492
      %v3495 = vunpack.c.l.s4 1966171168
      %v3496 = vunpack.c.0.s8 %v3495
      %v3497 = vlaneseq
      %v3498 = vshrl.u32 %v3497, 7
      %v3499 = vsub.s32 %v3496, %v3498
      %v3500 = vrot.slane %v3472, %v3499
      %v3501 = vcombine.low %v3479, %v3486
      %v3502 = vcombine.low %v3493, %v3500
      %v3504 = vunpack.c.l.s4 1966171168
      %v3505 = vunpack.c.0.s8 %v3504
      %v3506 = vlaneseq
      %v3507 = vshrl.u32 %v3506, 7
      %v3508 = vsub.s32 %v3505, %v3507
      %v3509 = vrot.slane %v3501, %v3508
      %v3511 = vunpack.c.l.s4 1966171168
      %v3512 = vunpack.c.0.s8 %v3511
      %v3513 = vlaneseq
      %v3514 = vshrl.u32 %v3513, 7
      %v3515 = vsub.s32 %v3512, %v3514
      %v3516 = vrot.slane %v3502, %v3515
      %v3517 = vcombine.low %v3509, %v3516
      %v3518 = vcombine.low %v1970, %v1974
      %v3519 = vcombine.low %v1978, %v1982
      %v3520 = vcombine.low %v1986, %v1990
      %v3521 = vcombine.low %v1994, %v1998
      %v3523 = vunpack.c.l.s4 1966171168
      %v3524 = vunpack.c.0.s8 %v3523
      %v3525 = vlaneseq
      %v3526 = vshrl.u32 %v3525, 7
      %v3527 = vsub.s32 %v3524, %v3526
      %v3528 = vrot.slane %v3518, %v3527
      %v3530 = vunpack.c.l.s4 1966171168
      %v3531 = vunpack.c.0.s8 %v3530
      %v3532 = vlaneseq
      %v3533 = vshrl.u32 %v3532, 7
      %v3534 = vsub.s32 %v3531, %v3533
      %v3535 = vrot.slane %v3519, %v3534
      %v3537 = vunpack.c.l.s4 1966171168
      %v3538 = vunpack.c.0.s8 %v3537
      %v3539 = vlaneseq
      %v3540 = vshrl.u32 %v3539, 7
      %v3541 = vsub.s32 %v3538, %v3540
      %v3542 = vrot.slane %v3520, %v3541
      %v3544 = vunpack.c.l.s4 1966171168
      %v3545 = vunpack.c.0.s8 %v3544
      %v3546 = vlaneseq
      %v3547 = vshrl.u32 %v3546, 7
      %v3548 = vsub.s32 %v3545, %v3547
      %v3549 = vrot.slane %v3521, %v3548
      %v3550 = vcombine.low %v3528, %v3535
      %v3551 = vcombine.low %v3542, %v3549
      %v3553 = vunpack.c.l.s4 1966171168
      %v3554 = vunpack.c.0.s8 %v3553
      %v3555 = vlaneseq
      %v3556 = vshrl.u32 %v3555, 7
      %v3557 = vsub.s32 %v3554, %v3556
      %v3558 = vrot.slane %v3550, %v3557
      %v3560 = vunpack.c.l.s4 1966171168
      %v3561 = vunpack.c.0.s8 %v3560
      %v3562 = vlaneseq
      %v3563 = vshrl.u32 %v3562, 7
      %v3564 = vsub.s32 %v3561, %v3563
      %v3565 = vrot.slane %v3551, %v3564
      %v3566 = vcombine.low %v3558, %v3565
      %3567 = vset.pattern.permute.xlu0 0
      %3568 = vperm.xlu0 %3567, %v2047
      %v3569 = vpop.permute.xlu0 %3568
      %3570 = vset.pattern.permute.xlu0 0
      %3571 = vperm.xlu0 %3570, %v2096
      %v3572 = vpop.permute.xlu0 %3571
      %3573 = vset.pattern.permute.xlu0 0
      %3574 = vperm.xlu0 %3573, %v2145
      %v3575 = vpop.permute.xlu0 %3574
      %3576 = vset.pattern.permute.xlu0 0
      %3577 = vperm.xlu0 %3576, %v2194
      %v3578 = vpop.permute.xlu0 %3577
      %3579 = vset.pattern.permute.xlu0 0
      %3580 = vperm.xlu0 %3579, %v2243
      %v3581 = vpop.permute.xlu0 %3580
      %3582 = vset.pattern.permute.xlu0 0
      %3583 = vperm.xlu0 %3582, %v2292
      %v3584 = vpop.permute.xlu0 %3583
      %3585 = vset.pattern.permute.xlu0 0
      %3586 = vperm.xlu0 %3585, %v2341
      %v3587 = vpop.permute.xlu0 %3586
      %3588 = vset.pattern.permute.xlu0 0
      %3589 = vperm.xlu0 %3588, %v2390
      %v3590 = vpop.permute.xlu0 %3589
      %3591 = vset.pattern.permute.xlu0 0
      %3592 = vperm.xlu0 %3591, %v2439
      %v3593 = vpop.permute.xlu0 %3592
      %3594 = vset.pattern.permute.xlu0 0
      %3595 = vperm.xlu0 %3594, %v2488
      %v3596 = vpop.permute.xlu0 %3595
      %3597 = vset.pattern.permute.xlu0 0
      %3598 = vperm.xlu0 %3597, %v2537
      %v3599 = vpop.permute.xlu0 %3598
      %3600 = vset.pattern.permute.xlu0 0
      %3601 = vperm.xlu0 %3600, %v2586
      %v3602 = vpop.permute.xlu0 %3601
      %3603 = vset.pattern.permute.xlu0 0
      %3604 = vperm.xlu0 %3603, %v2635
      %v3605 = vpop.permute.xlu0 %3604
      %3606 = vset.pattern.permute.xlu0 0
      %3607 = vperm.xlu0 %3606, %v2684
      %v3608 = vpop.permute.xlu0 %3607
      %3609 = vset.pattern.permute.xlu0 0
      %3610 = vperm.xlu0 %3609, %v2733
      %v3611 = vpop.permute.xlu0 %3610
      %3612 = vset.pattern.permute.xlu0 0
      %3613 = vperm.xlu0 %3612, %v2782
      %v3614 = vpop.permute.xlu0 %3613
      %3615 = vset.pattern.permute.xlu0 0
      %3616 = vperm.xlu0 %3615, %v2831
      %v3617 = vpop.permute.xlu0 %3616
      %3618 = vset.pattern.permute.xlu0 0
      %3619 = vperm.xlu0 %3618, %v2880
      %v3620 = vpop.permute.xlu0 %3619
      %3621 = vset.pattern.permute.xlu0 0
      %3622 = vperm.xlu0 %3621, %v2929
      %v3623 = vpop.permute.xlu0 %3622
      %3624 = vset.pattern.permute.xlu0 0
      %3625 = vperm.xlu0 %3624, %v2978
      %v3626 = vpop.permute.xlu0 %3625
      %3627 = vset.pattern.permute.xlu0 0
      %3628 = vperm.xlu0 %3627, %v3027
      %v3629 = vpop.permute.xlu0 %3628
      %3630 = vset.pattern.permute.xlu0 0
      %3631 = vperm.xlu0 %3630, %v3076
      %v3632 = vpop.permute.xlu0 %3631
      %3633 = vset.pattern.permute.xlu0 0
      %3634 = vperm.xlu0 %3633, %v3125
      %v3635 = vpop.permute.xlu0 %3634
      %3636 = vset.pattern.permute.xlu0 0
      %3637 = vperm.xlu0 %3636, %v3174
      %v3638 = vpop.permute.xlu0 %3637
      %3639 = vset.pattern.permute.xlu0 0
      %3640 = vperm.xlu0 %3639, %v3223
      %v3641 = vpop.permute.xlu0 %3640
      %3642 = vset.pattern.permute.xlu0 0
      %3643 = vperm.xlu0 %3642, %v3272
      %v3644 = vpop.permute.xlu0 %3643
      %3645 = vset.pattern.permute.xlu0 0
      %3646 = vperm.xlu0 %3645, %v3321
      %v3647 = vpop.permute.xlu0 %3646
      %3648 = vset.pattern.permute.xlu0 0
      %3649 = vperm.xlu0 %3648, %v3370
      %v3650 = vpop.permute.xlu0 %3649
      %3651 = vset.pattern.permute.xlu0 0
      %3652 = vperm.xlu0 %3651, %v3419
      %v3653 = vpop.permute.xlu0 %3652
      %3654 = vset.pattern.permute.xlu0 0
      %3655 = vperm.xlu0 %3654, %v3468
      %v3656 = vpop.permute.xlu0 %3655
      %3657 = vset.pattern.permute.xlu0 0
      %3658 = vperm.xlu0 %3657, %v3517
      %v3659 = vpop.permute.xlu0 %3658
      %3660 = vset.pattern.permute.xlu0 0
      %3661 = vperm.xlu0 %3660, %v3566
      %v3662 = vpop.permute.xlu0 %3661
      %v3663 = vlaneseq
      %v3664 = vand.u32 %v3663, 127
      %v3665 = vlaneseq
      %v3666 = vshrl.u32 %v3665, 7
      %v3667 = vsub.s32 %v3664, %v3666
      %v3668 = vrot.slane %v3569, %v3667
      %v3669 = vadd.s32 %v3664, 4294967288
      %v3670 = vlaneseq
      %v3671 = vshrl.u32 %v3670, 7
      %v3672 = vsub.s32 %v3669, %v3671
      %v3673 = vrot.slane %v3572, %v3672
      %vm3674 = vcmask 130112
      %v3675 = vsel %vm3674, %v3673, %v3668
      %v3676 = vadd.s32 %v3664, 4294967280
      %v3677 = vlaneseq
      %v3678 = vshrl.u32 %v3677, 7
      %v3679 = vsub.s32 %v3676, %v3678
      %v3680 = vrot.slane %v3575, %v3679
      %vm3681 = vcmask 195712
      %v3682 = vsel %vm3681, %v3680, %v3675
      %v3683 = vadd.s32 %v3664, 4294967272
      %v3684 = vlaneseq
      %v3685 = vshrl.u32 %v3684, 7
      %v3686 = vsub.s32 %v3683, %v3685
      %v3687 = vrot.slane %v3578, %v3686
      %vm3688 = vcmask 261312
      %v3689 = vsel %vm3688, %v3687, %v3682
      %v3690 = vadd.s32 %v3664, 4294967264
      %v3691 = vlaneseq
      %v3692 = vshrl.u32 %v3691, 7
      %v3693 = vsub.s32 %v3690, %v3692
      %v3694 = vrot.slane %v3581, %v3693
      %vm3695 = vcmask 326912
      %v3696 = vsel %vm3695, %v3694, %v3689
      %v3697 = vadd.s32 %v3664, 4294967256
      %v3698 = vlaneseq
      %v3699 = vshrl.u32 %v3698, 7
      %v3700 = vsub.s32 %v3697, %v3699
      %v3701 = vrot.slane %v3584, %v3700
      %vm3702 = vcmask 392512
      %v3703 = vsel %vm3702, %v3701, %v3696
      %v3704 = vadd.s32 %v3664, 4294967248
      %v3705 = vlaneseq
      %v3706 = vshrl.u32 %v3705, 7
      %v3707 = vsub.s32 %v3704, %v3706
      %v3708 = vrot.slane %v3587, %v3707
      %vm3709 = vcmask 458112
      %v3710 = vsel %vm3709, %v3708, %v3703
      %v3711 = vadd.s32 %v3664, 4294967240
      %v3712 = vlaneseq
      %v3713 = vshrl.u32 %v3712, 7
      %v3714 = vsub.s32 %v3711, %v3713
      %v3715 = vrot.slane %v3590, %v3714
      %vm3716 = vcmask 523712
      %v3717 = vsel %vm3716, %v3715, %v3710
      %v3718 = vadd.s32 %v3664, 4294967232
      %v3719 = vlaneseq
      %v3720 = vshrl.u32 %v3719, 7
      %v3721 = vsub.s32 %v3718, %v3720
      %v3722 = vrot.slane %v3593, %v3721
      %vm3723 = vcmask 589312
      %v3724 = vsel %vm3723, %v3722, %v3717
      %v3725 = vadd.s32 %v3664, 4294967224
      %v3726 = vlaneseq
      %v3727 = vshrl.u32 %v3726, 7
      %v3728 = vsub.s32 %v3725, %v3727
      %v3729 = vrot.slane %v3596, %v3728
      %vm3730 = vcmask 654912
      %v3731 = vsel %vm3730, %v3729, %v3724
      %v3732 = vadd.s32 %v3664, 4294967216
      %v3733 = vlaneseq
      %v3734 = vshrl.u32 %v3733, 7
      %v3735 = vsub.s32 %v3732, %v3734
      %v3736 = vrot.slane %v3599, %v3735
      %vm3737 = vcmask 720512
      %v3738 = vsel %vm3737, %v3736, %v3731
      %v3739 = vadd.s32 %v3664, 4294967208
      %v3740 = vlaneseq
      %v3741 = vshrl.u32 %v3740, 7
      %v3742 = vsub.s32 %v3739, %v3741
      %v3743 = vrot.slane %v3602, %v3742
      %vm3744 = vcmask 786112
      %v3745 = vsel %vm3744, %v3743, %v3738
      %v3746 = vadd.s32 %v3664, 4294967200
      %v3747 = vlaneseq
      %v3748 = vshrl.u32 %v3747, 7
      %v3749 = vsub.s32 %v3746, %v3748
      %v3750 = vrot.slane %v3605, %v3749
      %vm3751 = vcmask 851712
      %v3752 = vsel %vm3751, %v3750, %v3745
      %v3753 = vadd.s32 %v3664, 4294967192
      %v3754 = vlaneseq
      %v3755 = vshrl.u32 %v3754, 7
      %v3756 = vsub.s32 %v3753, %v3755
      %v3757 = vrot.slane %v3608, %v3756
      %vm3758 = vcmask 917312
      %v3759 = vsel %vm3758, %v3757, %v3752
      %v3760 = vadd.s32 %v3664, 4294967184
      %v3761 = vlaneseq
      %v3762 = vshrl.u32 %v3761, 7
      %v3763 = vsub.s32 %v3760, %v3762
      %v3764 = vrot.slane %v3611, %v3763
      %vm3765 = vcmask 982912
      %v3766 = vsel %vm3765, %v3764, %v3759
      %v3767 = vadd.s32 %v3664, 4294967176
      %v3768 = vlaneseq
      %v3769 = vshrl.u32 %v3768, 7
      %v3770 = vsub.s32 %v3767, %v3769
      %v3771 = vrot.slane %v3614, %v3770
      %vm3772 = vcmask 1048512
      %v3773 = vsel %vm3772, %v3771, %v3766
      %v3774 = vlaneseq
      %v3775 = vshrl.u32 %v3774, 7
      %v3776 = vsub.s32 %v3664, %v3775
      %v3777 = vrot.slane %v3617, %v3776
      %v3778 = vlaneseq
      %v3779 = vshrl.u32 %v3778, 7
      %v3780 = vsub.s32 %v3669, %v3779
      %v3781 = vrot.slane %v3620, %v3780
      %v3782 = vsel %vm3674, %v3781, %v3777
      %v3783 = vlaneseq
      %v3784 = vshrl.u32 %v3783, 7
      %v3785 = vsub.s32 %v3676, %v3784
      %v3786 = vrot.slane %v3623, %v3785
      %v3787 = vsel %vm3681, %v3786, %v3782
      %v3788 = vlaneseq
      %v3789 = vshrl.u32 %v3788, 7
      %v3790 = vsub.s32 %v3683, %v3789
      %v3791 = vrot.slane %v3626, %v3790
      %v3792 = vsel %vm3688, %v3791, %v3787
      %v3793 = vlaneseq
      %v3794 = vshrl.u32 %v3793, 7
      %v3795 = vsub.s32 %v3690, %v3794
      %v3796 = vrot.slane %v3629, %v3795
      %v3797 = vsel %vm3695, %v3796, %v3792
      %v3798 = vlaneseq
      %v3799 = vshrl.u32 %v3798, 7
      %v3800 = vsub.s32 %v3697, %v3799
      %v3801 = vrot.slane %v3632, %v3800
      %v3802 = vsel %vm3702, %v3801, %v3797
      %v3803 = vlaneseq
      %v3804 = vshrl.u32 %v3803, 7
      %v3805 = vsub.s32 %v3704, %v3804
      %v3806 = vrot.slane %v3635, %v3805
      %v3807 = vsel %vm3709, %v3806, %v3802
      %v3808 = vlaneseq
      %v3809 = vshrl.u32 %v3808, 7
      %v3810 = vsub.s32 %v3711, %v3809
      %v3811 = vrot.slane %v3638, %v3810
      %v3812 = vsel %vm3716, %v3811, %v3807
      %v3813 = vlaneseq
      %v3814 = vshrl.u32 %v3813, 7
      %v3815 = vsub.s32 %v3718, %v3814
      %v3816 = vrot.slane %v3641, %v3815
      %v3817 = vsel %vm3723, %v3816, %v3812
      %v3818 = vlaneseq
      %v3819 = vshrl.u32 %v3818, 7
      %v3820 = vsub.s32 %v3725, %v3819
      %v3821 = vrot.slane %v3644, %v3820
      %v3822 = vsel %vm3730, %v3821, %v3817
      %v3823 = vlaneseq
      %v3824 = vshrl.u32 %v3823, 7
      %v3825 = vsub.s32 %v3732, %v3824
      %v3826 = vrot.slane %v3647, %v3825
      %v3827 = vsel %vm3737, %v3826, %v3822
      %v3828 = vlaneseq
      %v3829 = vshrl.u32 %v3828, 7
      %v3830 = vsub.s32 %v3739, %v3829
      %v3831 = vrot.slane %v3650, %v3830
      %v3832 = vsel %vm3744, %v3831, %v3827
      %v3833 = vlaneseq
      %v3834 = vshrl.u32 %v3833, 7
      %v3835 = vsub.s32 %v3746, %v3834
      %v3836 = vrot.slane %v3653, %v3835
      %v3837 = vsel %vm3751, %v3836, %v3832
      %v3838 = vlaneseq
      %v3839 = vshrl.u32 %v3838, 7
      %v3840 = vsub.s32 %v3753, %v3839
      %v3841 = vrot.slane %v3656, %v3840
      %v3842 = vsel %vm3758, %v3841, %v3837
      %v3843 = vlaneseq
      %v3844 = vshrl.u32 %v3843, 7
      %v3845 = vsub.s32 %v3760, %v3844
      %v3846 = vrot.slane %v3659, %v3845
      %v3847 = vsel %vm3765, %v3846, %v3842
      %v3848 = vlaneseq
      %v3849 = vshrl.u32 %v3848, 7
      %v3850 = vsub.s32 %v3767, %v3849
      %v3851 = vrot.slane %v3662, %v3850
      %v3852 = vsel %vm3772, %v3851, %v3847
      %v3853 = vcombine.low %v3773, %v3852
      %v3855 = vunpack.c.l.s4 1966171168
      %v3856 = vunpack.c.0.s8 %v3855
      %v3857 = vlaneseq
      %v3858 = vshrl.u32 %v3857, 7
      %v3859 = vsub.s32 %v3856, %v3858
      %v3860 = vrot.slane %v3853, %v3859
      %v3862 = vunpack.c.l.s4 1966171168
      %v3863 = vunpack.c.0.s8 %v3862
      %v3864 = vlaneseq
      %v3865 = vshrl.u32 %v3864, 7
      %v3866 = vsub.s32 %v3863, %v3865
      %v3867 = vrot.slane %v3860, %v3866
      %v3869 = vadd.f32 %v846, %v3867
      %v3870 = vlaneseq
      %vm3871 = vcmp.ge.s32.totalorder %v3870, 0
      %vm3872 = vcmp.lt.s32.totalorder %v3870, 256
      %vm3873 = vmand %vm3871, %vm3872
      %3874 = vst.msk [vmem:[#allocation3] sm:$0x3] %vm3873, %v3869
      // Predicated region
      $region49: #{local_refinement_unit.1} parent=43 // pred_check
        %p3875 = pneg %p351
      $region50: #{local_refinement_unit.1} parent=43 // pred_check_branch
        %3877 = sbr.rel (%p3875) target = $region52
      $region51: #{local_refinement_unit.1} parent=43 // pred_region
        %v3878 = vld [vmem:[#allocation3] sm:$0x3]
        %v3879 = vmul.f32 %v3878, 0.00390625
        %v3880 = vld [vmem:[#allocation2] sm:$0x3]
        %v3881 = vadd.f32 %v3879, %v3880
        %v3882 = vld [vmem:[%s4] sm:$0xff]
        %v3883 = vld [vmem:[%s4 + $0x8] sm:$0xff]
        %v3884 = vld [vmem:[%s4 + $0x10] sm:$0xff]
        %v3885 = vld [vmem:[%s4 + $0x18] sm:$0xff]
        %v3886 = vld [vmem:[%s4 + $0x20] sm:$0xff]
        %v3887 = vld [vmem:[%s4 + $0x28] sm:$0xff]
        %v3888 = vld [vmem:[%s4 + $0x30] sm:$0xff]
        %v3889 = vld [vmem:[%s4 + $0x38] sm:$0xff]
        %v3890 = vld [vmem:[%s4 + $0x40] sm:$0xff]
        %v3891 = vld [vmem:[%s4 + $0x48] sm:$0xff]
        %v3892 = vld [vmem:[%s4 + $0x50] sm:$0xff]
        %v3893 = vld [vmem:[%s4 + $0x58] sm:$0xff]
        %v3894 = vld [vmem:[%s4 + $0x60] sm:$0xff]
        %v3895 = vld [vmem:[%s4 + $0x68] sm:$0xff]
        %v3896 = vld [vmem:[%s4 + $0x70] sm:$0xff]
        %v3897 = vld [vmem:[%s4 + $0x78] sm:$0xff]
        %v3898 = vld [vmem:[%s4 + $0x80] sm:$0xff]
        %v3899 = vld [vmem:[%s4 + $0x88] sm:$0xff]
        %v3900 = vld [vmem:[%s4 + $0x90] sm:$0xff]
        %v3901 = vld [vmem:[%s4 + $0x98] sm:$0xff]
        %v3902 = vld [vmem:[%s4 + $0xa0] sm:$0xff]
        %v3903 = vld [vmem:[%s4 + $0xa8] sm:$0xff]
        %v3904 = vld [vmem:[%s4 + $0xb0] sm:$0xff]
        %v3905 = vld [vmem:[%s4 + $0xb8] sm:$0xff]
        %v3906 = vld [vmem:[%s4 + $0xc0] sm:$0xff]
        %v3907 = vld [vmem:[%s4 + $0xc8] sm:$0xff]
        %v3908 = vld [vmem:[%s4 + $0xd0] sm:$0xff]
        %v3909 = vld [vmem:[%s4 + $0xd8] sm:$0xff]
        %v3910 = vld [vmem:[%s4 + $0xe0] sm:$0xff]
        %v3911 = vld [vmem:[%s4 + $0xe8] sm:$0xff]
        %v3912 = vld [vmem:[%s4 + $0xf0] sm:$0xff]
        %v3913 = vld [vmem:[%s4 + $0xf8] sm:$0xff]
        %v3914 = vld [vmem:[%s5] sm:$0x1]
        %v3916 = vlaneseq
        %v3917 = vshrl.u32 %v3916, 7
        %v3918 = vsub.s32 0, %v3917
        %v3919 = vrot.slane %v3881, %v3918
        %v3920 = vlaneseq
        %v3921 = vshrl.u32 %v3920, 7
        %v3922 = vsub.s32 1, %v3921
        %v3923 = vrot.slane %v3881, %v3922
        %3926 = vmatprep.subr.mxu0 %v3883
        %3927 = vmatpush1.xpose.msra.mxu0 %v3882
        %3928 = vmatprep.subr.mxu0 %v3885
        %3929 = vmatpush1.xpose.msra.mxu0 %v3884
        %3930 = vmatprep.subr.mxu0 %v3887
        %3931 = vmatpush1.xpose.msra.mxu0 %v3886
        %3932 = vmatprep.subr.mxu0 %v3889
        %3933 = vmatpush1.xpose.msra.mxu0 %v3888
        %3934 = vmatprep.subr.mxu0 %v3891
        %3935 = vmatpush1.xpose.msra.mxu0 %v3890
        %3936 = vmatprep.subr.mxu0 %v3893
        %3937 = vmatpush1.xpose.msra.mxu0 %v3892
        %3938 = vmatprep.subr.mxu0 %v3895
        %3939 = vmatpush1.xpose.msra.mxu0 %v3894
        %3940 = vmatprep.subr.mxu0 %v3897
        %3941 = vmatpush1.xpose.msra.mxu0 %v3896
        %3942 = vmatprep.subr.mxu0 %v3899
        %3943 = vmatpush1.xpose.msra.mxu0 %v3898
        %3944 = vmatprep.subr.mxu0 %v3901
        %3945 = vmatpush1.xpose.msra.mxu0 %v3900
        %3946 = vmatprep.subr.mxu0 %v3903
        %3947 = vmatpush1.xpose.msra.mxu0 %v3902
        %3948 = vmatprep.subr.mxu0 %v3905
        %3949 = vmatpush1.xpose.msra.mxu0 %v3904
        %3950 = vmatprep.subr.mxu0 %v3907
        %3951 = vmatpush1.xpose.msra.mxu0 %v3906
        %3952 = vmatprep.subr.mxu0 %v3909
        %3953 = vmatpush1.xpose.msra.mxu0 %v3908
        %3954 = vmatprep.subr.mxu0 %v3911
        %3955 = vmatpush1.xpose.msra.mxu0 %v3910
        %3956 = vmatprep.subr.mxu0 %v3913
        %3957 = vmatpush1.xpose.msra.mxu0 %v3912
        %3958 = vmatprep.subr.mxu0 0.0
        %3959 = vmatpush1.xpose.msra.mxu0 0.0
        %3960 = vmatprep.subr.mxu0 0.0
        %3961 = vmatpush1.xpose.msra.mxu0 0.0
        %3962 = vmatprep.subr.mxu0 0.0
        %3963 = vmatpush1.xpose.msra.mxu0 0.0
        %3964 = vmatprep.subr.mxu0 0.0
        %3965 = vmatpush1.xpose.msra.mxu0 0.0
        %3966 = vmatprep.subr.mxu0 0.0
        %3967 = vmatpush1.xpose.msra.mxu0 0.0
        %3968 = vmatprep.subr.mxu0 0.0
        %3969 = vmatpush1.xpose.msra.mxu0 0.0
        %3970 = vmatprep.subr.mxu0 0.0
        %3971 = vmatpush1.xpose.msra.mxu0 0.0
        %3972 = vmatprep.subr.mxu0 0.0
        %3973 = vmatpush1.xpose.msra.mxu0 0.0
        %3974 = vmatprep.subr.mxu0 0.0
        %3975 = vmatpush1.xpose.msra.mxu0 0.0
        %3976 = vmatprep.subr.mxu0 0.0
        %3977 = vmatpush1.xpose.msra.mxu0 0.0
        %3978 = vmatprep.subr.mxu0 0.0
        %3979 = vmatpush1.xpose.msra.mxu0 0.0
        %3980 = vmatprep.subr.mxu0 0.0
        %3981 = vmatpush1.xpose.msra.mxu0 0.0
        %3982 = vmatprep.subr.mxu0 0.0
        %3983 = vmatpush1.xpose.msra.mxu0 0.0
        %3984 = vmatprep.subr.mxu0 0.0
        %3985 = vmatpush1.xpose.msra.mxu0 0.0
        %3986 = vmatprep.subr.mxu0 0.0
        %3987 = vmatpush1.xpose.msra.mxu0 0.0
        %3988 = vmatprep.subr.mxu0 0.0
        %3989 = vmatpush1.xpose.msra.mxu0 0.0
        %3990 = vmatprep.mubr.f32.mxu0 %v3923
        %3991 = vmatmul.mubr.f32.gmra.mrb[0].mxu0 %v3919
        %v3992 = vpop.f32.mrb[0].mxu0
        %v3993 = vadd.f32 %v3914, %v3992
        %v3994 = vpop.f32.mrb[0].mxu0
        %3995 = vdwg.mxu0
        %v3996 = vld [vmem:[%s335] sm:$0xff]
        %v3997 = vld [vmem:[%s335 + $0x8] sm:$0x1]
        %v3998 = vlaneseq
        %v3999 = vshrl.u32 %v3998, 7
        %v4000 = vsub.s32 0, %v3999
        %v4001 = vrot.slane %v3993, %v4000
        %v4002 = vadd.f32 %v3996, %v4001
        %v4003 = vadd.f32 %v3997, %v4001
        %4004 = vst [vmem:[%s350] sm:$0xff] %v4002
        %4005 = vst [vmem:[%s350 + $0x8] sm:$0x1] %v4003
      $region52: #{local_refinement_unit.1} parent=43 // pred_fallthru
        _
      %s4006 = smul.u32 2, %s24
      %p4007 = scmp.lt.s32.totalorder %s23, 1
      %s4008 = scalar_select %p4007, %s23, 1
      %p4009 = scmp.lt.s32.totalorder %s4006, 1
      %s4010 = scalar_select %p4009, %s4006, 1
      %s4011 = smul.addr %s4008, 64
      %s4012 = sadd.s32 %s4010, %s4011
      %s4013 = smul.addr %s4012, 8
      %s4014 = scalar_lea.vmem %s6, %s4013
      %p4015 = scmp.lt.s32.totalorder %s23, 1
      %s4016 = scalar_select %p4015, %s23, 1
      %s4017 = smul.addr %s4016, 2
      %s4018 = smul.addr %s4017, 8
      %s4019 = scalar_lea.vmem %s7, %s4018
      // Predicated region
      $region53: #{local_refinement_unit.1} parent=43 // pred_check
        %p4020 = pneg %p189
      $region54: #{local_refinement_unit.1} parent=43 // pred_check_branch
        %4022 = sbr.rel (%p4020) target = $region56
      $region55: #{local_refinement_unit.1} parent=43 // pred_region
        %s4023 = smul.u32 2, %s24
      $region56: #{local_refinement_unit.1} parent=43 // pred_fallthru
        _
      // Predicated region
      $region57: #{local_refinement_unit.1} parent=43 // pred_check
        %p4024 = pneg %p215
      $region58: #{local_refinement_unit.1} parent=43 // pred_check_branch
        %4026 = sbr.rel (%p4024) target = $region60
      $region59: #{local_refinement_unit.1} parent=43 // pred_region
        _
      $region60: #{local_refinement_unit.1} parent=43 // pred_fallthru
        _
    $region44: #{local_refinement_unit.1} parent=5 // pred_fallthru
      _
    %p4027 = scmp.le.s32.totalorder 2, %s14
    // Predicated region
    $region61: #{local_refinement_unit.1} parent=5 // pred_check
      %p4028 = pneg %p4027
    $region62: #{local_refinement_unit.1} parent=5 // pred_check_branch
      %4030 = sbr.rel (%p4028) target = $region64
    $region63: #{local_refinement_unit.1} parent=5 // pred_region
      %s4031 = ssub.s32 %s14, 2
      // Predicated region
      $region65: #{local_refinement_unit.1} parent=63 // pred_check
        %p4032 = pneg %p195
      $region66: #{local_refinement_unit.1} parent=63 // pred_check_branch
        %4034 = sbr.rel (%p4032) target = $region68
      $region67: #{local_refinement_unit.1} parent=63 // pred_region
        %s4035 = smul.u32 2, %s26
        %p4036 = scmp.lt.s32.totalorder %s25, 1
        %s4037 = scalar_select %p4036, %s25, 1
        %p4038 = scmp.lt.s32.totalorder %s4035, 1
        %s4039 = scalar_select %p4038, %s4035, 1
        %s4040 = smul.addr %s4037, 64
        %s4041 = sadd.s32 %s4039, %s4040
        %s4042 = smul.addr %s4041, 8
        %s4043 = scalar_lea.vmem %s6, %s4042
      $region68: #{local_refinement_unit.1} parent=63 // pred_fallthru
        _
      // Predicated region
      $region69: #{local_refinement_unit.1} parent=63 // pred_check
        %p4044 = pneg %p221
      $region70: #{local_refinement_unit.1} parent=63 // pred_check_branch
        %4046 = sbr.rel (%p4044) target = $region72
      $region71: #{local_refinement_unit.1} parent=63 // pred_region
        %p4047 = scmp.lt.s32.totalorder %s25, 1
        %s4048 = scalar_select %p4047, %s25, 1
        %s4049 = smul.addr %s4048, 2
        %s4050 = smul.addr %s4049, 8
        %s4051 = scalar_lea.vmem %s7, %s4050
      $region72: #{local_refinement_unit.1} parent=63 // pred_fallthru
        _
    $region64: #{local_refinement_unit.1} parent=5 // pred_fallthru
      _
  $region6: #{local_refinement_unit.1} parent=0 // loop_footer
    %s18 = sadd.s32 1, %s14
  $region7: #{local_refinement_unit.1} parent=0 // loop_footer_branch
    %13 = sbr.rel target = $region3
  $region8: #{local_refinement_unit.1} parent=0 // loop_exit
    _

</llo_original>
